<compile_context>
chip_gen: v5e
topology: v5e:2x2
jax: 0.10.0
libtpu: 0.0.40
codegen_flags: <defaults>
</compile_context>

<pallas_src>
import functools

import jax
import jax.numpy as jnp
from jax import lax
from jax.experimental import pallas as pl
from jax.experimental.pallas import tpu as pltpu

# ---- model hyper-parameters (small, consistent with the module) --------------
HIDDEN = 32            # __C['hidden_size']
FF = 128               # FFN inner size (4 * hidden)
HEADS = 8              # AttentionOnAttention heads
DIM_HEAD = 64          # AttentionOnAttention default dim_head
INNER = HEADS * DIM_HEAD          # 512
SCALE = DIM_HEAD ** -0.5
LN_EPS = 1e-6
NEG_INF = jnp.float32(-1e30)


# =============================== kernel helpers ===============================

def _block_diag_mask(bt, n, m):
    """True where the query row and key/value row belong to the same batch element."""
    row_b = lax.broadcasted_iota(jnp.int32, (bt * n, bt * m), 0) // n
    col_b = lax.broadcasted_iota(jnp.int32, (bt * n, bt * m), 1) // m
    return row_b == col_b


def _aoa(xq, ctx, mask, wq_ref, wkv_ref, waoa_ref, baoa_ref):
    """Attention-on-Attention for a block of Bt batch elements.

    xq:  (Bt*n, HIDDEN) query rows; ctx: (Bt*m, HIDDEN) key/value rows.
    mask: (Bt*n, Bt*m) block-diagonal batch mask (None when Bt == 1).
    Returns (Bt*n, HIDDEN).
    """
    # Whole-width, lane-dense projections (2 MXU matmuls instead of 3 per head).
    q_all = jnp.dot(xq, wq_ref[...], preferred_element_type=jnp.float32)      # (R, 512)
    kv_all = jnp.dot(ctx, wkv_ref[...], preferred_element_type=jnp.float32)   # (C, 1024)
    k_all = kv_all[:, :INNER]
    v_all = kv_all[:, INNER:]

    # Per-head score / softmax / PV (intrinsically small); batch elements are
    # handled together via the block-diagonal mask so this loop stays at 8 iters.
    head_outs = []
    for h in range(HEADS):
        sl = slice(h * DIM_HEAD, (h + 1) * DIM_HEAD)
        qh = q_all[:, sl]                                                      # (R, 64)
        kh = k_all[:, sl]                                                      # (C, 64)
        vh = v_all[:, sl]                                                      # (C, 64)
        # q k^T without an explicit transpose (contract last dims directly).
        dots = lax.dot_general(qh, kh, (((1,), (1,)), ((), ())),
                               preferred_element_type=jnp.float32) * SCALE     # (R, C)
        if mask is not None:
            dots = jnp.where(mask, dots, NEG_INF)
        dots = dots - jnp.max(dots, axis=-1, keepdims=True)
        p = jnp.exp(dots)
        p = p / jnp.sum(p, axis=-1, keepdims=True)                             # exact
        head_outs.append(jnp.dot(p, vh, preferred_element_type=jnp.float32))   # (R, 64)

    # Lane-concat head outputs (XLU) -> one contraction-1024 AoA matmul.
    out_all = jnp.concatenate(head_outs, axis=-1)                              # (R, 512)
    heads_cat = jnp.concatenate([out_all, q_all], axis=-1)                     # (R, 1024)
    pre = jnp.dot(heads_cat, waoa_ref[...],
                  preferred_element_type=jnp.float32) + baoa_ref[...]          # (R, 64)

    a = pre[:, :HIDDEN]          # torch.nn.GLU: first half = value
    g = pre[:, HIDDEN:]          #               second half = gate
    return a * jax.nn.sigmoid(g)


def _add_ln(a, b, g_ref, beta_ref):
    """LayerNorm(a + b), visdialch style (unbiased std, eps added to std)."""
    xv = a + b                                              # (R, HIDDEN)
    mean = jnp.mean(xv, axis=-1, keepdims=True)
    d = xv - mean
    var = jnp.sum(d * d, axis=-1, keepdims=True) * (1.0 / (HIDDEN - 1))
    std = jnp.sqrt(var)
    return g_ref[...] * d / (std + LN_EPS) + beta_ref[...]


# ================================ fused kernel ================================

def _sga_kernel(x_ref, y_ref,
                wq_ref, wkv_ref, waoa_ref, baoa_ref,
                w1_ref, b1_ref, w2_ref, b2_ref,
                ln1g_ref, ln1b_ref, ln2g_ref, ln2b_ref, ln3g_ref, ln3b_ref,
                o_ref, *, bt, n, m):
    """Whole SGA layer for a block of bt batch elements (rows stay VMEM-resident)."""
    x = x_ref[...]                                          # (bt*n, HIDDEN)
    y = y_ref[...]                                          # (bt*m, HIDDEN)

    mask_self = _block_diag_mask(bt, n, n) if bt > 1 else None
    mask_cross = _block_diag_mask(bt, n, m) if bt > 1 else None

    # x = norm1(attn(x) + x)          (dropout1 identity at inference)
    a1 = _aoa(x, x, mask_self, wq_ref, wkv_ref, waoa_ref, baoa_ref)
    x = _add_ln(a1, x, ln1g_ref, ln1b_ref)

    # x = norm2(attn(x, context=y) + x)
    a2 = _aoa(x, y, mask_cross, wq_ref, wkv_ref, waoa_ref, baoa_ref)
    x = _add_ln(a2, x, ln2g_ref, ln2b_ref)

    # x = norm3(x + ffn(x))           (dropout3 identity at inference)
    hid = jnp.dot(x, w1_ref[...], preferred_element_type=jnp.float32) + b1_ref[...]
    hid = jnp.maximum(hid, 0.0)
    f = jnp.dot(hid, w2_ref[...], preferred_element_type=jnp.float32) + b2_ref[...]
    x = _add_ln(x, f, ln3g_ref, ln3b_ref)

    o_ref[...] = x.astype(o_ref.dtype)


# ================================ SGA forward =================================

def _pick_block_b(B, n, target_rows):
    """Batch elements per grid step: ~target_rows rows, divides B, >=2 steps if B>=2."""
    bt = max(1, min(B, target_rows // max(n, 1)))
    while B % bt:
        bt -= 1
    if B // bt < 2 and B >= 2:          # keep >= 2 grid steps for v7x's 2 TensorCores
        bt = max(1, B // 2)
        while B % bt:
            bt -= 1
    return bt


def sga_forward(x, y, p, *, target_rows=128):
    """x: (B, n, HIDDEN) queries; y: (B, m, HIDDEN) cross-attention context."""
    B, n, _ = x.shape
    m = y.shape[1]
    bt = _pick_block_b(B, n, target_rows)
    grid = (B // bt,)

    # Flatten batch into the row (sublane) dimension; reshapes are free collapses.
    x_flat = x.reshape(B * n, HIDDEN)
    y_flat = y.reshape(B * m, HIDDEN)

    const = lambda g: (0, 0)
    kernel = functools.partial(_sga_kernel, bt=bt, n=n, m=m)

    out = pl.pallas_call(
        kernel,
        out_shape=jax.ShapeDtypeStruct((B * n, HIDDEN), x.dtype),
        grid=grid,
        in_specs=[
            pl.BlockSpec((bt * n, HIDDEN), lambda g: (g, 0)),   # x rows
            pl.BlockSpec((bt * m, HIDDEN), lambda g: (g, 0)),   # y rows
            pl.BlockSpec((HIDDEN, INNER), const),               # wq      (32, 512)
            pl.BlockSpec((HIDDEN, 2 * INNER), const),           # wkv     (32, 1024)
            pl.BlockSpec((2 * INNER, 2 * HIDDEN), const),       # waoa    (1024, 64)
            pl.BlockSpec((1, 2 * HIDDEN), const),               # baoa
            pl.BlockSpec((HIDDEN, FF), const),                  # ffn_w1
            pl.BlockSpec((1, FF), const),                       # ffn_b1
            pl.BlockSpec((FF, HIDDEN), const),                  # ffn_w2
            pl.BlockSpec((1, HIDDEN), const),                   # ffn_b2
            pl.BlockSpec((1, HIDDEN), const),                   # ln1_g
            pl.BlockSpec((1, HIDDEN), const),                   # ln1_b
            pl.BlockSpec((1, HIDDEN), const),                   # ln2_g
            pl.BlockSpec((1, HIDDEN), const),                   # ln2_b
            pl.BlockSpec((1, HIDDEN), const),                   # ln3_g
            pl.BlockSpec((1, HIDDEN), const),                   # ln3_b
        ],
        out_specs=pl.BlockSpec((bt * n, HIDDEN), lambda g: (g, 0)),
        compiler_params=pltpu.CompilerParams(
            dimension_semantics=("parallel",)),     # batch blocks across v7x's 2 TCs
    )(x_flat, y_flat, p["wq"], p["wkv"], p["waoa"], p["baoa"],
      p["ffn_w1"], p["ffn_b1"], p["ffn_w2"], p["ffn_b2"],
      p["ln1_g"], p["ln1_b"], p["ln2_g"], p["ln2_b"], p["ln3_g"], p["ln3_b"])

    return out.reshape(B, n, HIDDEN)


# ============================ pure-JAX reference ==============================

def sga_reference(x, y, p):
    def aoa(xq, ctx):
        q = xq @ p["wq"]                                     # (B, s, INNER)
        kv = ctx @ p["wkv"]
        k, v = kv[..., :INNER], kv[..., INNER:]

        def split(t):                                        # (B, s, INNER) -> (B, H, s, d)
            b_, s_, _ = t.shape
            return t.reshape(b_, s_, HEADS, DIM_HEAD).transpose(0, 2, 1, 3)

        qh, kh, vh = split(q), split(k), split(v)
        dots = jnp.einsum('bhid,bhjd->bhij', qh, kh) * SCALE
        attn = jax.nn.softmax(dots, axis=-1)
        out = jnp.einsum('bhij,bhjd->bhid', attn, vh)
        out = out.transpose(0, 2, 1, 3).reshape(xq.shape[0], xq.shape[1], INNER)
        heads = jnp.concatenate([out, q], axis=-1)
        pre = heads @ p["waoa"] + p["baoa"]
        a, g = pre[..., :HIDDEN], pre[..., HIDDEN:]
        return a * jax.nn.sigmoid(g)

    def ln(v, gname, bname):
        mean = v.mean(-1, keepdims=True)
        d = v - mean
        var = (d * d).sum(-1, keepdims=True) / (HIDDEN - 1)
        return p[gname] * d / (jnp.sqrt(var) + LN_EPS) + p[bname]

    x = ln(aoa(x, x) + x, "ln1_g", "ln1_b")
    x = ln(aoa(x, y) + x, "ln2_g", "ln2_b")
    h = jnp.maximum(x @ p["ffn_w1"] + p["ffn_b1"], 0.0)
    f = h @ p["ffn_w2"] + p["ffn_b2"]
    return ln(x + f, "ln3_g", "ln3_b")


# ================================== params ===================================

def init_params(key):
    ks = jax.random.split(key, 8)
    s = 0.02
    return {
        # shared AoA attention weights (same self.attn module used twice);
        # layout is (in_features, out_features) == torch nn.Linear weight transposed.
        "wq":   s * jax.random.normal(ks[0], (HIDDEN, INNER), jnp.float32),
        "wkv":  s * jax.random.normal(ks[1], (HIDDEN, 2 * INNER), jnp.float32),
        "waoa": s * jax.random.normal(ks[2], (2 * INNER, 2 * HIDDEN), jnp.float32),
        "baoa": s * jax.random.normal(ks[3], (1, 2 * HIDDEN), jnp.float32),
        # FFN
        "ffn_w1": s * jax.random.normal(ks[4], (HIDDEN, FF), jnp.float32),
        "ffn_b1": s * jax.random.normal(ks[5], (1, FF), jnp.float32),
        "ffn_w2": s * jax.random.normal(ks[6], (FF, HIDDEN), jnp.float32),
        "ffn_b2": s * jax.random.normal(ks[7], (1, HIDDEN), jnp.float32),
        # LayerNorms
        "ln1_g": jnp.ones((1, HIDDEN), jnp.float32), "ln1_b": jnp.zeros((1, HIDDEN), jnp.float32),
        "ln2_g": jnp.ones((1, HIDDEN), jnp.float32), "ln2_b": jnp.zeros((1, HIDDEN), jnp.float32),
        "ln3_g": jnp.ones((1, HIDDEN), jnp.float32), "ln3_b": jnp.zeros((1, HIDDEN), jnp.float32),
    }


if __name__ == "__main__":
    key = jax.random.PRNGKey(0)
    kx, ky, kp = jax.random.split(key, 3)

    B, N, M = 2, 8, 16
    x = jax.random.normal(kx, (B, N, HIDDEN), jnp.float32)   # query sequence
    y = jax.random.normal(ky, (B, M, HIDDEN), jnp.float32)   # cross-attention context
    params = init_params(kp)

    out = jax.jit(sga_forward)(x, y, params)
    out = jax.block_until_ready(out)
    assert out.shape == (B, N, HIDDEN)
    assert bool(jnp.all(jnp.isfinite(out)))

    # Correctness check against a pure-JAX reference (loose tolerance only to
    # absorb MXU-pass / accumulation-order rounding differences).
    with jax.default_matmul_precision("float32"):
        ref = jax.jit(sga_reference)(x, y, params)
    ref = jax.block_until_ready(ref)
    assert bool(jnp.allclose(out, ref, rtol=1e-2, atol=1e-2)), "kernel != reference"

    print("KERNEL_OK")
</pallas_src>

<mosaic_0001>
module attributes {stable_mosaic.version = 11 : i64} {
  func.func @_sga_kernel(%arg0: i32, %arg1: memref<8x32xf32, #tpu.memory_space<vmem>>, %arg2: memref<16x32xf32, #tpu.memory_space<vmem>>, %arg3: memref<32x512xf32, #tpu.memory_space<vmem>>, %arg4: memref<32x1024xf32, #tpu.memory_space<vmem>>, %arg5: memref<1024x64xf32, #tpu.memory_space<vmem>>, %arg6: memref<1x64xf32, #tpu.memory_space<vmem>>, %arg7: memref<32x128xf32, #tpu.memory_space<vmem>>, %arg8: memref<1x128xf32, #tpu.memory_space<vmem>>, %arg9: memref<128x32xf32, #tpu.memory_space<vmem>>, %arg10: memref<1x32xf32, #tpu.memory_space<vmem>>, %arg11: memref<1x32xf32, #tpu.memory_space<vmem>>, %arg12: memref<1x32xf32, #tpu.memory_space<vmem>>, %arg13: memref<1x32xf32, #tpu.memory_space<vmem>>, %arg14: memref<1x32xf32, #tpu.memory_space<vmem>>, %arg15: memref<1x32xf32, #tpu.memory_space<vmem>>, %arg16: memref<1x32xf32, #tpu.memory_space<vmem>>, %arg17: memref<8x32xf32, #tpu.memory_space<vmem>>) attributes {dimension_semantics = [#tpu.dimension_semantics<parallel>], iteration_bounds = array<i64: 2>, scalar_prefetch = 0 : i64, scratch_operands = 0 : i64, tpu.core_type = #tpu.core_type<tc>, window_params = [{transform_indices = @transform_0, window_bounds = array<i64: 8, 32>}, {transform_indices = @transform_1, window_bounds = array<i64: 16, 32>}, {pipeline_mode = #tpu.pipeline_mode<synchronous>, transform_indices = @transform_2, window_bounds = array<i64: 32, 512>}, {pipeline_mode = #tpu.pipeline_mode<synchronous>, transform_indices = @transform_3, window_bounds = array<i64: 32, 1024>}, {pipeline_mode = #tpu.pipeline_mode<synchronous>, transform_indices = @transform_4, window_bounds = array<i64: 1024, 64>}, {pipeline_mode = #tpu.pipeline_mode<synchronous>, transform_indices = @transform_5, window_bounds = array<i64: 1, 64>}, {pipeline_mode = #tpu.pipeline_mode<synchronous>, transform_indices = @transform_6, window_bounds = array<i64: 32, 128>}, {pipeline_mode = #tpu.pipeline_mode<synchronous>, transform_indices = @transform_7, window_bounds = array<i64: 1, 128>}, {pipeline_mode = #tpu.pipeline_mode<synchronous>, transform_indices = @transform_8, window_bounds = array<i64: 128, 32>}, {pipeline_mode = #tpu.pipeline_mode<synchronous>, transform_indices = @transform_9, window_bounds = array<i64: 1, 32>}, {pipeline_mode = #tpu.pipeline_mode<synchronous>, transform_indices = @transform_10, window_bounds = array<i64: 1, 32>}, {pipeline_mode = #tpu.pipeline_mode<synchronous>, transform_indices = @transform_11, window_bounds = array<i64: 1, 32>}, {pipeline_mode = #tpu.pipeline_mode<synchronous>, transform_indices = @transform_12, window_bounds = array<i64: 1, 32>}, {pipeline_mode = #tpu.pipeline_mode<synchronous>, transform_indices = @transform_13, window_bounds = array<i64: 1, 32>}, {pipeline_mode = #tpu.pipeline_mode<synchronous>, transform_indices = @transform_14, window_bounds = array<i64: 1, 32>}, {pipeline_mode = #tpu.pipeline_mode<synchronous>, transform_indices = @transform_15, window_bounds = array<i64: 1, 32>}, {transform_indices = @transform_16, window_bounds = array<i64: 8, 32>}]} {
    %c0 = arith.constant 0 : index
    %c0_0 = arith.constant 0 : index
    %0 = vector.load %arg1[%c0, %c0_0] : memref<8x32xf32, #tpu.memory_space<vmem>>, vector<8x32xf32>
    %c0_1 = arith.constant 0 : index
    %c0_2 = arith.constant 0 : index
    %1 = vector.load %arg2[%c0_1, %c0_2] : memref<16x32xf32, #tpu.memory_space<vmem>>, vector<16x32xf32>
    %c0_3 = arith.constant 0 : index
    %c0_4 = arith.constant 0 : index
    %2 = vector.load %arg3[%c0_3, %c0_4] : memref<32x512xf32, #tpu.memory_space<vmem>>, vector<32x512xf32>
    %cst = arith.constant dense<0.000000e+00> : vector<8x512xf32>
    %3 = tpu.matmul %0, %2, %cst {dimension_numbers = #tpu.dot_dimension_numbers<[1], [0], [0], [1], [0, 0, 1, 1], [], []>} : vector<8x32xf32>, vector<32x512xf32>, vector<8x512xf32> -> vector<8x512xf32>
    %c0_5 = arith.constant 0 : index
    %c0_6 = arith.constant 0 : index
    %4 = vector.load %arg4[%c0_5, %c0_6] : memref<32x1024xf32, #tpu.memory_space<vmem>>, vector<32x1024xf32>
    %cst_7 = arith.constant dense<0.000000e+00> : vector<8x1024xf32>
    %5 = tpu.matmul %0, %4, %cst_7 {dimension_numbers = #tpu.dot_dimension_numbers<[1], [0], [0], [1], [0, 0, 1, 1], [], []>} : vector<8x32xf32>, vector<32x1024xf32>, vector<8x1024xf32> -> vector<8x1024xf32>
    %6 = vector.extract_strided_slice %5 {offsets = [0, 0], sizes = [8, 512], strides = [1, 1]} : vector<8x1024xf32> to vector<8x512xf32>
    %7 = vector.extract_strided_slice %5 {offsets = [0, 512], sizes = [8, 512], strides = [1, 1]} : vector<8x1024xf32> to vector<8x512xf32>
    %8 = vector.extract_strided_slice %3 {offsets = [0, 0], sizes = [8, 64], strides = [1, 1]} : vector<8x512xf32> to vector<8x64xf32>
    %9 = vector.extract_strided_slice %6 {offsets = [0, 0], sizes = [8, 64], strides = [1, 1]} : vector<8x512xf32> to vector<8x64xf32>
    %10 = vector.extract_strided_slice %7 {offsets = [0, 0], sizes = [8, 64], strides = [1, 1]} : vector<8x512xf32> to vector<8x64xf32>
    %cst_8 = arith.constant dense<0.000000e+00> : vector<8x8xf32>
    %11 = tpu.matmul %8, %9, %cst_8 {dimension_numbers = #tpu.dot_dimension_numbers<[1], [1], [0], [0], [0, 0, 1, 0], [], []>} : vector<8x64xf32>, vector<8x64xf32>, vector<8x8xf32> -> vector<8x8xf32>
    %cst_9 = arith.constant 1.250000e-01 : f32
    %12 = vector.broadcast %cst_9 : f32 to vector<8x8xf32>
    %13 = arith.mulf %11, %12 : vector<8x8xf32>
    %cst_10 = arith.constant dense<0xFF800000> : vector<8xf32>
    %14 = vector.multi_reduction <maximumf>, %13, %cst_10 [1] : vector<8x8xf32> to vector<8xf32>
    %15 = vector.shape_cast %14 : vector<8xf32> to vector<8x1xf32>
    %16 = vector.broadcast %15 : vector<8x1xf32> to vector<8x8xf32>
    %17 = arith.subf %13, %16 : vector<8x8xf32>
    %18 = math.exp %17 : vector<8x8xf32>
    %cst_11 = arith.constant dense<0.000000e+00> : vector<8xf32>
    %19 = vector.multi_reduction <add>, %18, %cst_11 [1] : vector<8x8xf32> to vector<8xf32>
    %20 = vector.shape_cast %19 : vector<8xf32> to vector<8x1xf32>
    %21 = vector.broadcast %20 : vector<8x1xf32> to vector<8x8xf32>
    %22 = arith.divf %18, %21 : vector<8x8xf32>
    %cst_12 = arith.constant dense<0.000000e+00> : vector<8x64xf32>
    %23 = tpu.matmul %22, %10, %cst_12 {dimension_numbers = #tpu.dot_dimension_numbers<[1], [0], [0], [1], [0, 0, 1, 1], [], []>} : vector<8x8xf32>, vector<8x64xf32>, vector<8x64xf32> -> vector<8x64xf32>
    %24 = vector.extract_strided_slice %3 {offsets = [0, 64], sizes = [8, 64], strides = [1, 1]} : vector<8x512xf32> to vector<8x64xf32>
    %25 = vector.extract_strided_slice %6 {offsets = [0, 64], sizes = [8, 64], strides = [1, 1]} : vector<8x512xf32> to vector<8x64xf32>
    %26 = vector.extract_strided_slice %7 {offsets = [0, 64], sizes = [8, 64], strides = [1, 1]} : vector<8x512xf32> to vector<8x64xf32>
    %cst_13 = arith.constant dense<0.000000e+00> : vector<8x8xf32>
    %27 = tpu.matmul %24, %25, %cst_13 {dimension_numbers = #tpu.dot_dimension_numbers<[1], [1], [0], [0], [0, 0, 1, 0], [], []>} : vector<8x64xf32>, vector<8x64xf32>, vector<8x8xf32> -> vector<8x8xf32>
    %cst_14 = arith.constant 1.250000e-01 : f32
    %28 = vector.broadcast %cst_14 : f32 to vector<8x8xf32>
    %29 = arith.mulf %27, %28 : vector<8x8xf32>
    %cst_15 = arith.constant dense<0xFF800000> : vector<8xf32>
    %30 = vector.multi_reduction <maximumf>, %29, %cst_15 [1] : vector<8x8xf32> to vector<8xf32>
    %31 = vector.shape_cast %30 : vector<8xf32> to vector<8x1xf32>
    %32 = vector.broadcast %31 : vector<8x1xf32> to vector<8x8xf32>
    %33 = arith.subf %29, %32 : vector<8x8xf32>
    %34 = math.exp %33 : vector<8x8xf32>
    %cst_16 = arith.constant dense<0.000000e+00> : vector<8xf32>
    %35 = vector.multi_reduction <add>, %34, %cst_16 [1] : vector<8x8xf32> to vector<8xf32>
    %36 = vector.shape_cast %35 : vector<8xf32> to vector<8x1xf32>
    %37 = vector.broadcast %36 : vector<8x1xf32> to vector<8x8xf32>
    %38 = arith.divf %34, %37 : vector<8x8xf32>
    %cst_17 = arith.constant dense<0.000000e+00> : vector<8x64xf32>
    %39 = tpu.matmul %38, %26, %cst_17 {dimension_numbers = #tpu.dot_dimension_numbers<[1], [0], [0], [1], [0, 0, 1, 1], [], []>} : vector<8x8xf32>, vector<8x64xf32>, vector<8x64xf32> -> vector<8x64xf32>
    %40 = vector.extract_strided_slice %3 {offsets = [0, 128], sizes = [8, 64], strides = [1, 1]} : vector<8x512xf32> to vector<8x64xf32>
    %41 = vector.extract_strided_slice %6 {offsets = [0, 128], sizes = [8, 64], strides = [1, 1]} : vector<8x512xf32> to vector<8x64xf32>
    %42 = vector.extract_strided_slice %7 {offsets = [0, 128], sizes = [8, 64], strides = [1, 1]} : vector<8x512xf32> to vector<8x64xf32>
    %cst_18 = arith.constant dense<0.000000e+00> : vector<8x8xf32>
    %43 = tpu.matmul %40, %41, %cst_18 {dimension_numbers = #tpu.dot_dimension_numbers<[1], [1], [0], [0], [0, 0, 1, 0], [], []>} : vector<8x64xf32>, vector<8x64xf32>, vector<8x8xf32> -> vector<8x8xf32>
    %cst_19 = arith.constant 1.250000e-01 : f32
    %44 = vector.broadcast %cst_19 : f32 to vector<8x8xf32>
    %45 = arith.mulf %43, %44 : vector<8x8xf32>
    %cst_20 = arith.constant dense<0xFF800000> : vector<8xf32>
    %46 = vector.multi_reduction <maximumf>, %45, %cst_20 [1] : vector<8x8xf32> to vector<8xf32>
    %47 = vector.shape_cast %46 : vector<8xf32> to vector<8x1xf32>
    %48 = vector.broadcast %47 : vector<8x1xf32> to vector<8x8xf32>
    %49 = arith.subf %45, %48 : vector<8x8xf32>
    %50 = math.exp %49 : vector<8x8xf32>
    %cst_21 = arith.constant dense<0.000000e+00> : vector<8xf32>
    %51 = vector.multi_reduction <add>, %50, %cst_21 [1] : vector<8x8xf32> to vector<8xf32>
    %52 = vector.shape_cast %51 : vector<8xf32> to vector<8x1xf32>
    %53 = vector.broadcast %52 : vector<8x1xf32> to vector<8x8xf32>
    %54 = arith.divf %50, %53 : vector<8x8xf32>
    %cst_22 = arith.constant dense<0.000000e+00> : vector<8x64xf32>
    %55 = tpu.matmul %54, %42, %cst_22 {dimension_numbers = #tpu.dot_dimension_numbers<[1], [0], [0], [1], [0, 0, 1, 1], [], []>} : vector<8x8xf32>, vector<8x64xf32>, vector<8x64xf32> -> vector<8x64xf32>
    %56 = vector.extract_strided_slice %3 {offsets = [0, 192], sizes = [8, 64], strides = [1, 1]} : vector<8x512xf32> to vector<8x64xf32>
    %57 = vector.extract_strided_slice %6 {offsets = [0, 192], sizes = [8, 64], strides = [1, 1]} : vector<8x512xf32> to vector<8x64xf32>
    %58 = vector.extract_strided_slice %7 {offsets = [0, 192], sizes = [8, 64], strides = [1, 1]} : vector<8x512xf32> to vector<8x64xf32>
    %cst_23 = arith.constant dense<0.000000e+00> : vector<8x8xf32>
    %59 = tpu.matmul %56, %57, %cst_23 {dimension_numbers = #tpu.dot_dimension_numbers<[1], [1], [0], [0], [0, 0, 1, 0], [], []>} : vector<8x64xf32>, vector<8x64xf32>, vector<8x8xf32> -> vector<8x8xf32>
    %cst_24 = arith.constant 1.250000e-01 : f32
    %60 = vector.broadcast %cst_24 : f32 to vector<8x8xf32>
    %61 = arith.mulf %59, %60 : vector<8x8xf32>
    %cst_25 = arith.constant dense<0xFF800000> : vector<8xf32>
    %62 = vector.multi_reduction <maximumf>, %61, %cst_25 [1] : vector<8x8xf32> to vector<8xf32>
    %63 = vector.shape_cast %62 : vector<8xf32> to vector<8x1xf32>
    %64 = vector.broadcast %63 : vector<8x1xf32> to vector<8x8xf32>
    %65 = arith.subf %61, %64 : vector<8x8xf32>
    %66 = math.exp %65 : vector<8x8xf32>
    %cst_26 = arith.constant dense<0.000000e+00> : vector<8xf32>
    %67 = vector.multi_reduction <add>, %66, %cst_26 [1] : vector<8x8xf32> to vector<8xf32>
    %68 = vector.shape_cast %67 : vector<8xf32> to vector<8x1xf32>
    %69 = vector.broadcast %68 : vector<8x1xf32> to vector<8x8xf32>
    %70 = arith.divf %66, %69 : vector<8x8xf32>
    %cst_27 = arith.constant dense<0.000000e+00> : vector<8x64xf32>
    %71 = tpu.matmul %70, %58, %cst_27 {dimension_numbers = #tpu.dot_dimension_numbers<[1], [0], [0], [1], [0, 0, 1, 1], [], []>} : vector<8x8xf32>, vector<8x64xf32>, vector<8x64xf32> -> vector<8x64xf32>
    %72 = vector.extract_strided_slice %3 {offsets = [0, 256], sizes = [8, 64], strides = [1, 1]} : vector<8x512xf32> to vector<8x64xf32>
    %73 = vector.extract_strided_slice %6 {offsets = [0, 256], sizes = [8, 64], strides = [1, 1]} : vector<8x512xf32> to vector<8x64xf32>
    %74 = vector.extract_strided_slice %7 {offsets = [0, 256], sizes = [8, 64], strides = [1, 1]} : vector<8x512xf32> to vector<8x64xf32>
    %cst_28 = arith.constant dense<0.000000e+00> : vector<8x8xf32>
    %75 = tpu.matmul %72, %73, %cst_28 {dimension_numbers = #tpu.dot_dimension_numbers<[1], [1], [0], [0], [0, 0, 1, 0], [], []>} : vector<8x64xf32>, vector<8x64xf32>, vector<8x8xf32> -> vector<8x8xf32>
    %cst_29 = arith.constant 1.250000e-01 : f32
    %76 = vector.broadcast %cst_29 : f32 to vector<8x8xf32>
    %77 = arith.mulf %75, %76 : vector<8x8xf32>
    %cst_30 = arith.constant dense<0xFF800000> : vector<8xf32>
    %78 = vector.multi_reduction <maximumf>, %77, %cst_30 [1] : vector<8x8xf32> to vector<8xf32>
    %79 = vector.shape_cast %78 : vector<8xf32> to vector<8x1xf32>
    %80 = vector.broadcast %79 : vector<8x1xf32> to vector<8x8xf32>
    %81 = arith.subf %77, %80 : vector<8x8xf32>
    %82 = math.exp %81 : vector<8x8xf32>
    %cst_31 = arith.constant dense<0.000000e+00> : vector<8xf32>
    %83 = vector.multi_reduction <add>, %82, %cst_31 [1] : vector<8x8xf32> to vector<8xf32>
    %84 = vector.shape_cast %83 : vector<8xf32> to vector<8x1xf32>
    %85 = vector.broadcast %84 : vector<8x1xf32> to vector<8x8xf32>
    %86 = arith.divf %82, %85 : vector<8x8xf32>
    %cst_32 = arith.constant dense<0.000000e+00> : vector<8x64xf32>
    %87 = tpu.matmul %86, %74, %cst_32 {dimension_numbers = #tpu.dot_dimension_numbers<[1], [0], [0], [1], [0, 0, 1, 1], [], []>} : vector<8x8xf32>, vector<8x64xf32>, vector<8x64xf32> -> vector<8x64xf32>
    %88 = vector.extract_strided_slice %3 {offsets = [0, 320], sizes = [8, 64], strides = [1, 1]} : vector<8x512xf32> to vector<8x64xf32>
    %89 = vector.extract_strided_slice %6 {offsets = [0, 320], sizes = [8, 64], strides = [1, 1]} : vector<8x512xf32> to vector<8x64xf32>
    %90 = vector.extract_strided_slice %7 {offsets = [0, 320], sizes = [8, 64], strides = [1, 1]} : vector<8x512xf32> to vector<8x64xf32>
    %cst_33 = arith.constant dense<0.000000e+00> : vector<8x8xf32>
    %91 = tpu.matmul %88, %89, %cst_33 {dimension_numbers = #tpu.dot_dimension_numbers<[1], [1], [0], [0], [0, 0, 1, 0], [], []>} : vector<8x64xf32>, vector<8x64xf32>, vector<8x8xf32> -> vector<8x8xf32>
    %cst_34 = arith.constant 1.250000e-01 : f32
    %92 = vector.broadcast %cst_34 : f32 to vector<8x8xf32>
    %93 = arith.mulf %91, %92 : vector<8x8xf32>
    %cst_35 = arith.constant dense<0xFF800000> : vector<8xf32>
    %94 = vector.multi_reduction <maximumf>, %93, %cst_35 [1] : vector<8x8xf32> to vector<8xf32>
    %95 = vector.shape_cast %94 : vector<8xf32> to vector<8x1xf32>
    %96 = vector.broadcast %95 : vector<8x1xf32> to vector<8x8xf32>
    %97 = arith.subf %93, %96 : vector<8x8xf32>
    %98 = math.exp %97 : vector<8x8xf32>
    %cst_36 = arith.constant dense<0.000000e+00> : vector<8xf32>
    %99 = vector.multi_reduction <add>, %98, %cst_36 [1] : vector<8x8xf32> to vector<8xf32>
    %100 = vector.shape_cast %99 : vector<8xf32> to vector<8x1xf32>
    %101 = vector.broadcast %100 : vector<8x1xf32> to vector<8x8xf32>
    %102 = arith.divf %98, %101 : vector<8x8xf32>
    %cst_37 = arith.constant dense<0.000000e+00> : vector<8x64xf32>
    %103 = tpu.matmul %102, %90, %cst_37 {dimension_numbers = #tpu.dot_dimension_numbers<[1], [0], [0], [1], [0, 0, 1, 1], [], []>} : vector<8x8xf32>, vector<8x64xf32>, vector<8x64xf32> -> vector<8x64xf32>
    %104 = vector.extract_strided_slice %3 {offsets = [0, 384], sizes = [8, 64], strides = [1, 1]} : vector<8x512xf32> to vector<8x64xf32>
    %105 = vector.extract_strided_slice %6 {offsets = [0, 384], sizes = [8, 64], strides = [1, 1]} : vector<8x512xf32> to vector<8x64xf32>
    %106 = vector.extract_strided_slice %7 {offsets = [0, 384], sizes = [8, 64], strides = [1, 1]} : vector<8x512xf32> to vector<8x64xf32>
    %cst_38 = arith.constant dense<0.000000e+00> : vector<8x8xf32>
    %107 = tpu.matmul %104, %105, %cst_38 {dimension_numbers = #tpu.dot_dimension_numbers<[1], [1], [0], [0], [0, 0, 1, 0], [], []>} : vector<8x64xf32>, vector<8x64xf32>, vector<8x8xf32> -> vector<8x8xf32>
    %cst_39 = arith.constant 1.250000e-01 : f32
    %108 = vector.broadcast %cst_39 : f32 to vector<8x8xf32>
    %109 = arith.mulf %107, %108 : vector<8x8xf32>
    %cst_40 = arith.constant dense<0xFF800000> : vector<8xf32>
    %110 = vector.multi_reduction <maximumf>, %109, %cst_40 [1] : vector<8x8xf32> to vector<8xf32>
    %111 = vector.shape_cast %110 : vector<8xf32> to vector<8x1xf32>
    %112 = vector.broadcast %111 : vector<8x1xf32> to vector<8x8xf32>
    %113 = arith.subf %109, %112 : vector<8x8xf32>
    %114 = math.exp %113 : vector<8x8xf32>
    %cst_41 = arith.constant dense<0.000000e+00> : vector<8xf32>
    %115 = vector.multi_reduction <add>, %114, %cst_41 [1] : vector<8x8xf32> to vector<8xf32>
    %116 = vector.shape_cast %115 : vector<8xf32> to vector<8x1xf32>
    %117 = vector.broadcast %116 : vector<8x1xf32> to vector<8x8xf32>
    %118 = arith.divf %114, %117 : vector<8x8xf32>
    %cst_42 = arith.constant dense<0.000000e+00> : vector<8x64xf32>
    %119 = tpu.matmul %118, %106, %cst_42 {dimension_numbers = #tpu.dot_dimension_numbers<[1], [0], [0], [1], [0, 0, 1, 1], [], []>} : vector<8x8xf32>, vector<8x64xf32>, vector<8x64xf32> -> vector<8x64xf32>
    %120 = vector.extract_strided_slice %3 {offsets = [0, 448], sizes = [8, 64], strides = [1, 1]} : vector<8x512xf32> to vector<8x64xf32>
    %121 = vector.extract_strided_slice %6 {offsets = [0, 448], sizes = [8, 64], strides = [1, 1]} : vector<8x512xf32> to vector<8x64xf32>
    %122 = vector.extract_strided_slice %7 {offsets = [0, 448], sizes = [8, 64], strides = [1, 1]} : vector<8x512xf32> to vector<8x64xf32>
    %cst_43 = arith.constant dense<0.000000e+00> : vector<8x8xf32>
    %123 = tpu.matmul %120, %121, %cst_43 {dimension_numbers = #tpu.dot_dimension_numbers<[1], [1], [0], [0], [0, 0, 1, 0], [], []>} : vector<8x64xf32>, vector<8x64xf32>, vector<8x8xf32> -> vector<8x8xf32>
    %cst_44 = arith.constant 1.250000e-01 : f32
    %124 = vector.broadcast %cst_44 : f32 to vector<8x8xf32>
    %125 = arith.mulf %123, %124 : vector<8x8xf32>
    %cst_45 = arith.constant dense<0xFF800000> : vector<8xf32>
    %126 = vector.multi_reduction <maximumf>, %125, %cst_45 [1] : vector<8x8xf32> to vector<8xf32>
    %127 = vector.shape_cast %126 : vector<8xf32> to vector<8x1xf32>
    %128 = vector.broadcast %127 : vector<8x1xf32> to vector<8x8xf32>
    %129 = arith.subf %125, %128 : vector<8x8xf32>
    %130 = math.exp %129 : vector<8x8xf32>
    %cst_46 = arith.constant dense<0.000000e+00> : vector<8xf32>
    %131 = vector.multi_reduction <add>, %130, %cst_46 [1] : vector<8x8xf32> to vector<8xf32>
    %132 = vector.shape_cast %131 : vector<8xf32> to vector<8x1xf32>
    %133 = vector.broadcast %132 : vector<8x1xf32> to vector<8x8xf32>
    %134 = arith.divf %130, %133 : vector<8x8xf32>
    %cst_47 = arith.constant dense<0.000000e+00> : vector<8x64xf32>
    %135 = tpu.matmul %134, %122, %cst_47 {dimension_numbers = #tpu.dot_dimension_numbers<[1], [0], [0], [1], [0, 0, 1, 1], [], []>} : vector<8x8xf32>, vector<8x64xf32>, vector<8x64xf32> -> vector<8x64xf32>
    %136 = tpu.concatenate %23, %39, %55, %71, %87, %103, %119, %135 in 1 : vector<8x64xf32>, vector<8x64xf32>, vector<8x64xf32>, vector<8x64xf32>, vector<8x64xf32>, vector<8x64xf32>, vector<8x64xf32>, vector<8x64xf32> -> vector<8x512xf32>
    %137 = tpu.concatenate %136, %3 in 1 : vector<8x512xf32>, vector<8x512xf32> -> vector<8x1024xf32>
    %c0_48 = arith.constant 0 : index
    %c0_49 = arith.constant 0 : index
    %138 = vector.load %arg5[%c0_48, %c0_49] : memref<1024x64xf32, #tpu.memory_space<vmem>>, vector<1024x64xf32>
    %cst_50 = arith.constant dense<0.000000e+00> : vector<8x64xf32>
    %139 = tpu.matmul %137, %138, %cst_50 {dimension_numbers = #tpu.dot_dimension_numbers<[1], [0], [0], [1], [0, 0, 1, 1], [], []>} : vector<8x1024xf32>, vector<1024x64xf32>, vector<8x64xf32> -> vector<8x64xf32>
    %c0_51 = arith.constant 0 : index
    %c0_52 = arith.constant 0 : index
    %140 = vector.load %arg6[%c0_51, %c0_52] : memref<1x64xf32, #tpu.memory_space<vmem>>, vector<1x64xf32>
    %141 = vector.broadcast %140 : vector<1x64xf32> to vector<8x64xf32>
    %142 = arith.addf %139, %141 : vector<8x64xf32>
    %143 = vector.extract_strided_slice %142 {offsets = [0, 0], sizes = [8, 32], strides = [1, 1]} : vector<8x64xf32> to vector<8x32xf32>
    %144 = vector.extract_strided_slice %142 {offsets = [0, 32], sizes = [8, 32], strides = [1, 1]} : vector<8x64xf32> to vector<8x32xf32>
    %145 = arith.negf %144 : vector<8x32xf32>
    %146 = math.exp %145 : vector<8x32xf32>
    %cst_53 = arith.constant 1.000000e+00 : f32
    %147 = vector.broadcast %cst_53 : f32 to vector<8x32xf32>
    %148 = arith.addf %147, %146 : vector<8x32xf32>
    %149 = arith.divf %147, %148 : vector<8x32xf32>
    %150 = arith.mulf %143, %149 : vector<8x32xf32>
    %151 = arith.addf %150, %0 : vector<8x32xf32>
    %cst_54 = arith.constant dense<0.000000e+00> : vector<8xf32>
    %152 = vector.multi_reduction <add>, %151, %cst_54 [1] : vector<8x32xf32> to vector<8xf32>
    %153 = vector.shape_cast %152 : vector<8xf32> to vector<8x1xf32>
    %cst_55 = arith.constant 3.200000e+01 : f32
    %154 = vector.broadcast %cst_55 : f32 to vector<8x1xf32>
    %155 = arith.divf %153, %154 : vector<8x1xf32>
    %156 = vector.broadcast %155 : vector<8x1xf32> to vector<8x32xf32>
    %157 = arith.subf %151, %156 : vector<8x32xf32>
    %158 = arith.mulf %157, %157 : vector<8x32xf32>
    %cst_56 = arith.constant dense<0.000000e+00> : vector<8xf32>
    %159 = vector.multi_reduction <add>, %158, %cst_56 [1] : vector<8x32xf32> to vector<8xf32>
    %160 = vector.shape_cast %159 : vector<8xf32> to vector<8x1xf32>
    %cst_57 = arith.constant 0.0322580636 : f32
    %161 = vector.broadcast %cst_57 : f32 to vector<8x1xf32>
    %162 = arith.mulf %160, %161 : vector<8x1xf32>
    %163 = math.sqrt %162 : vector<8x1xf32>
    %c0_58 = arith.constant 0 : index
    %c0_59 = arith.constant 0 : index
    %164 = vector.load %arg11[%c0_58, %c0_59] : memref<1x32xf32, #tpu.memory_space<vmem>>, vector<1x32xf32>
    %165 = vector.broadcast %164 : vector<1x32xf32> to vector<8x32xf32>
    %166 = arith.mulf %165, %157 : vector<8x32xf32>
    %cst_60 = arith.constant 9.99999997E-7 : f32
    %167 = vector.broadcast %cst_60 : f32 to vector<8x1xf32>
    %168 = arith.addf %163, %167 : vector<8x1xf32>
    %169 = vector.broadcast %168 : vector<8x1xf32> to vector<8x32xf32>
    %170 = arith.divf %166, %169 : vector<8x32xf32>
    %c0_61 = arith.constant 0 : index
    %c0_62 = arith.constant 0 : index
    %171 = vector.load %arg12[%c0_61, %c0_62] : memref<1x32xf32, #tpu.memory_space<vmem>>, vector<1x32xf32>
    %172 = vector.broadcast %171 : vector<1x32xf32> to vector<8x32xf32>
    %173 = arith.addf %170, %172 : vector<8x32xf32>
    %c0_63 = arith.constant 0 : index
    %c0_64 = arith.constant 0 : index
    %174 = vector.load %arg3[%c0_63, %c0_64] : memref<32x512xf32, #tpu.memory_space<vmem>>, vector<32x512xf32>
    %cst_65 = arith.constant dense<0.000000e+00> : vector<8x512xf32>
    %175 = tpu.matmul %173, %174, %cst_65 {dimension_numbers = #tpu.dot_dimension_numbers<[1], [0], [0], [1], [0, 0, 1, 1], [], []>} : vector<8x32xf32>, vector<32x512xf32>, vector<8x512xf32> -> vector<8x512xf32>
    %c0_66 = arith.constant 0 : index
    %c0_67 = arith.constant 0 : index
    %176 = vector.load %arg4[%c0_66, %c0_67] : memref<32x1024xf32, #tpu.memory_space<vmem>>, vector<32x1024xf32>
    %cst_68 = arith.constant dense<0.000000e+00> : vector<16x1024xf32>
    %177 = tpu.matmul %1, %176, %cst_68 {dimension_numbers = #tpu.dot_dimension_numbers<[1], [0], [0], [1], [0, 0, 1, 1], [], []>} : vector<16x32xf32>, vector<32x1024xf32>, vector<16x1024xf32> -> vector<16x1024xf32>
    %178 = vector.extract_strided_slice %177 {offsets = [0, 0], sizes = [16, 512], strides = [1, 1]} : vector<16x1024xf32> to vector<16x512xf32>
    %179 = vector.extract_strided_slice %177 {offsets = [0, 512], sizes = [16, 512], strides = [1, 1]} : vector<16x1024xf32> to vector<16x512xf32>
    %180 = vector.extract_strided_slice %175 {offsets = [0, 0], sizes = [8, 64], strides = [1, 1]} : vector<8x512xf32> to vector<8x64xf32>
    %181 = vector.extract_strided_slice %178 {offsets = [0, 0], sizes = [16, 64], strides = [1, 1]} : vector<16x512xf32> to vector<16x64xf32>
    %182 = vector.extract_strided_slice %179 {offsets = [0, 0], sizes = [16, 64], strides = [1, 1]} : vector<16x512xf32> to vector<16x64xf32>
    %cst_69 = arith.constant dense<0.000000e+00> : vector<8x16xf32>
    %183 = tpu.matmul %180, %181, %cst_69 {dimension_numbers = #tpu.dot_dimension_numbers<[1], [1], [0], [0], [0, 0, 1, 0], [], []>} : vector<8x64xf32>, vector<16x64xf32>, vector<8x16xf32> -> vector<8x16xf32>
    %cst_70 = arith.constant 1.250000e-01 : f32
    %184 = vector.broadcast %cst_70 : f32 to vector<8x16xf32>
    %185 = arith.mulf %183, %184 : vector<8x16xf32>
    %cst_71 = arith.constant dense<0xFF800000> : vector<8xf32>
    %186 = vector.multi_reduction <maximumf>, %185, %cst_71 [1] : vector<8x16xf32> to vector<8xf32>
    %187 = vector.shape_cast %186 : vector<8xf32> to vector<8x1xf32>
    %188 = vector.broadcast %187 : vector<8x1xf32> to vector<8x16xf32>
    %189 = arith.subf %185, %188 : vector<8x16xf32>
    %190 = math.exp %189 : vector<8x16xf32>
    %cst_72 = arith.constant dense<0.000000e+00> : vector<8xf32>
    %191 = vector.multi_reduction <add>, %190, %cst_72 [1] : vector<8x16xf32> to vector<8xf32>
    %192 = vector.shape_cast %191 : vector<8xf32> to vector<8x1xf32>
    %193 = vector.broadcast %192 : vector<8x1xf32> to vector<8x16xf32>
    %194 = arith.divf %190, %193 : vector<8x16xf32>
    %cst_73 = arith.constant dense<0.000000e+00> : vector<8x64xf32>
    %195 = tpu.matmul %194, %182, %cst_73 {dimension_numbers = #tpu.dot_dimension_numbers<[1], [0], [0], [1], [0, 0, 1, 1], [], []>} : vector<8x16xf32>, vector<16x64xf32>, vector<8x64xf32> -> vector<8x64xf32>
    %196 = vector.extract_strided_slice %175 {offsets = [0, 64], sizes = [8, 64], strides = [1, 1]} : vector<8x512xf32> to vector<8x64xf32>
    %197 = vector.extract_strided_slice %178 {offsets = [0, 64], sizes = [16, 64], strides = [1, 1]} : vector<16x512xf32> to vector<16x64xf32>
    %198 = vector.extract_strided_slice %179 {offsets = [0, 64], sizes = [16, 64], strides = [1, 1]} : vector<16x512xf32> to vector<16x64xf32>
    %cst_74 = arith.constant dense<0.000000e+00> : vector<8x16xf32>
    %199 = tpu.matmul %196, %197, %cst_74 {dimension_numbers = #tpu.dot_dimension_numbers<[1], [1], [0], [0], [0, 0, 1, 0], [], []>} : vector<8x64xf32>, vector<16x64xf32>, vector<8x16xf32> -> vector<8x16xf32>
    %cst_75 = arith.constant 1.250000e-01 : f32
    %200 = vector.broadcast %cst_75 : f32 to vector<8x16xf32>
    %201 = arith.mulf %199, %200 : vector<8x16xf32>
    %cst_76 = arith.constant dense<0xFF800000> : vector<8xf32>
    %202 = vector.multi_reduction <maximumf>, %201, %cst_76 [1] : vector<8x16xf32> to vector<8xf32>
    %203 = vector.shape_cast %202 : vector<8xf32> to vector<8x1xf32>
    %204 = vector.broadcast %203 : vector<8x1xf32> to vector<8x16xf32>
    %205 = arith.subf %201, %204 : vector<8x16xf32>
    %206 = math.exp %205 : vector<8x16xf32>
    %cst_77 = arith.constant dense<0.000000e+00> : vector<8xf32>
    %207 = vector.multi_reduction <add>, %206, %cst_77 [1] : vector<8x16xf32> to vector<8xf32>
    %208 = vector.shape_cast %207 : vector<8xf32> to vector<8x1xf32>
    %209 = vector.broadcast %208 : vector<8x1xf32> to vector<8x16xf32>
    %210 = arith.divf %206, %209 : vector<8x16xf32>
    %cst_78 = arith.constant dense<0.000000e+00> : vector<8x64xf32>
    %211 = tpu.matmul %210, %198, %cst_78 {dimension_numbers = #tpu.dot_dimension_numbers<[1], [0], [0], [1], [0, 0, 1, 1], [], []>} : vector<8x16xf32>, vector<16x64xf32>, vector<8x64xf32> -> vector<8x64xf32>
    %212 = vector.extract_strided_slice %175 {offsets = [0, 128], sizes = [8, 64], strides = [1, 1]} : vector<8x512xf32> to vector<8x64xf32>
    %213 = vector.extract_strided_slice %178 {offsets = [0, 128], sizes = [16, 64], strides = [1, 1]} : vector<16x512xf32> to vector<16x64xf32>
    %214 = vector.extract_strided_slice %179 {offsets = [0, 128], sizes = [16, 64], strides = [1, 1]} : vector<16x512xf32> to vector<16x64xf32>
    %cst_79 = arith.constant dense<0.000000e+00> : vector<8x16xf32>
    %215 = tpu.matmul %212, %213, %cst_79 {dimension_numbers = #tpu.dot_dimension_numbers<[1], [1], [0], [0], [0, 0, 1, 0], [], []>} : vector<8x64xf32>, vector<16x64xf32>, vector<8x16xf32> -> vector<8x16xf32>
    %cst_80 = arith.constant 1.250000e-01 : f32
    %216 = vector.broadcast %cst_80 : f32 to vector<8x16xf32>
    %217 = arith.mulf %215, %216 : vector<8x16xf32>
    %cst_81 = arith.constant dense<0xFF800000> : vector<8xf32>
    %218 = vector.multi_reduction <maximumf>, %217, %cst_81 [1] : vector<8x16xf32> to vector<8xf32>
    %219 = vector.shape_cast %218 : vector<8xf32> to vector<8x1xf32>
    %220 = vector.broadcast %219 : vector<8x1xf32> to vector<8x16xf32>
    %221 = arith.subf %217, %220 : vector<8x16xf32>
    %222 = math.exp %221 : vector<8x16xf32>
    %cst_82 = arith.constant dense<0.000000e+00> : vector<8xf32>
    %223 = vector.multi_reduction <add>, %222, %cst_82 [1] : vector<8x16xf32> to vector<8xf32>
    %224 = vector.shape_cast %223 : vector<8xf32> to vector<8x1xf32>
    %225 = vector.broadcast %224 : vector<8x1xf32> to vector<8x16xf32>
    %226 = arith.divf %222, %225 : vector<8x16xf32>
    %cst_83 = arith.constant dense<0.000000e+00> : vector<8x64xf32>
    %227 = tpu.matmul %226, %214, %cst_83 {dimension_numbers = #tpu.dot_dimension_numbers<[1], [0], [0], [1], [0, 0, 1, 1], [], []>} : vector<8x16xf32>, vector<16x64xf32>, vector<8x64xf32> -> vector<8x64xf32>
    %228 = vector.extract_strided_slice %175 {offsets = [0, 192], sizes = [8, 64], strides = [1, 1]} : vector<8x512xf32> to vector<8x64xf32>
    %229 = vector.extract_strided_slice %178 {offsets = [0, 192], sizes = [16, 64], strides = [1, 1]} : vector<16x512xf32> to vector<16x64xf32>
    %230 = vector.extract_strided_slice %179 {offsets = [0, 192], sizes = [16, 64], strides = [1, 1]} : vector<16x512xf32> to vector<16x64xf32>
    %cst_84 = arith.constant dense<0.000000e+00> : vector<8x16xf32>
    %231 = tpu.matmul %228, %229, %cst_84 {dimension_numbers = #tpu.dot_dimension_numbers<[1], [1], [0], [0], [0, 0, 1, 0], [], []>} : vector<8x64xf32>, vector<16x64xf32>, vector<8x16xf32> -> vector<8x16xf32>
    %cst_85 = arith.constant 1.250000e-01 : f32
    %232 = vector.broadcast %cst_85 : f32 to vector<8x16xf32>
    %233 = arith.mulf %231, %232 : vector<8x16xf32>
    %cst_86 = arith.constant dense<0xFF800000> : vector<8xf32>
    %234 = vector.multi_reduction <maximumf>, %233, %cst_86 [1] : vector<8x16xf32> to vector<8xf32>
    %235 = vector.shape_cast %234 : vector<8xf32> to vector<8x1xf32>
    %236 = vector.broadcast %235 : vector<8x1xf32> to vector<8x16xf32>
    %237 = arith.subf %233, %236 : vector<8x16xf32>
    %238 = math.exp %237 : vector<8x16xf32>
    %cst_87 = arith.constant dense<0.000000e+00> : vector<8xf32>
    %239 = vector.multi_reduction <add>, %238, %cst_87 [1] : vector<8x16xf32> to vector<8xf32>
    %240 = vector.shape_cast %239 : vector<8xf32> to vector<8x1xf32>
    %241 = vector.broadcast %240 : vector<8x1xf32> to vector<8x16xf32>
    %242 = arith.divf %238, %241 : vector<8x16xf32>
    %cst_88 = arith.constant dense<0.000000e+00> : vector<8x64xf32>
    %243 = tpu.matmul %242, %230, %cst_88 {dimension_numbers = #tpu.dot_dimension_numbers<[1], [0], [0], [1], [0, 0, 1, 1], [], []>} : vector<8x16xf32>, vector<16x64xf32>, vector<8x64xf32> -> vector<8x64xf32>
    %244 = vector.extract_strided_slice %175 {offsets = [0, 256], sizes = [8, 64], strides = [1, 1]} : vector<8x512xf32> to vector<8x64xf32>
    %245 = vector.extract_strided_slice %178 {offsets = [0, 256], sizes = [16, 64], strides = [1, 1]} : vector<16x512xf32> to vector<16x64xf32>
    %246 = vector.extract_strided_slice %179 {offsets = [0, 256], sizes = [16, 64], strides = [1, 1]} : vector<16x512xf32> to vector<16x64xf32>
    %cst_89 = arith.constant dense<0.000000e+00> : vector<8x16xf32>
    %247 = tpu.matmul %244, %245, %cst_89 {dimension_numbers = #tpu.dot_dimension_numbers<[1], [1], [0], [0], [0, 0, 1, 0], [], []>} : vector<8x64xf32>, vector<16x64xf32>, vector<8x16xf32> -> vector<8x16xf32>
    %cst_90 = arith.constant 1.250000e-01 : f32
    %248 = vector.broadcast %cst_90 : f32 to vector<8x16xf32>
    %249 = arith.mulf %247, %248 : vector<8x16xf32>
    %cst_91 = arith.constant dense<0xFF800000> : vector<8xf32>
    %250 = vector.multi_reduction <maximumf>, %249, %cst_91 [1] : vector<8x16xf32> to vector<8xf32>
    %251 = vector.shape_cast %250 : vector<8xf32> to vector<8x1xf32>
    %252 = vector.broadcast %251 : vector<8x1xf32> to vector<8x16xf32>
    %253 = arith.subf %249, %252 : vector<8x16xf32>
    %254 = math.exp %253 : vector<8x16xf32>
    %cst_92 = arith.constant dense<0.000000e+00> : vector<8xf32>
    %255 = vector.multi_reduction <add>, %254, %cst_92 [1] : vector<8x16xf32> to vector<8xf32>
    %256 = vector.shape_cast %255 : vector<8xf32> to vector<8x1xf32>
    %257 = vector.broadcast %256 : vector<8x1xf32> to vector<8x16xf32>
    %258 = arith.divf %254, %257 : vector<8x16xf32>
    %cst_93 = arith.constant dense<0.000000e+00> : vector<8x64xf32>
    %259 = tpu.matmul %258, %246, %cst_93 {dimension_numbers = #tpu.dot_dimension_numbers<[1], [0], [0], [1], [0, 0, 1, 1], [], []>} : vector<8x16xf32>, vector<16x64xf32>, vector<8x64xf32> -> vector<8x64xf32>
    %260 = vector.extract_strided_slice %175 {offsets = [0, 320], sizes = [8, 64], strides = [1, 1]} : vector<8x512xf32> to vector<8x64xf32>
    %261 = vector.extract_strided_slice %178 {offsets = [0, 320], sizes = [16, 64], strides = [1, 1]} : vector<16x512xf32> to vector<16x64xf32>
    %262 = vector.extract_strided_slice %179 {offsets = [0, 320], sizes = [16, 64], strides = [1, 1]} : vector<16x512xf32> to vector<16x64xf32>
    %cst_94 = arith.constant dense<0.000000e+00> : vector<8x16xf32>
    %263 = tpu.matmul %260, %261, %cst_94 {dimension_numbers = #tpu.dot_dimension_numbers<[1], [1], [0], [0], [0, 0, 1, 0], [], []>} : vector<8x64xf32>, vector<16x64xf32>, vector<8x16xf32> -> vector<8x16xf32>
    %cst_95 = arith.constant 1.250000e-01 : f32
    %264 = vector.broadcast %cst_95 : f32 to vector<8x16xf32>
    %265 = arith.mulf %263, %264 : vector<8x16xf32>
    %cst_96 = arith.constant dense<0xFF800000> : vector<8xf32>
    %266 = vector.multi_reduction <maximumf>, %265, %cst_96 [1] : vector<8x16xf32> to vector<8xf32>
    %267 = vector.shape_cast %266 : vector<8xf32> to vector<8x1xf32>
    %268 = vector.broadcast %267 : vector<8x1xf32> to vector<8x16xf32>
    %269 = arith.subf %265, %268 : vector<8x16xf32>
    %270 = math.exp %269 : vector<8x16xf32>
    %cst_97 = arith.constant dense<0.000000e+00> : vector<8xf32>
    %271 = vector.multi_reduction <add>, %270, %cst_97 [1] : vector<8x16xf32> to vector<8xf32>
    %272 = vector.shape_cast %271 : vector<8xf32> to vector<8x1xf32>
    %273 = vector.broadcast %272 : vector<8x1xf32> to vector<8x16xf32>
    %274 = arith.divf %270, %273 : vector<8x16xf32>
    %cst_98 = arith.constant dense<0.000000e+00> : vector<8x64xf32>
    %275 = tpu.matmul %274, %262, %cst_98 {dimension_numbers = #tpu.dot_dimension_numbers<[1], [0], [0], [1], [0, 0, 1, 1], [], []>} : vector<8x16xf32>, vector<16x64xf32>, vector<8x64xf32> -> vector<8x64xf32>
    %276 = vector.extract_strided_slice %175 {offsets = [0, 384], sizes = [8, 64], strides = [1, 1]} : vector<8x512xf32> to vector<8x64xf32>
    %277 = vector.extract_strided_slice %178 {offsets = [0, 384], sizes = [16, 64], strides = [1, 1]} : vector<16x512xf32> to vector<16x64xf32>
    %278 = vector.extract_strided_slice %179 {offsets = [0, 384], sizes = [16, 64], strides = [1, 1]} : vector<16x512xf32> to vector<16x64xf32>
    %cst_99 = arith.constant dense<0.000000e+00> : vector<8x16xf32>
    %279 = tpu.matmul %276, %277, %cst_99 {dimension_numbers = #tpu.dot_dimension_numbers<[1], [1], [0], [0], [0, 0, 1, 0], [], []>} : vector<8x64xf32>, vector<16x64xf32>, vector<8x16xf32> -> vector<8x16xf32>
    %cst_100 = arith.constant 1.250000e-01 : f32
    %280 = vector.broadcast %cst_100 : f32 to vector<8x16xf32>
    %281 = arith.mulf %279, %280 : vector<8x16xf32>
    %cst_101 = arith.constant dense<0xFF800000> : vector<8xf32>
    %282 = vector.multi_reduction <maximumf>, %281, %cst_101 [1] : vector<8x16xf32> to vector<8xf32>
    %283 = vector.shape_cast %282 : vector<8xf32> to vector<8x1xf32>
    %284 = vector.broadcast %283 : vector<8x1xf32> to vector<8x16xf32>
    %285 = arith.subf %281, %284 : vector<8x16xf32>
    %286 = math.exp %285 : vector<8x16xf32>
    %cst_102 = arith.constant dense<0.000000e+00> : vector<8xf32>
    %287 = vector.multi_reduction <add>, %286, %cst_102 [1] : vector<8x16xf32> to vector<8xf32>
    %288 = vector.shape_cast %287 : vector<8xf32> to vector<8x1xf32>
    %289 = vector.broadcast %288 : vector<8x1xf32> to vector<8x16xf32>
    %290 = arith.divf %286, %289 : vector<8x16xf32>
    %cst_103 = arith.constant dense<0.000000e+00> : vector<8x64xf32>
    %291 = tpu.matmul %290, %278, %cst_103 {dimension_numbers = #tpu.dot_dimension_numbers<[1], [0], [0], [1], [0, 0, 1, 1], [], []>} : vector<8x16xf32>, vector<16x64xf32>, vector<8x64xf32> -> vector<8x64xf32>
    %292 = vector.extract_strided_slice %175 {offsets = [0, 448], sizes = [8, 64], strides = [1, 1]} : vector<8x512xf32> to vector<8x64xf32>
    %293 = vector.extract_strided_slice %178 {offsets = [0, 448], sizes = [16, 64], strides = [1, 1]} : vector<16x512xf32> to vector<16x64xf32>
    %294 = vector.extract_strided_slice %179 {offsets = [0, 448], sizes = [16, 64], strides = [1, 1]} : vector<16x512xf32> to vector<16x64xf32>
    %cst_104 = arith.constant dense<0.000000e+00> : vector<8x16xf32>
    %295 = tpu.matmul %292, %293, %cst_104 {dimension_numbers = #tpu.dot_dimension_numbers<[1], [1], [0], [0], [0, 0, 1, 0], [], []>} : vector<8x64xf32>, vector<16x64xf32>, vector<8x16xf32> -> vector<8x16xf32>
    %cst_105 = arith.constant 1.250000e-01 : f32
    %296 = vector.broadcast %cst_105 : f32 to vector<8x16xf32>
    %297 = arith.mulf %295, %296 : vector<8x16xf32>
    %cst_106 = arith.constant dense<0xFF800000> : vector<8xf32>
    %298 = vector.multi_reduction <maximumf>, %297, %cst_106 [1] : vector<8x16xf32> to vector<8xf32>
    %299 = vector.shape_cast %298 : vector<8xf32> to vector<8x1xf32>
    %300 = vector.broadcast %299 : vector<8x1xf32> to vector<8x16xf32>
    %301 = arith.subf %297, %300 : vector<8x16xf32>
    %302 = math.exp %301 : vector<8x16xf32>
    %cst_107 = arith.constant dense<0.000000e+00> : vector<8xf32>
    %303 = vector.multi_reduction <add>, %302, %cst_107 [1] : vector<8x16xf32> to vector<8xf32>
    %304 = vector.shape_cast %303 : vector<8xf32> to vector<8x1xf32>
    %305 = vector.broadcast %304 : vector<8x1xf32> to vector<8x16xf32>
    %306 = arith.divf %302, %305 : vector<8x16xf32>
    %cst_108 = arith.constant dense<0.000000e+00> : vector<8x64xf32>
    %307 = tpu.matmul %306, %294, %cst_108 {dimension_numbers = #tpu.dot_dimension_numbers<[1], [0], [0], [1], [0, 0, 1, 1], [], []>} : vector<8x16xf32>, vector<16x64xf32>, vector<8x64xf32> -> vector<8x64xf32>
    %308 = tpu.concatenate %195, %211, %227, %243, %259, %275, %291, %307 in 1 : vector<8x64xf32>, vector<8x64xf32>, vector<8x64xf32>, vector<8x64xf32>, vector<8x64xf32>, vector<8x64xf32>, vector<8x64xf32>, vector<8x64xf32> -> vector<8x512xf32>
    %309 = tpu.concatenate %308, %175 in 1 : vector<8x512xf32>, vector<8x512xf32> -> vector<8x1024xf32>
    %c0_109 = arith.constant 0 : index
    %c0_110 = arith.constant 0 : index
    %310 = vector.load %arg5[%c0_109, %c0_110] : memref<1024x64xf32, #tpu.memory_space<vmem>>, vector<1024x64xf32>
    %cst_111 = arith.constant dense<0.000000e+00> : vector<8x64xf32>
    %311 = tpu.matmul %309, %310, %cst_111 {dimension_numbers = #tpu.dot_dimension_numbers<[1], [0], [0], [1], [0, 0, 1, 1], [], []>} : vector<8x1024xf32>, vector<1024x64xf32>, vector<8x64xf32> -> vector<8x64xf32>
    %c0_112 = arith.constant 0 : index
    %c0_113 = arith.constant 0 : index
    %312 = vector.load %arg6[%c0_112, %c0_113] : memref<1x64xf32, #tpu.memory_space<vmem>>, vector<1x64xf32>
    %313 = vector.broadcast %312 : vector<1x64xf32> to vector<8x64xf32>
    %314 = arith.addf %311, %313 : vector<8x64xf32>
    %315 = vector.extract_strided_slice %314 {offsets = [0, 0], sizes = [8, 32], strides = [1, 1]} : vector<8x64xf32> to vector<8x32xf32>
    %316 = vector.extract_strided_slice %314 {offsets = [0, 32], sizes = [8, 32], strides = [1, 1]} : vector<8x64xf32> to vector<8x32xf32>
    %317 = arith.negf %316 : vector<8x32xf32>
    %318 = math.exp %317 : vector<8x32xf32>
    %cst_114 = arith.constant 1.000000e+00 : f32
    %319 = vector.broadcast %cst_114 : f32 to vector<8x32xf32>
    %320 = arith.addf %319, %318 : vector<8x32xf32>
    %321 = arith.divf %319, %320 : vector<8x32xf32>
    %322 = arith.mulf %315, %321 : vector<8x32xf32>
    %323 = arith.addf %322, %173 : vector<8x32xf32>
    %cst_115 = arith.constant dense<0.000000e+00> : vector<8xf32>
    %324 = vector.multi_reduction <add>, %323, %cst_115 [1] : vector<8x32xf32> to vector<8xf32>
    %325 = vector.shape_cast %324 : vector<8xf32> to vector<8x1xf32>
    %cst_116 = arith.constant 3.200000e+01 : f32
    %326 = vector.broadcast %cst_116 : f32 to vector<8x1xf32>
    %327 = arith.divf %325, %326 : vector<8x1xf32>
    %328 = vector.broadcast %327 : vector<8x1xf32> to vector<8x32xf32>
    %329 = arith.subf %323, %328 : vector<8x32xf32>
    %330 = arith.mulf %329, %329 : vector<8x32xf32>
    %cst_117 = arith.constant dense<0.000000e+00> : vector<8xf32>
    %331 = vector.multi_reduction <add>, %330, %cst_117 [1] : vector<8x32xf32> to vector<8xf32>
    %332 = vector.shape_cast %331 : vector<8xf32> to vector<8x1xf32>
    %cst_118 = arith.constant 0.0322580636 : f32
    %333 = vector.broadcast %cst_118 : f32 to vector<8x1xf32>
    %334 = arith.mulf %332, %333 : vector<8x1xf32>
    %335 = math.sqrt %334 : vector<8x1xf32>
    %c0_119 = arith.constant 0 : index
    %c0_120 = arith.constant 0 : index
    %336 = vector.load %arg13[%c0_119, %c0_120] : memref<1x32xf32, #tpu.memory_space<vmem>>, vector<1x32xf32>
    %337 = vector.broadcast %336 : vector<1x32xf32> to vector<8x32xf32>
    %338 = arith.mulf %337, %329 : vector<8x32xf32>
    %cst_121 = arith.constant 9.99999997E-7 : f32
    %339 = vector.broadcast %cst_121 : f32 to vector<8x1xf32>
    %340 = arith.addf %335, %339 : vector<8x1xf32>
    %341 = vector.broadcast %340 : vector<8x1xf32> to vector<8x32xf32>
    %342 = arith.divf %338, %341 : vector<8x32xf32>
    %c0_122 = arith.constant 0 : index
    %c0_123 = arith.constant 0 : index
    %343 = vector.load %arg14[%c0_122, %c0_123] : memref<1x32xf32, #tpu.memory_space<vmem>>, vector<1x32xf32>
    %344 = vector.broadcast %343 : vector<1x32xf32> to vector<8x32xf32>
    %345 = arith.addf %342, %344 : vector<8x32xf32>
    %c0_124 = arith.constant 0 : index
    %c0_125 = arith.constant 0 : index
    %346 = vector.load %arg7[%c0_124, %c0_125] : memref<32x128xf32, #tpu.memory_space<vmem>>, vector<32x128xf32>
    %cst_126 = arith.constant dense<0.000000e+00> : vector<8x128xf32>
    %347 = tpu.matmul %345, %346, %cst_126 {dimension_numbers = #tpu.dot_dimension_numbers<[1], [0], [0], [1], [0, 0, 1, 1], [], []>} : vector<8x32xf32>, vector<32x128xf32>, vector<8x128xf32> -> vector<8x128xf32>
    %c0_127 = arith.constant 0 : index
    %c0_128 = arith.constant 0 : index
    %348 = vector.load %arg8[%c0_127, %c0_128] : memref<1x128xf32, #tpu.memory_space<vmem>>, vector<1x128xf32>
    %349 = vector.broadcast %348 : vector<1x128xf32> to vector<8x128xf32>
    %350 = arith.addf %347, %349 : vector<8x128xf32>
    %cst_129 = arith.constant 0.000000e+00 : f32
    %351 = vector.broadcast %cst_129 : f32 to vector<8x128xf32>
    %352 = arith.maximumf %350, %351 : vector<8x128xf32>
    %c0_130 = arith.constant 0 : index
    %c0_131 = arith.constant 0 : index
    %353 = vector.load %arg9[%c0_130, %c0_131] : memref<128x32xf32, #tpu.memory_space<vmem>>, vector<128x32xf32>
    %cst_132 = arith.constant dense<0.000000e+00> : vector<8x32xf32>
    %354 = tpu.matmul %352, %353, %cst_132 {dimension_numbers = #tpu.dot_dimension_numbers<[1], [0], [0], [1], [0, 0, 1, 1], [], []>} : vector<8x128xf32>, vector<128x32xf32>, vector<8x32xf32> -> vector<8x32xf32>
    %c0_133 = arith.constant 0 : index
    %c0_134 = arith.constant 0 : index
    %355 = vector.load %arg10[%c0_133, %c0_134] : memref<1x32xf32, #tpu.memory_space<vmem>>, vector<1x32xf32>
    %356 = vector.broadcast %355 : vector<1x32xf32> to vector<8x32xf32>
    %357 = arith.addf %354, %356 : vector<8x32xf32>
    %358 = arith.addf %345, %357 : vector<8x32xf32>
    %cst_135 = arith.constant dense<0.000000e+00> : vector<8xf32>
    %359 = vector.multi_reduction <add>, %358, %cst_135 [1] : vector<8x32xf32> to vector<8xf32>
    %360 = vector.shape_cast %359 : vector<8xf32> to vector<8x1xf32>
    %cst_136 = arith.constant 3.200000e+01 : f32
    %361 = vector.broadcast %cst_136 : f32 to vector<8x1xf32>
    %362 = arith.divf %360, %361 : vector<8x1xf32>
    %363 = vector.broadcast %362 : vector<8x1xf32> to vector<8x32xf32>
    %364 = arith.subf %358, %363 : vector<8x32xf32>
    %365 = arith.mulf %364, %364 : vector<8x32xf32>
    %cst_137 = arith.constant dense<0.000000e+00> : vector<8xf32>
    %366 = vector.multi_reduction <add>, %365, %cst_137 [1] : vector<8x32xf32> to vector<8xf32>
    %367 = vector.shape_cast %366 : vector<8xf32> to vector<8x1xf32>
    %cst_138 = arith.constant 0.0322580636 : f32
    %368 = vector.broadcast %cst_138 : f32 to vector<8x1xf32>
    %369 = arith.mulf %367, %368 : vector<8x1xf32>
    %370 = math.sqrt %369 : vector<8x1xf32>
    %c0_139 = arith.constant 0 : index
    %c0_140 = arith.constant 0 : index
    %371 = vector.load %arg15[%c0_139, %c0_140] : memref<1x32xf32, #tpu.memory_space<vmem>>, vector<1x32xf32>
    %372 = vector.broadcast %371 : vector<1x32xf32> to vector<8x32xf32>
    %373 = arith.mulf %372, %364 : vector<8x32xf32>
    %cst_141 = arith.constant 9.99999997E-7 : f32
    %374 = vector.broadcast %cst_141 : f32 to vector<8x1xf32>
    %375 = arith.addf %370, %374 : vector<8x1xf32>
    %376 = vector.broadcast %375 : vector<8x1xf32> to vector<8x32xf32>
    %377 = arith.divf %373, %376 : vector<8x32xf32>
    %c0_142 = arith.constant 0 : index
    %c0_143 = arith.constant 0 : index
    %378 = vector.load %arg16[%c0_142, %c0_143] : memref<1x32xf32, #tpu.memory_space<vmem>>, vector<1x32xf32>
    %379 = vector.broadcast %378 : vector<1x32xf32> to vector<8x32xf32>
    %380 = arith.addf %377, %379 : vector<8x32xf32>
    %c0_144 = arith.constant 0 : index
    %c0_145 = arith.constant 0 : index
    %381 = vector.load %arg17[%c0_144, %c0_145] : memref<8x32xf32, #tpu.memory_space<vmem>>, vector<8x32xf32>
    tpu.vector_store %arg17[%c0_144, %c0_145], %380 {strides = array<i32>} : memref<8x32xf32, #tpu.memory_space<vmem>>, vector<8x32xf32>,
    return
  }
  func.func @transform_0(%arg0: i32) -> (i32, i32) {
    %c0_i32 = arith.constant 0 : i32
    %c0_i32_0 = arith.constant 0 : i32
    return %arg0, %c0_i32 : i32, i32
  }
  func.func @transform_1(%arg0: i32) -> (i32, i32) {
    %c0_i32 = arith.constant 0 : i32
    %c0_i32_0 = arith.constant 0 : i32
    return %arg0, %c0_i32 : i32, i32
  }
  func.func @transform_2(%arg0: i32) -> (i32, i32) {
    %c0_i32 = arith.constant 0 : i32
    %c0_i32_0 = arith.constant 0 : i32
    %c0_i32_1 = arith.constant 0 : i32
    return %c0_i32, %c0_i32_0 : i32, i32
  }
  func.func @transform_3(%arg0: i32) -> (i32, i32) {
    %c0_i32 = arith.constant 0 : i32
    %c0_i32_0 = arith.constant 0 : i32
    %c0_i32_1 = arith.constant 0 : i32
    return %c0_i32, %c0_i32_0 : i32, i32
  }
  func.func @transform_4(%arg0: i32) -> (i32, i32) {
    %c0_i32 = arith.constant 0 : i32
    %c0_i32_0 = arith.constant 0 : i32
    %c0_i32_1 = arith.constant 0 : i32
    return %c0_i32, %c0_i32_0 : i32, i32
  }
  func.func @transform_5(%arg0: i32) -> (i32, i32) {
    %c0_i32 = arith.constant 0 : i32
    %c0_i32_0 = arith.constant 0 : i32
    %c0_i32_1 = arith.constant 0 : i32
    return %c0_i32, %c0_i32_0 : i32, i32
  }
  func.func @transform_6(%arg0: i32) -> (i32, i32) {
    %c0_i32 = arith.constant 0 : i32
    %c0_i32_0 = arith.constant 0 : i32
    %c0_i32_1 = arith.constant 0 : i32
    return %c0_i32, %c0_i32_0 : i32, i32
  }
  func.func @transform_7(%arg0: i32) -> (i32, i32) {
    %c0_i32 = arith.constant 0 : i32
    %c0_i32_0 = arith.constant 0 : i32
    %c0_i32_1 = arith.constant 0 : i32
    return %c0_i32, %c0_i32_0 : i32, i32
  }
  func.func @transform_8(%arg0: i32) -> (i32, i32) {
    %c0_i32 = arith.constant 0 : i32
    %c0_i32_0 = arith.constant 0 : i32
    %c0_i32_1 = arith.constant 0 : i32
    return %c0_i32, %c0_i32_0 : i32, i32
  }
  func.func @transform_9(%arg0: i32) -> (i32, i32) {
    %c0_i32 = arith.constant 0 : i32
    %c0_i32_0 = arith.constant 0 : i32
    %c0_i32_1 = arith.constant 0 : i32
    return %c0_i32, %c0_i32_0 : i32, i32
  }
  func.func @transform_10(%arg0: i32) -> (i32, i32) {
    %c0_i32 = arith.constant 0 : i32
    %c0_i32_0 = arith.constant 0 : i32
    %c0_i32_1 = arith.constant 0 : i32
    return %c0_i32, %c0_i32_0 : i32, i32
  }
  func.func @transform_11(%arg0: i32) -> (i32, i32) {
    %c0_i32 = arith.constant 0 : i32
    %c0_i32_0 = arith.constant 0 : i32
    %c0_i32_1 = arith.constant 0 : i32
    return %c0_i32, %c0_i32_0 : i32, i32
  }
  func.func @transform_12(%arg0: i32) -> (i32, i32) {
    %c0_i32 = arith.constant 0 : i32
    %c0_i32_0 = arith.constant 0 : i32
    %c0_i32_1 = arith.constant 0 : i32
    return %c0_i32, %c0_i32_0 : i32, i32
  }
  func.func @transform_13(%arg0: i32) -> (i32, i32) {
    %c0_i32 = arith.constant 0 : i32
    %c0_i32_0 = arith.constant 0 : i32
    %c0_i32_1 = arith.constant 0 : i32
    return %c0_i32, %c0_i32_0 : i32, i32
  }
  func.func @transform_14(%arg0: i32) -> (i32, i32) {
    %c0_i32 = arith.constant 0 : i32
    %c0_i32_0 = arith.constant 0 : i32
    %c0_i32_1 = arith.constant 0 : i32
    return %c0_i32, %c0_i32_0 : i32, i32
  }
  func.func @transform_15(%arg0: i32) -> (i32, i32) {
    %c0_i32 = arith.constant 0 : i32
    %c0_i32_0 = arith.constant 0 : i32
    %c0_i32_1 = arith.constant 0 : i32
    return %c0_i32, %c0_i32_0 : i32, i32
  }
  func.func @transform_16(%arg0: i32) -> (i32, i32) {
    %c0_i32 = arith.constant 0 : i32
    %c0_i32_0 = arith.constant 0 : i32
    return %arg0, %c0_i32 : i32, i32
  }
}

</mosaic_0001>

<llo_original>
// kernel: sga_forward.1
$region0: #{sga_forward.1}
  #allocation0 [shape = 'u32[]', space=smem, size = 0x4, offset = 0x4, fixed_abs, tag = 'smem constant byte address 0x4 - core index']
  #allocation1 [shape = 'u32[72,128]{1,0:T(1,128)}', space=vmem, size = 0x9000, scoped, tag = 'internal scratch']
  %s0 = inlined_call_operand.vmem [shape: f32[16,32], index: 0, kind: input, shape index: {}]
  %s1 = inlined_call_operand.vmem [shape: f32[32,32], index: 1, kind: input, shape index: {}]
  %s2 = inlined_call_operand.vmem [shape: f32[32,512], index: 2, kind: input, shape index: {}]
  %s3 = inlined_call_operand.vmem [shape: f32[32,1024], index: 3, kind: input, shape index: {}]
  %s4 = inlined_call_operand.vmem [shape: f32[1024,64], index: 4, kind: input, shape index: {}]
  %s5 = inlined_call_operand.vmem [shape: f32[1,64], index: 5, kind: input, shape index: {}]
  %s6 = inlined_call_operand.vmem [shape: f32[32,128], index: 6, kind: input, shape index: {}]
  %s7 = inlined_call_operand.vmem [shape: f32[1,128], index: 7, kind: input, shape index: {}]
  %s8 = inlined_call_operand.vmem [shape: f32[128,32], index: 8, kind: input, shape index: {}]
  %s9 = inlined_call_operand.vmem [shape: f32[1,32], index: 9, kind: input, shape index: {}]
  %s10 = inlined_call_operand.vmem [shape: f32[1,32], index: 10, kind: input, shape index: {}]
  %s11 = inlined_call_operand.vmem [shape: f32[1,32], index: 11, kind: input, shape index: {}]
  %s12 = inlined_call_operand.vmem [shape: f32[1,32], index: 12, kind: input, shape index: {}]
  %s13 = inlined_call_operand.vmem [shape: f32[1,32], index: 13, kind: input, shape index: {}]
  %s14 = inlined_call_operand.vmem [shape: f32[1,32], index: 14, kind: input, shape index: {}]
  %s15 = inlined_call_operand.vmem [shape: f32[1,32], index: 15, kind: input, shape index: {}]
  %s16 = inlined_call_operand.hbm [shape: f32[16,32], index: 16, kind: output, shape index: {}]
  %s17 = sld [smem:[#allocation0]]
  $region97: #{sga_forward.1} parent=0
    _
  %s19 = ssub.s32 1, %s17
  %s20 = scalar_select 0, %s19, %s17
  $region1: #{sga_forward.1} parent=0
    #allocation2 [shape = 'u8[8192]{0}', space=vmem, size = 0x2000, scoped, tag = 'output window, operand 0']
    #allocation3 [shape = 's32[2]{0}', space=sflag, size = 0x8, scoped, tag = 'scoped memory for sga_forward.1']
    %21 = vsyncpa [#allocation3], 0
    %s22 = scalar_lea.sflag [#allocation3], 1
    %23 = vsyncpa %s22, 0
    loop: start=0, step=1, limit=4
    $region2: #{sga_forward.1} parent=1 // loop_pre_header
      _
    $region3: #{sga_forward.1} parent=1 // loop_header
      %s25 = sphi 0, %s29
      %p26 = scmp.ge.s32.totalorder %s25, 4
      %s35 = sphi 0, %s37
      %s38 = sphi 0, %s35
      %s39 = sphi 0, %s38
      %s55 = sphi 0, %s39
      %s61 = sphi 0, %s63
      %s64 = sphi 0, %s61
      %s65 = sphi 0, %s64
      %s81 = sphi 0, %s65
      %s85 = sphi 0, %s85
      %s87 = sphi 0, %s85
      %s88 = sphi 0, %s87
      %s102 = sphi 0, %s88
      %s106 = sphi 0, %s106
      %s108 = sphi 0, %s106
      %s109 = sphi 0, %s108
      %s123 = sphi 0, %s109
      %s127 = sphi 0, %s127
      %s129 = sphi 0, %s127
      %s130 = sphi 0, %s129
      %s144 = sphi 0, %s130
      %s148 = sphi 0, %s148
      %s150 = sphi 0, %s148
      %s151 = sphi 0, %s150
      %s165 = sphi 0, %s151
      %s169 = sphi 0, %s169
      %s171 = sphi 0, %s169
      %s172 = sphi 0, %s171
      %s186 = sphi 0, %s172
      %s190 = sphi 0, %s190
      %s192 = sphi 0, %s190
      %s193 = sphi 0, %s192
      %s207 = sphi 0, %s193
      %s211 = sphi 0, %s211
      %s213 = sphi 0, %s211
      %s214 = sphi 0, %s213
      %s228 = sphi 0, %s214
      %s232 = sphi 0, %s232
      %s234 = sphi 0, %s232
      %s235 = sphi 0, %s234
      %s249 = sphi 0, %s235
      %s253 = sphi 0, %s253
      %s255 = sphi 0, %s253
      %s256 = sphi 0, %s255
      %s270 = sphi 0, %s256
      %s274 = sphi 0, %s274
      %s276 = sphi 0, %s274
      %s277 = sphi 0, %s276
      %s291 = sphi 0, %s277
      %s295 = sphi 0, %s295
      %s297 = sphi 0, %s295
      %s298 = sphi 0, %s297
      %s312 = sphi 0, %s298
      %s316 = sphi 0, %s316
      %s318 = sphi 0, %s316
      %s319 = sphi 0, %s318
      %s333 = sphi 0, %s319
      %s337 = sphi 0, %s337
      %s339 = sphi 0, %s337
      %s340 = sphi 0, %s339
      %s354 = sphi 0, %s340
      %s358 = sphi 0, %s358
      %s360 = sphi 0, %s358
      %s361 = sphi 0, %s360
      %s375 = sphi 0, %s361
      %s381 = sphi 0, %s383
      %s384 = sphi 0, %s381
      %s385 = sphi 0, %s384
      %s401 = sphi 0, %s385
    $region4: #{sga_forward.1} parent=1 // loop_header_branch
      %28 = sbr.rel (%p26) target = $region8
    $region5: #{sga_forward.1} parent=1 // loop_body
      %s30 = ssub.s32 %s25, 1
      %s31 = ssub.s32 %s25, 2
      %s32 = sadd.s32 %s25, 1
      %s33 = ssub.s32 %s25, %s32
      %p34 = scmp.eq.s32.totalorder %s33, 0
      %s36 = sadd.s32 %s35, 1
      %s37 = scalar_select %p34, %s35, %s36
      %p40 = pneg %p34
      %p41 = scmp.eq.s32.totalorder %s25, 1
      %p42 = por %p40, %p41
      %p43 = scmp.ne.s32.totalorder %s35, %s38
      %p44 = scmp.eq.s32.totalorder %s25, 0
      %p45 = por %p43, %p44
      %p46 = scmp.ne.s32.totalorder %s35, %s38
      %p47 = scmp.eq.s32.totalorder %s30, 1
      %p48 = por %p46, %p47
      %p49 = scmp.ne.s32.totalorder %s38, %s39
      %p50 = scmp.eq.s32.totalorder %s30, 0
      %p51 = por %p49, %p50
      %p52 = scmp.ne.s32.totalorder %s38, %s39
      %p53 = scmp.eq.s32.totalorder %s31, 1
      %p54 = por %p52, %p53
      %p56 = scmp.ne.s32.totalorder %s39, %s55
      %p57 = scmp.eq.s32.totalorder %s31, 0
      %p58 = por %p56, %p57
      %s59 = ssub.s32 %s25, %s32
      %p60 = scmp.eq.s32.totalorder %s59, 0
      %s62 = sadd.s32 %s61, 1
      %s63 = scalar_select %p60, %s61, %s62
      %p66 = pneg %p60
      %p67 = scmp.eq.s32.totalorder %s25, 1
      %p68 = por %p66, %p67
      %p69 = scmp.ne.s32.totalorder %s61, %s64
      %p70 = scmp.eq.s32.totalorder %s25, 0
      %p71 = por %p69, %p70
      %p72 = scmp.ne.s32.totalorder %s61, %s64
      %p73 = scmp.eq.s32.totalorder %s30, 1
      %p74 = por %p72, %p73
      %p75 = scmp.ne.s32.totalorder %s64, %s65
      %p76 = scmp.eq.s32.totalorder %s30, 0
      %p77 = por %p75, %p76
      %p78 = scmp.ne.s32.totalorder %s64, %s65
      %p79 = scmp.eq.s32.totalorder %s31, 1
      %p80 = por %p78, %p79
      %p82 = scmp.ne.s32.totalorder %s65, %s81
      %p83 = scmp.eq.s32.totalorder %s31, 0
      %p84 = por %p82, %p83
      %s86 = sadd.s32 %s85, 1
      %p89 = scmp.eq.s32.totalorder %s25, 1
      %p90 = scmp.ne.s32.totalorder %s85, %s87
      %p91 = scmp.eq.s32.totalorder %s25, 0
      %p92 = por %p90, %p91
      %p93 = scmp.ne.s32.totalorder %s85, %s87
      %p94 = scmp.eq.s32.totalorder %s30, 1
      %p95 = por %p93, %p94
      %p96 = scmp.ne.s32.totalorder %s87, %s88
      %p97 = scmp.eq.s32.totalorder %s30, 0
      %p98 = por %p96, %p97
      %p99 = scmp.ne.s32.totalorder %s87, %s88
      %p100 = scmp.eq.s32.totalorder %s31, 1
      %p101 = por %p99, %p100
      %p103 = scmp.ne.s32.totalorder %s88, %s102
      %p104 = scmp.eq.s32.totalorder %s31, 0
      %p105 = por %p103, %p104
      %s107 = sadd.s32 %s106, 1
      %p110 = scmp.eq.s32.totalorder %s25, 1
      %p111 = scmp.ne.s32.totalorder %s106, %s108
      %p112 = scmp.eq.s32.totalorder %s25, 0
      %p113 = por %p111, %p112
      %p114 = scmp.ne.s32.totalorder %s106, %s108
      %p115 = scmp.eq.s32.totalorder %s30, 1
      %p116 = por %p114, %p115
      %p117 = scmp.ne.s32.totalorder %s108, %s109
      %p118 = scmp.eq.s32.totalorder %s30, 0
      %p119 = por %p117, %p118
      %p120 = scmp.ne.s32.totalorder %s108, %s109
      %p121 = scmp.eq.s32.totalorder %s31, 1
      %p122 = por %p120, %p121
      %p124 = scmp.ne.s32.totalorder %s109, %s123
      %p125 = scmp.eq.s32.totalorder %s31, 0
      %p126 = por %p124, %p125
      %s128 = sadd.s32 %s127, 1
      %p131 = scmp.eq.s32.totalorder %s25, 1
      %p132 = scmp.ne.s32.totalorder %s127, %s129
      %p133 = scmp.eq.s32.totalorder %s25, 0
      %p134 = por %p132, %p133
      %p135 = scmp.ne.s32.totalorder %s127, %s129
      %p136 = scmp.eq.s32.totalorder %s30, 1
      %p137 = por %p135, %p136
      %p138 = scmp.ne.s32.totalorder %s129, %s130
      %p139 = scmp.eq.s32.totalorder %s30, 0
      %p140 = por %p138, %p139
      %p141 = scmp.ne.s32.totalorder %s129, %s130
      %p142 = scmp.eq.s32.totalorder %s31, 1
      %p143 = por %p141, %p142
      %p145 = scmp.ne.s32.totalorder %s130, %s144
      %p146 = scmp.eq.s32.totalorder %s31, 0
      %p147 = por %p145, %p146
      %s149 = sadd.s32 %s148, 1
      %p152 = scmp.eq.s32.totalorder %s25, 1
      %p153 = scmp.ne.s32.totalorder %s148, %s150
      %p154 = scmp.eq.s32.totalorder %s25, 0
      %p155 = por %p153, %p154
      %p156 = scmp.ne.s32.totalorder %s148, %s150
      %p157 = scmp.eq.s32.totalorder %s30, 1
      %p158 = por %p156, %p157
      %p159 = scmp.ne.s32.totalorder %s150, %s151
      %p160 = scmp.eq.s32.totalorder %s30, 0
      %p161 = por %p159, %p160
      %p162 = scmp.ne.s32.totalorder %s150, %s151
      %p163 = scmp.eq.s32.totalorder %s31, 1
      %p164 = por %p162, %p163
      %p166 = scmp.ne.s32.totalorder %s151, %s165
      %p167 = scmp.eq.s32.totalorder %s31, 0
      %p168 = por %p166, %p167
      %s170 = sadd.s32 %s169, 1
      %p173 = scmp.eq.s32.totalorder %s25, 1
      %p174 = scmp.ne.s32.totalorder %s169, %s171
      %p175 = scmp.eq.s32.totalorder %s25, 0
      %p176 = por %p174, %p175
      %p177 = scmp.ne.s32.totalorder %s169, %s171
      %p178 = scmp.eq.s32.totalorder %s30, 1
      %p179 = por %p177, %p178
      %p180 = scmp.ne.s32.totalorder %s171, %s172
      %p181 = scmp.eq.s32.totalorder %s30, 0
      %p182 = por %p180, %p181
      %p183 = scmp.ne.s32.totalorder %s171, %s172
      %p184 = scmp.eq.s32.totalorder %s31, 1
      %p185 = por %p183, %p184
      %p187 = scmp.ne.s32.totalorder %s172, %s186
      %p188 = scmp.eq.s32.totalorder %s31, 0
      %p189 = por %p187, %p188
      %s191 = sadd.s32 %s190, 1
      %p194 = scmp.eq.s32.totalorder %s25, 1
      %p195 = scmp.ne.s32.totalorder %s190, %s192
      %p196 = scmp.eq.s32.totalorder %s25, 0
      %p197 = por %p195, %p196
      %p198 = scmp.ne.s32.totalorder %s190, %s192
      %p199 = scmp.eq.s32.totalorder %s30, 1
      %p200 = por %p198, %p199
      %p201 = scmp.ne.s32.totalorder %s192, %s193
      %p202 = scmp.eq.s32.totalorder %s30, 0
      %p203 = por %p201, %p202
      %p204 = scmp.ne.s32.totalorder %s192, %s193
      %p205 = scmp.eq.s32.totalorder %s31, 1
      %p206 = por %p204, %p205
      %p208 = scmp.ne.s32.totalorder %s193, %s207
      %p209 = scmp.eq.s32.totalorder %s31, 0
      %p210 = por %p208, %p209
      %s212 = sadd.s32 %s211, 1
      %p215 = scmp.eq.s32.totalorder %s25, 1
      %p216 = scmp.ne.s32.totalorder %s211, %s213
      %p217 = scmp.eq.s32.totalorder %s25, 0
      %p218 = por %p216, %p217
      %p219 = scmp.ne.s32.totalorder %s211, %s213
      %p220 = scmp.eq.s32.totalorder %s30, 1
      %p221 = por %p219, %p220
      %p222 = scmp.ne.s32.totalorder %s213, %s214
      %p223 = scmp.eq.s32.totalorder %s30, 0
      %p224 = por %p222, %p223
      %p225 = scmp.ne.s32.totalorder %s213, %s214
      %p226 = scmp.eq.s32.totalorder %s31, 1
      %p227 = por %p225, %p226
      %p229 = scmp.ne.s32.totalorder %s214, %s228
      %p230 = scmp.eq.s32.totalorder %s31, 0
      %p231 = por %p229, %p230
      %s233 = sadd.s32 %s232, 1
      %p236 = scmp.eq.s32.totalorder %s25, 1
      %p237 = scmp.ne.s32.totalorder %s232, %s234
      %p238 = scmp.eq.s32.totalorder %s25, 0
      %p239 = por %p237, %p238
      %p240 = scmp.ne.s32.totalorder %s232, %s234
      %p241 = scmp.eq.s32.totalorder %s30, 1
      %p242 = por %p240, %p241
      %p243 = scmp.ne.s32.totalorder %s234, %s235
      %p244 = scmp.eq.s32.totalorder %s30, 0
      %p245 = por %p243, %p244
      %p246 = scmp.ne.s32.totalorder %s234, %s235
      %p247 = scmp.eq.s32.totalorder %s31, 1
      %p248 = por %p246, %p247
      %p250 = scmp.ne.s32.totalorder %s235, %s249
      %p251 = scmp.eq.s32.totalorder %s31, 0
      %p252 = por %p250, %p251
      %s254 = sadd.s32 %s253, 1
      %p257 = scmp.eq.s32.totalorder %s25, 1
      %p258 = scmp.ne.s32.totalorder %s253, %s255
      %p259 = scmp.eq.s32.totalorder %s25, 0
      %p260 = por %p258, %p259
      %p261 = scmp.ne.s32.totalorder %s253, %s255
      %p262 = scmp.eq.s32.totalorder %s30, 1
      %p263 = por %p261, %p262
      %p264 = scmp.ne.s32.totalorder %s255, %s256
      %p265 = scmp.eq.s32.totalorder %s30, 0
      %p266 = por %p264, %p265
      %p267 = scmp.ne.s32.totalorder %s255, %s256
      %p268 = scmp.eq.s32.totalorder %s31, 1
      %p269 = por %p267, %p268
      %p271 = scmp.ne.s32.totalorder %s256, %s270
      %p272 = scmp.eq.s32.totalorder %s31, 0
      %p273 = por %p271, %p272
      %s275 = sadd.s32 %s274, 1
      %p278 = scmp.eq.s32.totalorder %s25, 1
      %p279 = scmp.ne.s32.totalorder %s274, %s276
      %p280 = scmp.eq.s32.totalorder %s25, 0
      %p281 = por %p279, %p280
      %p282 = scmp.ne.s32.totalorder %s274, %s276
      %p283 = scmp.eq.s32.totalorder %s30, 1
      %p284 = por %p282, %p283
      %p285 = scmp.ne.s32.totalorder %s276, %s277
      %p286 = scmp.eq.s32.totalorder %s30, 0
      %p287 = por %p285, %p286
      %p288 = scmp.ne.s32.totalorder %s276, %s277
      %p289 = scmp.eq.s32.totalorder %s31, 1
      %p290 = por %p288, %p289
      %p292 = scmp.ne.s32.totalorder %s277, %s291
      %p293 = scmp.eq.s32.totalorder %s31, 0
      %p294 = por %p292, %p293
      %s296 = sadd.s32 %s295, 1
      %p299 = scmp.eq.s32.totalorder %s25, 1
      %p300 = scmp.ne.s32.totalorder %s295, %s297
      %p301 = scmp.eq.s32.totalorder %s25, 0
      %p302 = por %p300, %p301
      %p303 = scmp.ne.s32.totalorder %s295, %s297
      %p304 = scmp.eq.s32.totalorder %s30, 1
      %p305 = por %p303, %p304
      %p306 = scmp.ne.s32.totalorder %s297, %s298
      %p307 = scmp.eq.s32.totalorder %s30, 0
      %p308 = por %p306, %p307
      %p309 = scmp.ne.s32.totalorder %s297, %s298
      %p310 = scmp.eq.s32.totalorder %s31, 1
      %p311 = por %p309, %p310
      %p313 = scmp.ne.s32.totalorder %s298, %s312
      %p314 = scmp.eq.s32.totalorder %s31, 0
      %p315 = por %p313, %p314
      %s317 = sadd.s32 %s316, 1
      %p320 = scmp.eq.s32.totalorder %s25, 1
      %p321 = scmp.ne.s32.totalorder %s316, %s318
      %p322 = scmp.eq.s32.totalorder %s25, 0
      %p323 = por %p321, %p322
      %p324 = scmp.ne.s32.totalorder %s316, %s318
      %p325 = scmp.eq.s32.totalorder %s30, 1
      %p326 = por %p324, %p325
      %p327 = scmp.ne.s32.totalorder %s318, %s319
      %p328 = scmp.eq.s32.totalorder %s30, 0
      %p329 = por %p327, %p328
      %p330 = scmp.ne.s32.totalorder %s318, %s319
      %p331 = scmp.eq.s32.totalorder %s31, 1
      %p332 = por %p330, %p331
      %p334 = scmp.ne.s32.totalorder %s319, %s333
      %p335 = scmp.eq.s32.totalorder %s31, 0
      %p336 = por %p334, %p335
      %s338 = sadd.s32 %s337, 1
      %p341 = scmp.eq.s32.totalorder %s25, 1
      %p342 = scmp.ne.s32.totalorder %s337, %s339
      %p343 = scmp.eq.s32.totalorder %s25, 0
      %p344 = por %p342, %p343
      %p345 = scmp.ne.s32.totalorder %s337, %s339
      %p346 = scmp.eq.s32.totalorder %s30, 1
      %p347 = por %p345, %p346
      %p348 = scmp.ne.s32.totalorder %s339, %s340
      %p349 = scmp.eq.s32.totalorder %s30, 0
      %p350 = por %p348, %p349
      %p351 = scmp.ne.s32.totalorder %s339, %s340
      %p352 = scmp.eq.s32.totalorder %s31, 1
      %p353 = por %p351, %p352
      %p355 = scmp.ne.s32.totalorder %s340, %s354
      %p356 = scmp.eq.s32.totalorder %s31, 0
      %p357 = por %p355, %p356
      %s359 = sadd.s32 %s358, 1
      %p362 = scmp.eq.s32.totalorder %s25, 1
      %p363 = scmp.ne.s32.totalorder %s358, %s360
      %p364 = scmp.eq.s32.totalorder %s25, 0
      %p365 = por %p363, %p364
      %p366 = scmp.ne.s32.totalorder %s358, %s360
      %p367 = scmp.eq.s32.totalorder %s30, 1
      %p368 = por %p366, %p367
      %p369 = scmp.ne.s32.totalorder %s360, %s361
      %p370 = scmp.eq.s32.totalorder %s30, 0
      %p371 = por %p369, %p370
      %p372 = scmp.ne.s32.totalorder %s360, %s361
      %p373 = scmp.eq.s32.totalorder %s31, 1
      %p374 = por %p372, %p373
      %p376 = scmp.ne.s32.totalorder %s361, %s375
      %p377 = scmp.eq.s32.totalorder %s31, 0
      %p378 = por %p376, %p377
      %s379 = ssub.s32 %s25, %s32
      %p380 = scmp.eq.s32.totalorder %s379, 0
      %s382 = sadd.s32 %s381, 1
      %s383 = scalar_select %p380, %s381, %s382
      %p386 = pneg %p380
      %p387 = scmp.eq.s32.totalorder %s25, 1
      %p388 = por %p386, %p387
      %p389 = scmp.ne.s32.totalorder %s381, %s384
      %p390 = scmp.eq.s32.totalorder %s25, 0
      %p391 = por %p389, %p390
      %p392 = scmp.ne.s32.totalorder %s381, %s384
      %p393 = scmp.eq.s32.totalorder %s30, 1
      %p394 = por %p392, %p393
      %p395 = scmp.ne.s32.totalorder %s384, %s385
      %p396 = scmp.eq.s32.totalorder %s30, 0
      %p397 = por %p395, %p396
      %p398 = scmp.ne.s32.totalorder %s384, %s385
      %p399 = scmp.eq.s32.totalorder %s31, 1
      %p400 = por %p398, %p399
      %p402 = scmp.ne.s32.totalorder %s385, %s401
      %p403 = scmp.eq.s32.totalorder %s31, 0
      %p404 = por %p402, %p403
      %p405 = scmp.le.s32.totalorder 1, %s25
      %p406 = scmp.lt.s32.totalorder %s25, 3
      %p407 = pnand %p405, %p406
      %p408 = pneg %p407
      // Predicated region
      $region9: #{sga_forward.1} parent=5 // pred_check
        _
      $region10: #{sga_forward.1} parent=5 // pred_check_branch
        %410 = sbr.rel (%p407) target = $region12
      $region11: #{sga_forward.1} parent=5 // pred_region
        %s411 = ssub.s32 %s25, 1
        // Predicated region
        $region13: #{sga_forward.1} parent=11 // pred_check
          %p412 = pneg %p98
        $region14: #{sga_forward.1} parent=11 // pred_check_branch
          %414 = sbr.rel (%p412) target = $region16
        $region15: #{sga_forward.1} parent=11 // pred_region
          _
        $region16: #{sga_forward.1} parent=11 // pred_fallthru
          _
        // Predicated region
        $region17: #{sga_forward.1} parent=11 // pred_check
          %p415 = pneg %p119
        $region18: #{sga_forward.1} parent=11 // pred_check_branch
          %417 = sbr.rel (%p415) target = $region20
        $region19: #{sga_forward.1} parent=11 // pred_region
          _
        $region20: #{sga_forward.1} parent=11 // pred_fallthru
          _
        // Predicated region
        $region21: #{sga_forward.1} parent=11 // pred_check
          %p418 = pneg %p140
        $region22: #{sga_forward.1} parent=11 // pred_check_branch
          %420 = sbr.rel (%p418) target = $region24
        $region23: #{sga_forward.1} parent=11 // pred_region
          _
        $region24: #{sga_forward.1} parent=11 // pred_fallthru
          _
        // Predicated region
        $region25: #{sga_forward.1} parent=11 // pred_check
          %p421 = pneg %p161
        $region26: #{sga_forward.1} parent=11 // pred_check_branch
          %423 = sbr.rel (%p421) target = $region28
        $region27: #{sga_forward.1} parent=11 // pred_region
          _
        $region28: #{sga_forward.1} parent=11 // pred_fallthru
          _
        // Predicated region
        $region29: #{sga_forward.1} parent=11 // pred_check
          %p424 = pneg %p182
        $region30: #{sga_forward.1} parent=11 // pred_check_branch
          %426 = sbr.rel (%p424) target = $region32
        $region31: #{sga_forward.1} parent=11 // pred_region
          _
        $region32: #{sga_forward.1} parent=11 // pred_fallthru
          _
        // Predicated region
        $region33: #{sga_forward.1} parent=11 // pred_check
          %p427 = pneg %p203
        $region34: #{sga_forward.1} parent=11 // pred_check_branch
          %429 = sbr.rel (%p427) target = $region36
        $region35: #{sga_forward.1} parent=11 // pred_region
          _
        $region36: #{sga_forward.1} parent=11 // pred_fallthru
          _
        // Predicated region
        $region37: #{sga_forward.1} parent=11 // pred_check
          %p430 = pneg %p224
        $region38: #{sga_forward.1} parent=11 // pred_check_branch
          %432 = sbr.rel (%p430) target = $region40
        $region39: #{sga_forward.1} parent=11 // pred_region
          _
        $region40: #{sga_forward.1} parent=11 // pred_fallthru
          _
        // Predicated region
        $region41: #{sga_forward.1} parent=11 // pred_check
          %p433 = pneg %p245
        $region42: #{sga_forward.1} parent=11 // pred_check_branch
          %435 = sbr.rel (%p433) target = $region44
        $region43: #{sga_forward.1} parent=11 // pred_region
          _
        $region44: #{sga_forward.1} parent=11 // pred_fallthru
          _
        // Predicated region
        $region45: #{sga_forward.1} parent=11 // pred_check
          %p436 = pneg %p266
        $region46: #{sga_forward.1} parent=11 // pred_check_branch
          %438 = sbr.rel (%p436) target = $region48
        $region47: #{sga_forward.1} parent=11 // pred_region
          _
        $region48: #{sga_forward.1} parent=11 // pred_fallthru
          _
        // Predicated region
        $region49: #{sga_forward.1} parent=11 // pred_check
          %p439 = pneg %p287
        $region50: #{sga_forward.1} parent=11 // pred_check_branch
          %441 = sbr.rel (%p439) target = $region52
        $region51: #{sga_forward.1} parent=11 // pred_region
          _
        $region52: #{sga_forward.1} parent=11 // pred_fallthru
          _
        // Predicated region
        $region53: #{sga_forward.1} parent=11 // pred_check
          %p442 = pneg %p308
        $region54: #{sga_forward.1} parent=11 // pred_check_branch
          %444 = sbr.rel (%p442) target = $region56
        $region55: #{sga_forward.1} parent=11 // pred_region
          _
        $region56: #{sga_forward.1} parent=11 // pred_fallthru
          _
        // Predicated region
        $region57: #{sga_forward.1} parent=11 // pred_check
          %p445 = pneg %p329
        $region58: #{sga_forward.1} parent=11 // pred_check_branch
          %447 = sbr.rel (%p445) target = $region60
        $region59: #{sga_forward.1} parent=11 // pred_region
          _
        $region60: #{sga_forward.1} parent=11 // pred_fallthru
          _
        // Predicated region
        $region61: #{sga_forward.1} parent=11 // pred_check
          %p448 = pneg %p350
        $region62: #{sga_forward.1} parent=11 // pred_check_branch
          %450 = sbr.rel (%p448) target = $region64
        $region63: #{sga_forward.1} parent=11 // pred_region
          _
        $region64: #{sga_forward.1} parent=11 // pred_fallthru
          _
        // Predicated region
        $region65: #{sga_forward.1} parent=11 // pred_check
          %p451 = pneg %p371
        $region66: #{sga_forward.1} parent=11 // pred_check_branch
          %453 = sbr.rel (%p451) target = $region68
        $region67: #{sga_forward.1} parent=11 // pred_region
          _
        $region68: #{sga_forward.1} parent=11 // pred_fallthru
          _
      $region12: #{sga_forward.1} parent=5 // pred_fallthru
        _
      %p454 = scmp.lt.s32.totalorder %s25, 2
      // Predicated region
      $region69: #{sga_forward.1} parent=5 // pred_check
        %p455 = pneg %p454
      $region70: #{sga_forward.1} parent=5 // pred_check_branch
        %457 = sbr.rel (%p455) target = $region72
      $region71: #{sga_forward.1} parent=5 // pred_region
        // Predicated region
        $region73: #{sga_forward.1} parent=71 // pred_check
          %p458 = pneg %p45
        $region74: #{sga_forward.1} parent=71 // pred_check_branch
          %460 = sbr.rel (%p458) target = $region76
        $region75: #{sga_forward.1} parent=71 // pred_region
          %p461 = scmp.lt.s32.totalorder %s25, 1
          %s462 = scalar_select %p461, %s25, 1
          %s463 = smul.addr %s462, 8
          %s464 = scalar_lea.vmem %s0, %s463
        $region76: #{sga_forward.1} parent=71 // pred_fallthru
          _
        // Predicated region
        $region77: #{sga_forward.1} parent=71 // pred_check
          %p465 = pneg %p71
        $region78: #{sga_forward.1} parent=71 // pred_check_branch
          %467 = sbr.rel (%p465) target = $region80
        $region79: #{sga_forward.1} parent=71 // pred_region
          %s468 = smul.u32 2, %s25
          %p469 = scmp.lt.s32.totalorder %s468, 3
          %s470 = scalar_select %p469, %s468, 3
          %s471 = smul.addr %s470, 8
          %s472 = scalar_lea.vmem %s1, %s471
          %s473 = smul.u32 2, %s25
        $region80: #{sga_forward.1} parent=71 // pred_fallthru
          _
      $region72: #{sga_forward.1} parent=5 // pred_fallthru
        _
      %p474 = scmp.le.s32.totalorder 1, %s25
      %p475 = scmp.lt.s32.totalorder %s25, 3
      %p476 = pnand %p474, %p475
      %p477 = pneg %p476
      // Predicated region
      $region81: #{sga_forward.1} parent=5 // pred_check
        _
      $region82: #{sga_forward.1} parent=5 // pred_check_branch
        %479 = sbr.rel (%p476) target = $region84
      $region83: #{sga_forward.1} parent=5 // pred_region
        %s480 = ssub.s32 %s25, 1
        %p481 = scmp.lt.s32.totalorder %s30, 1
        %s482 = scalar_select %p481, %s30, 1
        %s483 = smul.addr %s482, 8
        %s484 = scalar_lea.vmem %s0, %s483
        %p485 = pneg %p51
        %p486 = pneg %p48
        %s487 = smul.u32 2, %s30
        %p488 = scmp.lt.s32.totalorder %s487, 3
        %s489 = scalar_select %p488, %s487, 3
        %s490 = smul.addr %s489, 8
        %s491 = scalar_lea.vmem %s1, %s490
        %p492 = pneg %p77
        %p493 = pneg %p74
        %p494 = pneg %p98
        %p495 = pneg %p95
        %p496 = pneg %p119
        %p497 = pneg %p116
        %p498 = pneg %p140
        %p499 = pneg %p137
        %p500 = pneg %p161
        %p501 = pneg %p158
        %p502 = pneg %p182
        %p503 = pneg %p179
        %p504 = pneg %p203
        %p505 = pneg %p200
        %p506 = pneg %p224
        %p507 = pneg %p221
        %p508 = pneg %p245
        %p509 = pneg %p242
        %p510 = pneg %p266
        %p511 = pneg %p263
        %p512 = pneg %p287
        %p513 = pneg %p284
        %p514 = pneg %p308
        %p515 = pneg %p305
        %p516 = pneg %p329
        %p517 = pneg %p326
        %p518 = pneg %p350
        %p519 = pneg %p347
        %p520 = pneg %p371
        %p521 = pneg %p368
        %p522 = pneg %p397
        %p523 = pneg %p394
        %s524 = sand.u32 %s384, 1
        %s525 = scalar_lea.sflag [#allocation3], %s524
        %s526 = sand.u32 %s384, 1
        %s527 = smul.addr %s526, 8
        %s528 = scalar_lea.vmem [#allocation2], %s527
        %p529 = scmp.lt.s32.totalorder %s30, 1
        %s530 = scalar_select %p529, %s30, 1
        %s531 = smul.addr %s530, 8
        %s532 = scalar_lea.vmem %s0, %s531
        %s533 = smul.u32 2, %s30
        %p534 = scmp.lt.s32.totalorder %s533, 3
        %s535 = scalar_select %p534, %s533, 3
        %s536 = smul.addr %s535, 8
        %s537 = scalar_lea.vmem %s1, %s536
        %s538 = smul.u32 2, %s30
        %v539 = vld [vmem:[%s532] sm:$0xff]
        %v540 = vld [vmem:[%s537] sm:$0xff]
        %v541 = vld [vmem:[%s537 + $0x8] sm:$0xff]
        %v542 = vld [vmem:[%s2] sm:$0xff]
        %v543 = vld [vmem:[%s2 + $0x8] sm:$0xff]
        %v544 = vld [vmem:[%s2 + $0x10] sm:$0xff]
        %v545 = vld [vmem:[%s2 + $0x18] sm:$0xff]
        %v546 = vld [vmem:[%s2 + $0x20] sm:$0xff]
        %v547 = vld [vmem:[%s2 + $0x28] sm:$0xff]
        %v548 = vld [vmem:[%s2 + $0x30] sm:$0xff]
        %v549 = vld [vmem:[%s2 + $0x38] sm:$0xff]
        %v550 = vld [vmem:[%s2 + $0x40] sm:$0xff]
        %v551 = vld [vmem:[%s2 + $0x48] sm:$0xff]
        %v552 = vld [vmem:[%s2 + $0x50] sm:$0xff]
        %v553 = vld [vmem:[%s2 + $0x58] sm:$0xff]
        %v554 = vld [vmem:[%s2 + $0x60] sm:$0xff]
        %v555 = vld [vmem:[%s2 + $0x68] sm:$0xff]
        %v556 = vld [vmem:[%s2 + $0x70] sm:$0xff]
        %v557 = vld [vmem:[%s2 + $0x78] sm:$0xff]
        %vm558 = vcmask 261120
        %v560 = vsel %vm558, %v539, 0
        %562 = vmatpush.msra.mxu0 0.0
        %563 = vmatpush.msra.mxu0 0.0
        %564 = vmatpush.msra.mxu0 0.0
        %565 = vmatpush.msra.mxu0 0.0
        %566 = vmatpush.msra.mxu0 0.0
        %567 = vmatpush.msra.mxu0 0.0
        %568 = vmatpush.msra.mxu0 0.0
        %569 = vmatpush.msra.mxu0 0.0
        %570 = vmatpush.msra.mxu0 0.0
        %571 = vmatpush.msra.mxu0 0.0
        %572 = vmatpush.msra.mxu0 0.0
        %573 = vmatpush.msra.mxu0 0.0
        %574 = vmatpush.msra.mxu0 %v554
        %575 = vmatpush.msra.mxu0 %v550
        %576 = vmatpush.msra.mxu0 %v546
        %577 = vmatpush.msra.mxu0 %v542
        %578 = vmatmul.f32.gmra.mxu0 %v560
        %v579 = vpop.f32.mrf.mxu0
        %v580 = vadd.f32 0.0, %v579
        %581 = vdwg.mxu0
        %582 = vmatpush.msra.mxu0 0.0
        %583 = vmatpush.msra.mxu0 0.0
        %584 = vmatpush.msra.mxu0 0.0
        %585 = vmatpush.msra.mxu0 0.0
        %586 = vmatpush.msra.mxu0 0.0
        %587 = vmatpush.msra.mxu0 0.0
        %588 = vmatpush.msra.mxu0 0.0
        %589 = vmatpush.msra.mxu0 0.0
        %590 = vmatpush.msra.mxu0 0.0
        %591 = vmatpush.msra.mxu0 0.0
        %592 = vmatpush.msra.mxu0 0.0
        %593 = vmatpush.msra.mxu0 0.0
        %594 = vmatpush.msra.mxu0 %v555
        %595 = vmatpush.msra.mxu0 %v551
        %596 = vmatpush.msra.mxu0 %v547
        %597 = vmatpush.msra.mxu0 %v543
        %598 = vmatmul.f32.gmra.mxu0 %v560
        %v599 = vpop.f32.mrf.mxu0
        %v600 = vadd.f32 0.0, %v599
        %601 = vdwg.mxu0
        %602 = vmatpush.msra.mxu0 0.0
        %603 = vmatpush.msra.mxu0 0.0
        %604 = vmatpush.msra.mxu0 0.0
        %605 = vmatpush.msra.mxu0 0.0
        %606 = vmatpush.msra.mxu0 0.0
        %607 = vmatpush.msra.mxu0 0.0
        %608 = vmatpush.msra.mxu0 0.0
        %609 = vmatpush.msra.mxu0 0.0
        %610 = vmatpush.msra.mxu0 0.0
        %611 = vmatpush.msra.mxu0 0.0
        %612 = vmatpush.msra.mxu0 0.0
        %613 = vmatpush.msra.mxu0 0.0
        %614 = vmatpush.msra.mxu0 %v556
        %615 = vmatpush.msra.mxu0 %v552
        %616 = vmatpush.msra.mxu0 %v548
        %617 = vmatpush.msra.mxu0 %v544
        %618 = vmatmul.f32.gmra.mxu0 %v560
        %v619 = vpop.f32.mrf.mxu0
        %v620 = vadd.f32 0.0, %v619
        %621 = vdwg.mxu0
        %622 = vmatpush.msra.mxu0 0.0
        %623 = vmatpush.msra.mxu0 0.0
        %624 = vmatpush.msra.mxu0 0.0
        %625 = vmatpush.msra.mxu0 0.0
        %626 = vmatpush.msra.mxu0 0.0
        %627 = vmatpush.msra.mxu0 0.0
        %628 = vmatpush.msra.mxu0 0.0
        %629 = vmatpush.msra.mxu0 0.0
        %630 = vmatpush.msra.mxu0 0.0
        %631 = vmatpush.msra.mxu0 0.0
        %632 = vmatpush.msra.mxu0 0.0
        %633 = vmatpush.msra.mxu0 0.0
        %634 = vmatpush.msra.mxu0 %v557
        %635 = vmatpush.msra.mxu0 %v553
        %636 = vmatpush.msra.mxu0 %v549
        %637 = vmatpush.msra.mxu0 %v545
        %638 = vmatmul.f32.gmra.mxu0 %v560
        %v639 = vpop.f32.mrf.mxu0
        %v640 = vadd.f32 0.0, %v639
        %641 = vdwg.mxu0
        %v642 = vld [vmem:[%s3] sm:$0xff]
        %v643 = vld [vmem:[%s3 + $0x8] sm:$0xff]
        %v644 = vld [vmem:[%s3 + $0x10] sm:$0xff]
        %v645 = vld [vmem:[%s3 + $0x18] sm:$0xff]
        %v646 = vld [vmem:[%s3 + $0x20] sm:$0xff]
        %v647 = vld [vmem:[%s3 + $0x28] sm:$0xff]
        %v648 = vld [vmem:[%s3 + $0x30] sm:$0xff]
        %v649 = vld [vmem:[%s3 + $0x38] sm:$0xff]
        %v650 = vld [vmem:[%s3 + $0x40] sm:$0xff]
        %v651 = vld [vmem:[%s3 + $0x48] sm:$0xff]
        %v652 = vld [vmem:[%s3 + $0x50] sm:$0xff]
        %v653 = vld [vmem:[%s3 + $0x58] sm:$0xff]
        %v654 = vld [vmem:[%s3 + $0x60] sm:$0xff]
        %v655 = vld [vmem:[%s3 + $0x68] sm:$0xff]
        %v656 = vld [vmem:[%s3 + $0x70] sm:$0xff]
        %v657 = vld [vmem:[%s3 + $0x78] sm:$0xff]
        %v658 = vld [vmem:[%s3 + $0x80] sm:$0xff]
        %v659 = vld [vmem:[%s3 + $0x88] sm:$0xff]
        %v660 = vld [vmem:[%s3 + $0x90] sm:$0xff]
        %v661 = vld [vmem:[%s3 + $0x98] sm:$0xff]
        %v662 = vld [vmem:[%s3 + $0xa0] sm:$0xff]
        %v663 = vld [vmem:[%s3 + $0xa8] sm:$0xff]
        %v664 = vld [vmem:[%s3 + $0xb0] sm:$0xff]
        %v665 = vld [vmem:[%s3 + $0xb8] sm:$0xff]
        %v666 = vld [vmem:[%s3 + $0xc0] sm:$0xff]
        %v667 = vld [vmem:[%s3 + $0xc8] sm:$0xff]
        %v668 = vld [vmem:[%s3 + $0xd0] sm:$0xff]
        %v669 = vld [vmem:[%s3 + $0xd8] sm:$0xff]
        %v670 = vld [vmem:[%s3 + $0xe0] sm:$0xff]
        %v671 = vld [vmem:[%s3 + $0xe8] sm:$0xff]
        %v672 = vld [vmem:[%s3 + $0xf0] sm:$0xff]
        %v673 = vld [vmem:[%s3 + $0xf8] sm:$0xff]
        %674 = vmatpush.msra.mxu0 0.0
        %675 = vmatpush.msra.mxu0 0.0
        %676 = vmatpush.msra.mxu0 0.0
        %677 = vmatpush.msra.mxu0 0.0
        %678 = vmatpush.msra.mxu0 0.0
        %679 = vmatpush.msra.mxu0 0.0
        %680 = vmatpush.msra.mxu0 0.0
        %681 = vmatpush.msra.mxu0 0.0
        %682 = vmatpush.msra.mxu0 0.0
        %683 = vmatpush.msra.mxu0 0.0
        %684 = vmatpush.msra.mxu0 0.0
        %685 = vmatpush.msra.mxu0 0.0
        %686 = vmatpush.msra.mxu0 %v666
        %687 = vmatpush.msra.mxu0 %v658
        %688 = vmatpush.msra.mxu0 %v650
        %689 = vmatpush.msra.mxu0 %v642
        %690 = vmatmul.f32.gmra.mxu0 %v560
        %v691 = vpop.f32.mrf.mxu0
        %v692 = vadd.f32 0.0, %v691
        %693 = vdwg.mxu0
        %694 = vmatpush.msra.mxu0 0.0
        %695 = vmatpush.msra.mxu0 0.0
        %696 = vmatpush.msra.mxu0 0.0
        %697 = vmatpush.msra.mxu0 0.0
        %698 = vmatpush.msra.mxu0 0.0
        %699 = vmatpush.msra.mxu0 0.0
        %700 = vmatpush.msra.mxu0 0.0
        %701 = vmatpush.msra.mxu0 0.0
        %702 = vmatpush.msra.mxu0 0.0
        %703 = vmatpush.msra.mxu0 0.0
        %704 = vmatpush.msra.mxu0 0.0
        %705 = vmatpush.msra.mxu0 0.0
        %706 = vmatpush.msra.mxu0 %v667
        %707 = vmatpush.msra.mxu0 %v659
        %708 = vmatpush.msra.mxu0 %v651
        %709 = vmatpush.msra.mxu0 %v643
        %710 = vmatmul.f32.gmra.mxu0 %v560
        %v711 = vpop.f32.mrf.mxu0
        %v712 = vadd.f32 0.0, %v711
        %713 = vdwg.mxu0
        %714 = vmatpush.msra.mxu0 0.0
        %715 = vmatpush.msra.mxu0 0.0
        %716 = vmatpush.msra.mxu0 0.0
        %717 = vmatpush.msra.mxu0 0.0
        %718 = vmatpush.msra.mxu0 0.0
        %719 = vmatpush.msra.mxu0 0.0
        %720 = vmatpush.msra.mxu0 0.0
        %721 = vmatpush.msra.mxu0 0.0
        %722 = vmatpush.msra.mxu0 0.0
        %723 = vmatpush.msra.mxu0 0.0
        %724 = vmatpush.msra.mxu0 0.0
        %725 = vmatpush.msra.mxu0 0.0
        %726 = vmatpush.msra.mxu0 %v668
        %727 = vmatpush.msra.mxu0 %v660
        %728 = vmatpush.msra.mxu0 %v652
        %729 = vmatpush.msra.mxu0 %v644
        %730 = vmatmul.f32.gmra.mxu0 %v560
        %v731 = vpop.f32.mrf.mxu0
        %v732 = vadd.f32 0.0, %v731
        %733 = vdwg.mxu0
        %734 = vmatpush.msra.mxu0 0.0
        %735 = vmatpush.msra.mxu0 0.0
        %736 = vmatpush.msra.mxu0 0.0
        %737 = vmatpush.msra.mxu0 0.0
        %738 = vmatpush.msra.mxu0 0.0
        %739 = vmatpush.msra.mxu0 0.0
        %740 = vmatpush.msra.mxu0 0.0
        %741 = vmatpush.msra.mxu0 0.0
        %742 = vmatpush.msra.mxu0 0.0
        %743 = vmatpush.msra.mxu0 0.0
        %744 = vmatpush.msra.mxu0 0.0
        %745 = vmatpush.msra.mxu0 0.0
        %746 = vmatpush.msra.mxu0 %v669
        %747 = vmatpush.msra.mxu0 %v661
        %748 = vmatpush.msra.mxu0 %v653
        %749 = vmatpush.msra.mxu0 %v645
        %750 = vmatmul.f32.gmra.mxu0 %v560
        %v751 = vpop.f32.mrf.mxu0
        %v752 = vadd.f32 0.0, %v751
        %753 = vdwg.mxu0
        %754 = vmatpush.msra.mxu0 0.0
        %755 = vmatpush.msra.mxu0 0.0
        %756 = vmatpush.msra.mxu0 0.0
        %757 = vmatpush.msra.mxu0 0.0
        %758 = vmatpush.msra.mxu0 0.0
        %759 = vmatpush.msra.mxu0 0.0
        %760 = vmatpush.msra.mxu0 0.0
        %761 = vmatpush.msra.mxu0 0.0
        %762 = vmatpush.msra.mxu0 0.0
        %763 = vmatpush.msra.mxu0 0.0
        %764 = vmatpush.msra.mxu0 0.0
        %765 = vmatpush.msra.mxu0 0.0
        %766 = vmatpush.msra.mxu0 %v670
        %767 = vmatpush.msra.mxu0 %v662
        %768 = vmatpush.msra.mxu0 %v654
        %769 = vmatpush.msra.mxu0 %v646
        %770 = vmatmul.f32.gmra.mxu0 %v560
        %v771 = vpop.f32.mrf.mxu0
        %v772 = vadd.f32 0.0, %v771
        %773 = vdwg.mxu0
        %774 = vmatpush.msra.mxu0 0.0
        %775 = vmatpush.msra.mxu0 0.0
        %776 = vmatpush.msra.mxu0 0.0
        %777 = vmatpush.msra.mxu0 0.0
        %778 = vmatpush.msra.mxu0 0.0
        %779 = vmatpush.msra.mxu0 0.0
        %780 = vmatpush.msra.mxu0 0.0
        %781 = vmatpush.msra.mxu0 0.0
        %782 = vmatpush.msra.mxu0 0.0
        %783 = vmatpush.msra.mxu0 0.0
        %784 = vmatpush.msra.mxu0 0.0
        %785 = vmatpush.msra.mxu0 0.0
        %786 = vmatpush.msra.mxu0 %v671
        %787 = vmatpush.msra.mxu0 %v663
        %788 = vmatpush.msra.mxu0 %v655
        %789 = vmatpush.msra.mxu0 %v647
        %790 = vmatmul.f32.gmra.mxu0 %v560
        %v791 = vpop.f32.mrf.mxu0
        %v792 = vadd.f32 0.0, %v791
        %793 = vdwg.mxu0
        %794 = vmatpush.msra.mxu0 0.0
        %795 = vmatpush.msra.mxu0 0.0
        %796 = vmatpush.msra.mxu0 0.0
        %797 = vmatpush.msra.mxu0 0.0
        %798 = vmatpush.msra.mxu0 0.0
        %799 = vmatpush.msra.mxu0 0.0
        %800 = vmatpush.msra.mxu0 0.0
        %801 = vmatpush.msra.mxu0 0.0
        %802 = vmatpush.msra.mxu0 0.0
        %803 = vmatpush.msra.mxu0 0.0
        %804 = vmatpush.msra.mxu0 0.0
        %805 = vmatpush.msra.mxu0 0.0
        %806 = vmatpush.msra.mxu0 %v672
        %807 = vmatpush.msra.mxu0 %v664
        %808 = vmatpush.msra.mxu0 %v656
        %809 = vmatpush.msra.mxu0 %v648
        %810 = vmatmul.f32.gmra.mxu0 %v560
        %v811 = vpop.f32.mrf.mxu0
        %v812 = vadd.f32 0.0, %v811
        %813 = vdwg.mxu0
        %814 = vmatpush.msra.mxu0 0.0
        %815 = vmatpush.msra.mxu0 0.0
        %816 = vmatpush.msra.mxu0 0.0
        %817 = vmatpush.msra.mxu0 0.0
        %818 = vmatpush.msra.mxu0 0.0
        %819 = vmatpush.msra.mxu0 0.0
        %820 = vmatpush.msra.mxu0 0.0
        %821 = vmatpush.msra.mxu0 0.0
        %822 = vmatpush.msra.mxu0 0.0
        %823 = vmatpush.msra.mxu0 0.0
        %824 = vmatpush.msra.mxu0 0.0
        %825 = vmatpush.msra.mxu0 0.0
        %826 = vmatpush.msra.mxu0 %v673
        %827 = vmatpush.msra.mxu0 %v665
        %828 = vmatpush.msra.mxu0 %v657
        %829 = vmatpush.msra.mxu0 %v649
        %830 = vmatmul.f32.gmra.mxu0 %v560
        %v831 = vpop.f32.mrf.mxu0
        %v832 = vadd.f32 0.0, %v831
        %833 = vdwg.mxu0
        %vm834 = vcmask 523264
        %v836 = vsel %vm834, %v580, 0
        %v839 = vsel %vm834, %v692, 0
        %841 = vmatpush.xpose.msra.mxu0 0.0
        %842 = vmatpush.xpose.msra.mxu0 0.0
        %843 = vmatpush.xpose.msra.mxu0 0.0
        %844 = vmatpush.xpose.msra.mxu0 0.0
        %845 = vmatpush.xpose.msra.mxu0 0.0
        %846 = vmatpush.xpose.msra.mxu0 0.0
        %847 = vmatpush.xpose.msra.mxu0 0.0
        %848 = vmatpush.xpose.msra.mxu0 0.0
        %849 = vmatpush.xpose.msra.mxu0 0.0
        %850 = vmatpush.xpose.msra.mxu0 0.0
        %851 = vmatpush.xpose.msra.mxu0 0.0
        %852 = vmatpush.xpose.msra.mxu0 0.0
        %853 = vmatpush.xpose.msra.mxu0 0.0
        %854 = vmatpush.xpose.msra.mxu0 0.0
        %855 = vmatpush.xpose.msra.mxu0 0.0
        %856 = vmatpush.xpose.msra.mxu0 %v839
        %857 = vmatmul.f32.gmra.mxu0 %v836
        %v858 = vpop.f32.mrf.mxu0
        %v859 = vadd.f32 0.0, %v858
        %860 = vdwg.mxu0
        %v861 = vmul.f32 %v859, 0.125
        %vm862 = vcmask 64512
        %v863 = vsel %vm862, %v861, -inf
        %864 = vmax.xlane.f32.xlu0 %v863
        %v865 = vpop.xlane.xlu0 %864
        %v866 = vsub.f32 %v861, %v865
        %v867 = vmul.f32 %v866, 1.442695
        %v868 = vpow.pop %v867
        %v869 = vsel %vm862, %v868, 0.0
        %870 = vadd.xlane.f32.xlu0 %v869
        %v871 = vpop.xlane.xlu0 %870
        %v872 = vrcp.pop %v871
        %v873 = vmul.f32 %v871, %v872
        %v874 = vsub.f32 1.0, %v873
        %v875 = vmul.f32 %v872, %v874
        %v876 = vadd.f32 %v872, %v875
        %vm877 = vweird.f32 %v871
        %vm878 = vweird.f32 %v872
        %vm879 = vmor %vm877, %vm878
        %v880 = vsel %vm879, %v872, %v876
        %v881 = vand.u32 2147483647, %v871
        %vm882 = vcmp.eq.f32.partialorder %v881, 8.507059e+37
        %v883 = vand.u32 %v871, 2147483648
        %v884 = vor.u32 1.1754944e-38, %v883
        %v885 = vsel %vm882, %v884, %v880
        %v886 = vmul.f32 %v868, %v885
        %v888 = vsel %vm862, %v886, 0
        %890 = vmatpush.msra.mxu0 0.0
        %891 = vmatpush.msra.mxu0 0.0
        %892 = vmatpush.msra.mxu0 0.0
        %893 = vmatpush.msra.mxu0 0.0
        %894 = vmatpush.msra.mxu0 0.0
        %895 = vmatpush.msra.mxu0 0.0
        %896 = vmatpush.msra.mxu0 0.0
        %897 = vmatpush.msra.mxu0 0.0
        %898 = vmatpush.msra.mxu0 0.0
        %899 = vmatpush.msra.mxu0 0.0
        %900 = vmatpush.msra.mxu0 0.0
        %901 = vmatpush.msra.mxu0 0.0
        %902 = vmatpush.msra.mxu0 0.0
        %903 = vmatpush.msra.mxu0 0.0
        %904 = vmatpush.msra.mxu0 0.0
        %905 = vmatpush.msra.mxu0 %v772
        %906 = vmatmul.f32.gmra.mxu0 %v888
        %v907 = vpop.f32.mrf.mxu0
        %v908 = vadd.f32 0.0, %v907
        %909 = vdwg.mxu0
        %910 = vrot.lane.b32.xlu0 %v580, 64
        %v911 = vpop.permute.xlu0 %910
        %912 = vrot.lane.b32.xlu0 %v692, 64
        %v913 = vpop.permute.xlu0 %912
        %v914 = vsel %vm834, %v911, 0
        %v916 = vsel %vm834, %v913, 0
        %918 = vmatpush.xpose.msra.mxu0 0.0
        %919 = vmatpush.xpose.msra.mxu0 0.0
        %920 = vmatpush.xpose.msra.mxu0 0.0
        %921 = vmatpush.xpose.msra.mxu0 0.0
        %922 = vmatpush.xpose.msra.mxu0 0.0
        %923 = vmatpush.xpose.msra.mxu0 0.0
        %924 = vmatpush.xpose.msra.mxu0 0.0
        %925 = vmatpush.xpose.msra.mxu0 0.0
        %926 = vmatpush.xpose.msra.mxu0 0.0
        %927 = vmatpush.xpose.msra.mxu0 0.0
        %928 = vmatpush.xpose.msra.mxu0 0.0
        %929 = vmatpush.xpose.msra.mxu0 0.0
        %930 = vmatpush.xpose.msra.mxu0 0.0
        %931 = vmatpush.xpose.msra.mxu0 0.0
        %932 = vmatpush.xpose.msra.mxu0 0.0
        %933 = vmatpush.xpose.msra.mxu0 %v916
        %934 = vmatmul.f32.gmra.mxu0 %v914
        %v935 = vpop.f32.mrf.mxu0
        %v936 = vadd.f32 0.0, %v935
        %937 = vdwg.mxu0
        %v938 = vmul.f32 %v936, 0.125
        %v939 = vsel %vm862, %v938, -inf
        %940 = vmax.xlane.f32.xlu0 %v939
        %v941 = vpop.xlane.xlu0 %940
        %v942 = vsub.f32 %v938, %v941
        %v943 = vmul.f32 %v942, 1.442695
        %v944 = vpow.pop %v943
        %v945 = vsel %vm862, %v944, 0.0
        %946 = vadd.xlane.f32.xlu0 %v945
        %v947 = vpop.xlane.xlu0 %946
        %v948 = vrcp.pop %v947
        %v949 = vmul.f32 %v947, %v948
        %v950 = vsub.f32 1.0, %v949
        %v951 = vmul.f32 %v948, %v950
        %v952 = vadd.f32 %v948, %v951
        %vm953 = vweird.f32 %v947
        %vm954 = vweird.f32 %v948
        %vm955 = vmor %vm953, %vm954
        %v956 = vsel %vm955, %v948, %v952
        %v957 = vand.u32 2147483647, %v947
        %vm958 = vcmp.eq.f32.partialorder %v957, 8.507059e+37
        %v959 = vand.u32 %v947, 2147483648
        %v960 = vor.u32 1.1754944e-38, %v959
        %v961 = vsel %vm958, %v960, %v956
        %v962 = vmul.f32 %v944, %v961
        %964 = vrot.lane.b32.xlu0 %v772, 64
        %v965 = vpop.permute.xlu0 %964
        %v968 = vsel %vm862, %v962, 0
        %970 = vmatpush.msra.mxu0 0.0
        %971 = vmatpush.msra.mxu0 0.0
        %972 = vmatpush.msra.mxu0 0.0
        %973 = vmatpush.msra.mxu0 0.0
        %974 = vmatpush.msra.mxu0 0.0
        %975 = vmatpush.msra.mxu0 0.0
        %976 = vmatpush.msra.mxu0 0.0
        %977 = vmatpush.msra.mxu0 0.0
        %978 = vmatpush.msra.mxu0 0.0
        %979 = vmatpush.msra.mxu0 0.0
        %980 = vmatpush.msra.mxu0 0.0
        %981 = vmatpush.msra.mxu0 0.0
        %982 = vmatpush.msra.mxu0 0.0
        %983 = vmatpush.msra.mxu0 0.0
        %984 = vmatpush.msra.mxu0 0.0
        %985 = vmatpush.msra.mxu0 %v965
        %986 = vmatmul.f32.gmra.mxu0 %v968
        %v987 = vpop.f32.mrf.mxu0
        %v988 = vadd.f32 0.0, %v987
        %989 = vdwg.mxu0
        %v991 = vsel %vm834, %v600, 0
        %v994 = vsel %vm834, %v712, 0
        %996 = vmatpush.xpose.msra.mxu0 0.0
        %997 = vmatpush.xpose.msra.mxu0 0.0
        %998 = vmatpush.xpose.msra.mxu0 0.0
        %999 = vmatpush.xpose.msra.mxu0 0.0
        %1000 = vmatpush.xpose.msra.mxu0 0.0
        %1001 = vmatpush.xpose.msra.mxu0 0.0
        %1002 = vmatpush.xpose.msra.mxu0 0.0
        %1003 = vmatpush.xpose.msra.mxu0 0.0
        %1004 = vmatpush.xpose.msra.mxu0 0.0
        %1005 = vmatpush.xpose.msra.mxu0 0.0
        %1006 = vmatpush.xpose.msra.mxu0 0.0
        %1007 = vmatpush.xpose.msra.mxu0 0.0
        %1008 = vmatpush.xpose.msra.mxu0 0.0
        %1009 = vmatpush.xpose.msra.mxu0 0.0
        %1010 = vmatpush.xpose.msra.mxu0 0.0
        %1011 = vmatpush.xpose.msra.mxu0 %v994
        %1012 = vmatmul.f32.gmra.mxu0 %v991
        %v1013 = vpop.f32.mrf.mxu0
        %v1014 = vadd.f32 0.0, %v1013
        %1015 = vdwg.mxu0
        %v1016 = vmul.f32 %v1014, 0.125
        %v1017 = vsel %vm862, %v1016, -inf
        %1018 = vmax.xlane.f32.xlu0 %v1017
        %v1019 = vpop.xlane.xlu0 %1018
        %v1020 = vsub.f32 %v1016, %v1019
        %v1021 = vmul.f32 %v1020, 1.442695
        %v1022 = vpow.pop %v1021
        %v1023 = vsel %vm862, %v1022, 0.0
        %1024 = vadd.xlane.f32.xlu0 %v1023
        %v1025 = vpop.xlane.xlu0 %1024
        %v1026 = vrcp.pop %v1025
        %v1027 = vmul.f32 %v1025, %v1026
        %v1028 = vsub.f32 1.0, %v1027
        %v1029 = vmul.f32 %v1026, %v1028
        %v1030 = vadd.f32 %v1026, %v1029
        %vm1031 = vweird.f32 %v1025
        %vm1032 = vweird.f32 %v1026
        %vm1033 = vmor %vm1031, %vm1032
        %v1034 = vsel %vm1033, %v1026, %v1030
        %v1035 = vand.u32 2147483647, %v1025
        %vm1036 = vcmp.eq.f32.partialorder %v1035, 8.507059e+37
        %v1037 = vand.u32 %v1025, 2147483648
        %v1038 = vor.u32 1.1754944e-38, %v1037
        %v1039 = vsel %vm1036, %v1038, %v1034
        %v1040 = vmul.f32 %v1022, %v1039
        %v1042 = vsel %vm862, %v1040, 0
        %1044 = vmatpush.msra.mxu0 0.0
        %1045 = vmatpush.msra.mxu0 0.0
        %1046 = vmatpush.msra.mxu0 0.0
        %1047 = vmatpush.msra.mxu0 0.0
        %1048 = vmatpush.msra.mxu0 0.0
        %1049 = vmatpush.msra.mxu0 0.0
        %1050 = vmatpush.msra.mxu0 0.0
        %1051 = vmatpush.msra.mxu0 0.0
        %1052 = vmatpush.msra.mxu0 0.0
        %1053 = vmatpush.msra.mxu0 0.0
        %1054 = vmatpush.msra.mxu0 0.0
        %1055 = vmatpush.msra.mxu0 0.0
        %1056 = vmatpush.msra.mxu0 0.0
        %1057 = vmatpush.msra.mxu0 0.0
        %1058 = vmatpush.msra.mxu0 0.0
        %1059 = vmatpush.msra.mxu0 %v792
        %1060 = vmatmul.f32.gmra.mxu0 %v1042
        %v1061 = vpop.f32.mrf.mxu0
        %v1062 = vadd.f32 0.0, %v1061
        %1063 = vdwg.mxu0
        %1064 = vrot.lane.b32.xlu0 %v600, 64
        %v1065 = vpop.permute.xlu0 %1064
        %1066 = vrot.lane.b32.xlu0 %v712, 64
        %v1067 = vpop.permute.xlu0 %1066
        %v1068 = vsel %vm834, %v1065, 0
        %v1070 = vsel %vm834, %v1067, 0
        %1072 = vmatpush.xpose.msra.mxu0 0.0
        %1073 = vmatpush.xpose.msra.mxu0 0.0
        %1074 = vmatpush.xpose.msra.mxu0 0.0
        %1075 = vmatpush.xpose.msra.mxu0 0.0
        %1076 = vmatpush.xpose.msra.mxu0 0.0
        %1077 = vmatpush.xpose.msra.mxu0 0.0
        %1078 = vmatpush.xpose.msra.mxu0 0.0
        %1079 = vmatpush.xpose.msra.mxu0 0.0
        %1080 = vmatpush.xpose.msra.mxu0 0.0
        %1081 = vmatpush.xpose.msra.mxu0 0.0
        %1082 = vmatpush.xpose.msra.mxu0 0.0
        %1083 = vmatpush.xpose.msra.mxu0 0.0
        %1084 = vmatpush.xpose.msra.mxu0 0.0
        %1085 = vmatpush.xpose.msra.mxu0 0.0
        %1086 = vmatpush.xpose.msra.mxu0 0.0
        %1087 = vmatpush.xpose.msra.mxu0 %v1070
        %1088 = vmatmul.f32.gmra.mxu0 %v1068
        %v1089 = vpop.f32.mrf.mxu0
        %v1090 = vadd.f32 0.0, %v1089
        %1091 = vdwg.mxu0
        %v1092 = vmul.f32 %v1090, 0.125
        %v1093 = vsel %vm862, %v1092, -inf
        %1094 = vmax.xlane.f32.xlu0 %v1093
        %v1095 = vpop.xlane.xlu0 %1094
        %v1096 = vsub.f32 %v1092, %v1095
        %v1097 = vmul.f32 %v1096, 1.442695
        %v1098 = vpow.pop %v1097
        %v1099 = vsel %vm862, %v1098, 0.0
        %1100 = vadd.xlane.f32.xlu0 %v1099
        %v1101 = vpop.xlane.xlu0 %1100
        %v1102 = vrcp.pop %v1101
        %v1103 = vmul.f32 %v1101, %v1102
        %v1104 = vsub.f32 1.0, %v1103
        %v1105 = vmul.f32 %v1102, %v1104
        %v1106 = vadd.f32 %v1102, %v1105
        %vm1107 = vweird.f32 %v1101
        %vm1108 = vweird.f32 %v1102
        %vm1109 = vmor %vm1107, %vm1108
        %v1110 = vsel %vm1109, %v1102, %v1106
        %v1111 = vand.u32 2147483647, %v1101
        %vm1112 = vcmp.eq.f32.partialorder %v1111, 8.507059e+37
        %v1113 = vand.u32 %v1101, 2147483648
        %v1114 = vor.u32 1.1754944e-38, %v1113
        %v1115 = vsel %vm1112, %v1114, %v1110
        %v1116 = vmul.f32 %v1098, %v1115
        %1118 = vrot.lane.b32.xlu0 %v792, 64
        %v1119 = vpop.permute.xlu0 %1118
        %v1122 = vsel %vm862, %v1116, 0
        %1124 = vmatpush.msra.mxu0 0.0
        %1125 = vmatpush.msra.mxu0 0.0
        %1126 = vmatpush.msra.mxu0 0.0
        %1127 = vmatpush.msra.mxu0 0.0
        %1128 = vmatpush.msra.mxu0 0.0
        %1129 = vmatpush.msra.mxu0 0.0
        %1130 = vmatpush.msra.mxu0 0.0
        %1131 = vmatpush.msra.mxu0 0.0
        %1132 = vmatpush.msra.mxu0 0.0
        %1133 = vmatpush.msra.mxu0 0.0
        %1134 = vmatpush.msra.mxu0 0.0
        %1135 = vmatpush.msra.mxu0 0.0
        %1136 = vmatpush.msra.mxu0 0.0
        %1137 = vmatpush.msra.mxu0 0.0
        %1138 = vmatpush.msra.mxu0 0.0
        %1139 = vmatpush.msra.mxu0 %v1119
        %1140 = vmatmul.f32.gmra.mxu0 %v1122
        %v1141 = vpop.f32.mrf.mxu0
        %v1142 = vadd.f32 0.0, %v1141
        %1143 = vdwg.mxu0
        %v1145 = vsel %vm834, %v620, 0
        %v1148 = vsel %vm834, %v732, 0
        %1150 = vmatpush.xpose.msra.mxu0 0.0
        %1151 = vmatpush.xpose.msra.mxu0 0.0
        %1152 = vmatpush.xpose.msra.mxu0 0.0
        %1153 = vmatpush.xpose.msra.mxu0 0.0
        %1154 = vmatpush.xpose.msra.mxu0 0.0
        %1155 = vmatpush.xpose.msra.mxu0 0.0
        %1156 = vmatpush.xpose.msra.mxu0 0.0
        %1157 = vmatpush.xpose.msra.mxu0 0.0
        %1158 = vmatpush.xpose.msra.mxu0 0.0
        %1159 = vmatpush.xpose.msra.mxu0 0.0
        %1160 = vmatpush.xpose.msra.mxu0 0.0
        %1161 = vmatpush.xpose.msra.mxu0 0.0
        %1162 = vmatpush.xpose.msra.mxu0 0.0
        %1163 = vmatpush.xpose.msra.mxu0 0.0
        %1164 = vmatpush.xpose.msra.mxu0 0.0
        %1165 = vmatpush.xpose.msra.mxu0 %v1148
        %1166 = vmatmul.f32.gmra.mxu0 %v1145
        %v1167 = vpop.f32.mrf.mxu0
        %v1168 = vadd.f32 0.0, %v1167
        %1169 = vdwg.mxu0
        %v1170 = vmul.f32 %v1168, 0.125
        %v1171 = vsel %vm862, %v1170, -inf
        %1172 = vmax.xlane.f32.xlu0 %v1171
        %v1173 = vpop.xlane.xlu0 %1172
        %v1174 = vsub.f32 %v1170, %v1173
        %v1175 = vmul.f32 %v1174, 1.442695
        %v1176 = vpow.pop %v1175
        %v1177 = vsel %vm862, %v1176, 0.0
        %1178 = vadd.xlane.f32.xlu0 %v1177
        %v1179 = vpop.xlane.xlu0 %1178
        %v1180 = vrcp.pop %v1179
        %v1181 = vmul.f32 %v1179, %v1180
        %v1182 = vsub.f32 1.0, %v1181
        %v1183 = vmul.f32 %v1180, %v1182
        %v1184 = vadd.f32 %v1180, %v1183
        %vm1185 = vweird.f32 %v1179
        %vm1186 = vweird.f32 %v1180
        %vm1187 = vmor %vm1185, %vm1186
        %v1188 = vsel %vm1187, %v1180, %v1184
        %v1189 = vand.u32 2147483647, %v1179
        %vm1190 = vcmp.eq.f32.partialorder %v1189, 8.507059e+37
        %v1191 = vand.u32 %v1179, 2147483648
        %v1192 = vor.u32 1.1754944e-38, %v1191
        %v1193 = vsel %vm1190, %v1192, %v1188
        %v1194 = vmul.f32 %v1176, %v1193
        %v1196 = vsel %vm862, %v1194, 0
        %1198 = vmatpush.msra.mxu0 0.0
        %1199 = vmatpush.msra.mxu0 0.0
        %1200 = vmatpush.msra.mxu0 0.0
        %1201 = vmatpush.msra.mxu0 0.0
        %1202 = vmatpush.msra.mxu0 0.0
        %1203 = vmatpush.msra.mxu0 0.0
        %1204 = vmatpush.msra.mxu0 0.0
        %1205 = vmatpush.msra.mxu0 0.0
        %1206 = vmatpush.msra.mxu0 0.0
        %1207 = vmatpush.msra.mxu0 0.0
        %1208 = vmatpush.msra.mxu0 0.0
        %1209 = vmatpush.msra.mxu0 0.0
        %1210 = vmatpush.msra.mxu0 0.0
        %1211 = vmatpush.msra.mxu0 0.0
        %1212 = vmatpush.msra.mxu0 0.0
        %1213 = vmatpush.msra.mxu0 %v812
        %1214 = vmatmul.f32.gmra.mxu0 %v1196
        %v1215 = vpop.f32.mrf.mxu0
        %v1216 = vadd.f32 0.0, %v1215
        %1217 = vdwg.mxu0
        %1218 = vrot.lane.b32.xlu0 %v620, 64
        %v1219 = vpop.permute.xlu0 %1218
        %1220 = vrot.lane.b32.xlu0 %v732, 64
        %v1221 = vpop.permute.xlu0 %1220
        %v1222 = vsel %vm834, %v1219, 0
        %v1224 = vsel %vm834, %v1221, 0
        %1226 = vmatpush.xpose.msra.mxu0 0.0
        %1227 = vmatpush.xpose.msra.mxu0 0.0
        %1228 = vmatpush.xpose.msra.mxu0 0.0
        %1229 = vmatpush.xpose.msra.mxu0 0.0
        %1230 = vmatpush.xpose.msra.mxu0 0.0
        %1231 = vmatpush.xpose.msra.mxu0 0.0
        %1232 = vmatpush.xpose.msra.mxu0 0.0
        %1233 = vmatpush.xpose.msra.mxu0 0.0
        %1234 = vmatpush.xpose.msra.mxu0 0.0
        %1235 = vmatpush.xpose.msra.mxu0 0.0
        %1236 = vmatpush.xpose.msra.mxu0 0.0
        %1237 = vmatpush.xpose.msra.mxu0 0.0
        %1238 = vmatpush.xpose.msra.mxu0 0.0
        %1239 = vmatpush.xpose.msra.mxu0 0.0
        %1240 = vmatpush.xpose.msra.mxu0 0.0
        %1241 = vmatpush.xpose.msra.mxu0 %v1224
        %1242 = vmatmul.f32.gmra.mxu0 %v1222
        %v1243 = vpop.f32.mrf.mxu0
        %v1244 = vadd.f32 0.0, %v1243
        %1245 = vdwg.mxu0
        %v1246 = vmul.f32 %v1244, 0.125
        %v1247 = vsel %vm862, %v1246, -inf
        %1248 = vmax.xlane.f32.xlu0 %v1247
        %v1249 = vpop.xlane.xlu0 %1248
        %v1250 = vsub.f32 %v1246, %v1249
        %v1251 = vmul.f32 %v1250, 1.442695
        %v1252 = vpow.pop %v1251
        %v1253 = vsel %vm862, %v1252, 0.0
        %1254 = vadd.xlane.f32.xlu0 %v1253
        %v1255 = vpop.xlane.xlu0 %1254
        %v1256 = vrcp.pop %v1255
        %v1257 = vmul.f32 %v1255, %v1256
        %v1258 = vsub.f32 1.0, %v1257
        %v1259 = vmul.f32 %v1256, %v1258
        %v1260 = vadd.f32 %v1256, %v1259
        %vm1261 = vweird.f32 %v1255
        %vm1262 = vweird.f32 %v1256
        %vm1263 = vmor %vm1261, %vm1262
        %v1264 = vsel %vm1263, %v1256, %v1260
        %v1265 = vand.u32 2147483647, %v1255
        %vm1266 = vcmp.eq.f32.partialorder %v1265, 8.507059e+37
        %v1267 = vand.u32 %v1255, 2147483648
        %v1268 = vor.u32 1.1754944e-38, %v1267
        %v1269 = vsel %vm1266, %v1268, %v1264
        %v1270 = vmul.f32 %v1252, %v1269
        %1272 = vrot.lane.b32.xlu0 %v812, 64
        %v1273 = vpop.permute.xlu0 %1272
        %v1276 = vsel %vm862, %v1270, 0
        %1278 = vmatpush.msra.mxu0 0.0
        %1279 = vmatpush.msra.mxu0 0.0
        %1280 = vmatpush.msra.mxu0 0.0
        %1281 = vmatpush.msra.mxu0 0.0
        %1282 = vmatpush.msra.mxu0 0.0
        %1283 = vmatpush.msra.mxu0 0.0
        %1284 = vmatpush.msra.mxu0 0.0
        %1285 = vmatpush.msra.mxu0 0.0
        %1286 = vmatpush.msra.mxu0 0.0
        %1287 = vmatpush.msra.mxu0 0.0
        %1288 = vmatpush.msra.mxu0 0.0
        %1289 = vmatpush.msra.mxu0 0.0
        %1290 = vmatpush.msra.mxu0 0.0
        %1291 = vmatpush.msra.mxu0 0.0
        %1292 = vmatpush.msra.mxu0 0.0
        %1293 = vmatpush.msra.mxu0 %v1273
        %1294 = vmatmul.f32.gmra.mxu0 %v1276
        %v1295 = vpop.f32.mrf.mxu0
        %v1296 = vadd.f32 0.0, %v1295
        %1297 = vdwg.mxu0
        %v1299 = vsel %vm834, %v640, 0
        %v1302 = vsel %vm834, %v752, 0
        %1304 = vmatpush.xpose.msra.mxu0 0.0
        %1305 = vmatpush.xpose.msra.mxu0 0.0
        %1306 = vmatpush.xpose.msra.mxu0 0.0
        %1307 = vmatpush.xpose.msra.mxu0 0.0
        %1308 = vmatpush.xpose.msra.mxu0 0.0
        %1309 = vmatpush.xpose.msra.mxu0 0.0
        %1310 = vmatpush.xpose.msra.mxu0 0.0
        %1311 = vmatpush.xpose.msra.mxu0 0.0
        %1312 = vmatpush.xpose.msra.mxu0 0.0
        %1313 = vmatpush.xpose.msra.mxu0 0.0
        %1314 = vmatpush.xpose.msra.mxu0 0.0
        %1315 = vmatpush.xpose.msra.mxu0 0.0
        %1316 = vmatpush.xpose.msra.mxu0 0.0
        %1317 = vmatpush.xpose.msra.mxu0 0.0
        %1318 = vmatpush.xpose.msra.mxu0 0.0
        %1319 = vmatpush.xpose.msra.mxu0 %v1302
        %1320 = vmatmul.f32.gmra.mxu0 %v1299
        %v1321 = vpop.f32.mrf.mxu0
        %v1322 = vadd.f32 0.0, %v1321
        %1323 = vdwg.mxu0
        %v1324 = vmul.f32 %v1322, 0.125
        %v1325 = vsel %vm862, %v1324, -inf
        %1326 = vmax.xlane.f32.xlu0 %v1325
        %v1327 = vpop.xlane.xlu0 %1326
        %v1328 = vsub.f32 %v1324, %v1327
        %v1329 = vmul.f32 %v1328, 1.442695
        %v1330 = vpow.pop %v1329
        %v1331 = vsel %vm862, %v1330, 0.0
        %1332 = vadd.xlane.f32.xlu0 %v1331
        %v1333 = vpop.xlane.xlu0 %1332
        %v1334 = vrcp.pop %v1333
        %v1335 = vmul.f32 %v1333, %v1334
        %v1336 = vsub.f32 1.0, %v1335
        %v1337 = vmul.f32 %v1334, %v1336
        %v1338 = vadd.f32 %v1334, %v1337
        %vm1339 = vweird.f32 %v1333
        %vm1340 = vweird.f32 %v1334
        %vm1341 = vmor %vm1339, %vm1340
        %v1342 = vsel %vm1341, %v1334, %v1338
        %v1343 = vand.u32 2147483647, %v1333
        %vm1344 = vcmp.eq.f32.partialorder %v1343, 8.507059e+37
        %v1345 = vand.u32 %v1333, 2147483648
        %v1346 = vor.u32 1.1754944e-38, %v1345
        %v1347 = vsel %vm1344, %v1346, %v1342
        %v1348 = vmul.f32 %v1330, %v1347
        %v1350 = vsel %vm862, %v1348, 0
        %1352 = vmatpush.msra.mxu0 0.0
        %1353 = vmatpush.msra.mxu0 0.0
        %1354 = vmatpush.msra.mxu0 0.0
        %1355 = vmatpush.msra.mxu0 0.0
        %1356 = vmatpush.msra.mxu0 0.0
        %1357 = vmatpush.msra.mxu0 0.0
        %1358 = vmatpush.msra.mxu0 0.0
        %1359 = vmatpush.msra.mxu0 0.0
        %1360 = vmatpush.msra.mxu0 0.0
        %1361 = vmatpush.msra.mxu0 0.0
        %1362 = vmatpush.msra.mxu0 0.0
        %1363 = vmatpush.msra.mxu0 0.0
        %1364 = vmatpush.msra.mxu0 0.0
        %1365 = vmatpush.msra.mxu0 0.0
        %1366 = vmatpush.msra.mxu0 0.0
        %1367 = vmatpush.msra.mxu0 %v832
        %1368 = vmatmul.f32.gmra.mxu0 %v1350
        %v1369 = vpop.f32.mrf.mxu0
        %v1370 = vadd.f32 0.0, %v1369
        %1371 = vdwg.mxu0
        %1372 = vrot.lane.b32.xlu0 %v640, 64
        %v1373 = vpop.permute.xlu0 %1372
        %1374 = vrot.lane.b32.xlu0 %v752, 64
        %v1375 = vpop.permute.xlu0 %1374
        %v1376 = vsel %vm834, %v1373, 0
        %v1378 = vsel %vm834, %v1375, 0
        %1380 = vmatpush.xpose.msra.mxu0 0.0
        %1381 = vmatpush.xpose.msra.mxu0 0.0
        %1382 = vmatpush.xpose.msra.mxu0 0.0
        %1383 = vmatpush.xpose.msra.mxu0 0.0
        %1384 = vmatpush.xpose.msra.mxu0 0.0
        %1385 = vmatpush.xpose.msra.mxu0 0.0
        %1386 = vmatpush.xpose.msra.mxu0 0.0
        %1387 = vmatpush.xpose.msra.mxu0 0.0
        %1388 = vmatpush.xpose.msra.mxu0 0.0
        %1389 = vmatpush.xpose.msra.mxu0 0.0
        %1390 = vmatpush.xpose.msra.mxu0 0.0
        %1391 = vmatpush.xpose.msra.mxu0 0.0
        %1392 = vmatpush.xpose.msra.mxu0 0.0
        %1393 = vmatpush.xpose.msra.mxu0 0.0
        %1394 = vmatpush.xpose.msra.mxu0 0.0
        %1395 = vmatpush.xpose.msra.mxu0 %v1378
        %1396 = vmatmul.f32.gmra.mxu0 %v1376
        %v1397 = vpop.f32.mrf.mxu0
        %v1398 = vadd.f32 0.0, %v1397
        %1399 = vdwg.mxu0
        %v1400 = vmul.f32 %v1398, 0.125
        %v1401 = vsel %vm862, %v1400, -inf
        %1402 = vmax.xlane.f32.xlu0 %v1401
        %v1403 = vpop.xlane.xlu0 %1402
        %v1404 = vsub.f32 %v1400, %v1403
        %v1405 = vmul.f32 %v1404, 1.442695
        %v1406 = vpow.pop %v1405
        %v1407 = vsel %vm862, %v1406, 0.0
        %1408 = vadd.xlane.f32.xlu0 %v1407
        %v1409 = vpop.xlane.xlu0 %1408
        %v1410 = vrcp.pop %v1409
        %v1411 = vmul.f32 %v1409, %v1410
        %v1412 = vsub.f32 1.0, %v1411
        %v1413 = vmul.f32 %v1410, %v1412
        %v1414 = vadd.f32 %v1410, %v1413
        %vm1415 = vweird.f32 %v1409
        %vm1416 = vweird.f32 %v1410
        %vm1417 = vmor %vm1415, %vm1416
        %v1418 = vsel %vm1417, %v1410, %v1414
        %v1419 = vand.u32 2147483647, %v1409
        %vm1420 = vcmp.eq.f32.partialorder %v1419, 8.507059e+37
        %v1421 = vand.u32 %v1409, 2147483648
        %v1422 = vor.u32 1.1754944e-38, %v1421
        %v1423 = vsel %vm1420, %v1422, %v1418
        %v1424 = vmul.f32 %v1406, %v1423
        %1426 = vrot.lane.b32.xlu0 %v832, 64
        %v1427 = vpop.permute.xlu0 %1426
        %v1430 = vsel %vm862, %v1424, 0
        %1432 = vmatpush.msra.mxu0 0.0
        %1433 = vmatpush.msra.mxu0 0.0
        %1434 = vmatpush.msra.mxu0 0.0
        %1435 = vmatpush.msra.mxu0 0.0
        %1436 = vmatpush.msra.mxu0 0.0
        %1437 = vmatpush.msra.mxu0 0.0
        %1438 = vmatpush.msra.mxu0 0.0
        %1439 = vmatpush.msra.mxu0 0.0
        %1440 = vmatpush.msra.mxu0 0.0
        %1441 = vmatpush.msra.mxu0 0.0
        %1442 = vmatpush.msra.mxu0 0.0
        %1443 = vmatpush.msra.mxu0 0.0
        %1444 = vmatpush.msra.mxu0 0.0
        %1445 = vmatpush.msra.mxu0 0.0
        %1446 = vmatpush.msra.mxu0 0.0
        %1447 = vmatpush.msra.mxu0 %v1427
        %1448 = vmatmul.f32.gmra.mxu0 %v1430
        %v1449 = vpop.f32.mrf.mxu0
        %v1450 = vadd.f32 0.0, %v1449
        %1451 = vdwg.mxu0
        %1453 = vrot.lane.b32.xlu0 %v988, 64
        %v1454 = vpop.permute.xlu0 %1453
        %1457 = vrot.lane.b32.xlu0 %v1142, 64
        %v1458 = vpop.permute.xlu0 %1457
        %1461 = vrot.lane.b32.xlu0 %v1296, 64
        %v1462 = vpop.permute.xlu0 %1461
        %1465 = vrot.lane.b32.xlu0 %v1450, 64
        %v1466 = vpop.permute.xlu0 %1465
        %v1468 = vsel %vm834, %v908, %v1454
        %v1469 = vsel %vm834, %v1062, %v1458
        %v1470 = vsel %vm834, %v1216, %v1462
        %v1471 = vsel %vm834, %v1370, %v1466
        %v1472 = vld [vmem:[%s4] sm:$0xff]
        %v1473 = vld [vmem:[%s4 + $0x8] sm:$0xff]
        %v1474 = vld [vmem:[%s4 + $0x10] sm:$0xff]
        %v1475 = vld [vmem:[%s4 + $0x18] sm:$0xff]
        %v1476 = vld [vmem:[%s4 + $0x20] sm:$0xff]
        %v1477 = vld [vmem:[%s4 + $0x28] sm:$0xff]
        %v1478 = vld [vmem:[%s4 + $0x30] sm:$0xff]
        %v1479 = vld [vmem:[%s4 + $0x38] sm:$0xff]
        %v1480 = vld [vmem:[%s4 + $0x40] sm:$0xff]
        %v1481 = vld [vmem:[%s4 + $0x48] sm:$0xff]
        %v1482 = vld [vmem:[%s4 + $0x50] sm:$0xff]
        %v1483 = vld [vmem:[%s4 + $0x58] sm:$0xff]
        %v1484 = vld [vmem:[%s4 + $0x60] sm:$0xff]
        %v1485 = vld [vmem:[%s4 + $0x68] sm:$0xff]
        %v1486 = vld [vmem:[%s4 + $0x70] sm:$0xff]
        %v1487 = vld [vmem:[%s4 + $0x78] sm:$0xff]
        %v1488 = vld [vmem:[%s4 + $0x80] sm:$0xff]
        %v1489 = vld [vmem:[%s4 + $0x88] sm:$0xff]
        %v1490 = vld [vmem:[%s4 + $0x90] sm:$0xff]
        %v1491 = vld [vmem:[%s4 + $0x98] sm:$0xff]
        %v1492 = vld [vmem:[%s4 + $0xa0] sm:$0xff]
        %v1493 = vld [vmem:[%s4 + $0xa8] sm:$0xff]
        %v1494 = vld [vmem:[%s4 + $0xb0] sm:$0xff]
        %v1495 = vld [vmem:[%s4 + $0xb8] sm:$0xff]
        %v1496 = vld [vmem:[%s4 + $0xc0] sm:$0xff]
        %v1497 = vld [vmem:[%s4 + $0xc8] sm:$0xff]
        %v1498 = vld [vmem:[%s4 + $0xd0] sm:$0xff]
        %v1499 = vld [vmem:[%s4 + $0xd8] sm:$0xff]
        %v1500 = vld [vmem:[%s4 + $0xe0] sm:$0xff]
        %v1501 = vld [vmem:[%s4 + $0xe8] sm:$0xff]
        %v1502 = vld [vmem:[%s4 + $0xf0] sm:$0xff]
        %v1503 = vld [vmem:[%s4 + $0xf8] sm:$0xff]
        %v1504 = vld [vmem:[%s4 + $0x100] sm:$0xff]
        %v1505 = vld [vmem:[%s4 + $0x108] sm:$0xff]
        %v1506 = vld [vmem:[%s4 + $0x110] sm:$0xff]
        %v1507 = vld [vmem:[%s4 + $0x118] sm:$0xff]
        %v1508 = vld [vmem:[%s4 + $0x120] sm:$0xff]
        %v1509 = vld [vmem:[%s4 + $0x128] sm:$0xff]
        %v1510 = vld [vmem:[%s4 + $0x130] sm:$0xff]
        %v1511 = vld [vmem:[%s4 + $0x138] sm:$0xff]
        %v1512 = vld [vmem:[%s4 + $0x140] sm:$0xff]
        %v1513 = vld [vmem:[%s4 + $0x148] sm:$0xff]
        %v1514 = vld [vmem:[%s4 + $0x150] sm:$0xff]
        %v1515 = vld [vmem:[%s4 + $0x158] sm:$0xff]
        %v1516 = vld [vmem:[%s4 + $0x160] sm:$0xff]
        %v1517 = vld [vmem:[%s4 + $0x168] sm:$0xff]
        %v1518 = vld [vmem:[%s4 + $0x170] sm:$0xff]
        %v1519 = vld [vmem:[%s4 + $0x178] sm:$0xff]
        %v1520 = vld [vmem:[%s4 + $0x180] sm:$0xff]
        %v1521 = vld [vmem:[%s4 + $0x188] sm:$0xff]
        %v1522 = vld [vmem:[%s4 + $0x190] sm:$0xff]
        %v1523 = vld [vmem:[%s4 + $0x198] sm:$0xff]
        %v1524 = vld [vmem:[%s4 + $0x1a0] sm:$0xff]
        %v1525 = vld [vmem:[%s4 + $0x1a8] sm:$0xff]
        %v1526 = vld [vmem:[%s4 + $0x1b0] sm:$0xff]
        %v1527 = vld [vmem:[%s4 + $0x1b8] sm:$0xff]
        %v1528 = vld [vmem:[%s4 + $0x1c0] sm:$0xff]
        %v1529 = vld [vmem:[%s4 + $0x1c8] sm:$0xff]
        %v1530 = vld [vmem:[%s4 + $0x1d0] sm:$0xff]
        %v1531 = vld [vmem:[%s4 + $0x1d8] sm:$0xff]
        %v1532 = vld [vmem:[%s4 + $0x1e0] sm:$0xff]
        %v1533 = vld [vmem:[%s4 + $0x1e8] sm:$0xff]
        %v1534 = vld [vmem:[%s4 + $0x1f0] sm:$0xff]
        %v1535 = vld [vmem:[%s4 + $0x1f8] sm:$0xff]
        %v1536 = vld [vmem:[%s4 + $0x200] sm:$0xff]
        %v1537 = vld [vmem:[%s4 + $0x208] sm:$0xff]
        %v1538 = vld [vmem:[%s4 + $0x210] sm:$0xff]
        %v1539 = vld [vmem:[%s4 + $0x218] sm:$0xff]
        %v1540 = vld [vmem:[%s4 + $0x220] sm:$0xff]
        %v1541 = vld [vmem:[%s4 + $0x228] sm:$0xff]
        %v1542 = vld [vmem:[%s4 + $0x230] sm:$0xff]
        %v1543 = vld [vmem:[%s4 + $0x238] sm:$0xff]
        %v1544 = vld [vmem:[%s4 + $0x240] sm:$0xff]
        %v1545 = vld [vmem:[%s4 + $0x248] sm:$0xff]
        %v1546 = vld [vmem:[%s4 + $0x250] sm:$0xff]
        %v1547 = vld [vmem:[%s4 + $0x258] sm:$0xff]
        %v1548 = vld [vmem:[%s4 + $0x260] sm:$0xff]
        %v1549 = vld [vmem:[%s4 + $0x268] sm:$0xff]
        %v1550 = vld [vmem:[%s4 + $0x270] sm:$0xff]
        %v1551 = vld [vmem:[%s4 + $0x278] sm:$0xff]
        %v1552 = vld [vmem:[%s4 + $0x280] sm:$0xff]
        %v1553 = vld [vmem:[%s4 + $0x288] sm:$0xff]
        %v1554 = vld [vmem:[%s4 + $0x290] sm:$0xff]
        %v1555 = vld [vmem:[%s4 + $0x298] sm:$0xff]
        %v1556 = vld [vmem:[%s4 + $0x2a0] sm:$0xff]
        %v1557 = vld [vmem:[%s4 + $0x2a8] sm:$0xff]
        %v1558 = vld [vmem:[%s4 + $0x2b0] sm:$0xff]
        %v1559 = vld [vmem:[%s4 + $0x2b8] sm:$0xff]
        %v1560 = vld [vmem:[%s4 + $0x2c0] sm:$0xff]
        %v1561 = vld [vmem:[%s4 + $0x2c8] sm:$0xff]
        %v1562 = vld [vmem:[%s4 + $0x2d0] sm:$0xff]
        %v1563 = vld [vmem:[%s4 + $0x2d8] sm:$0xff]
        %v1564 = vld [vmem:[%s4 + $0x2e0] sm:$0xff]
        %v1565 = vld [vmem:[%s4 + $0x2e8] sm:$0xff]
        %v1566 = vld [vmem:[%s4 + $0x2f0] sm:$0xff]
        %v1567 = vld [vmem:[%s4 + $0x2f8] sm:$0xff]
        %v1568 = vld [vmem:[%s4 + $0x300] sm:$0xff]
        %v1569 = vld [vmem:[%s4 + $0x308] sm:$0xff]
        %v1570 = vld [vmem:[%s4 + $0x310] sm:$0xff]
        %v1571 = vld [vmem:[%s4 + $0x318] sm:$0xff]
        %v1572 = vld [vmem:[%s4 + $0x320] sm:$0xff]
        %v1573 = vld [vmem:[%s4 + $0x328] sm:$0xff]
        %v1574 = vld [vmem:[%s4 + $0x330] sm:$0xff]
        %v1575 = vld [vmem:[%s4 + $0x338] sm:$0xff]
        %v1576 = vld [vmem:[%s4 + $0x340] sm:$0xff]
        %v1577 = vld [vmem:[%s4 + $0x348] sm:$0xff]
        %v1578 = vld [vmem:[%s4 + $0x350] sm:$0xff]
        %v1579 = vld [vmem:[%s4 + $0x358] sm:$0xff]
        %v1580 = vld [vmem:[%s4 + $0x360] sm:$0xff]
        %v1581 = vld [vmem:[%s4 + $0x368] sm:$0xff]
        %v1582 = vld [vmem:[%s4 + $0x370] sm:$0xff]
        %v1583 = vld [vmem:[%s4 + $0x378] sm:$0xff]
        %v1584 = vld [vmem:[%s4 + $0x380] sm:$0xff]
        %v1585 = vld [vmem:[%s4 + $0x388] sm:$0xff]
        %v1586 = vld [vmem:[%s4 + $0x390] sm:$0xff]
        %v1587 = vld [vmem:[%s4 + $0x398] sm:$0xff]
        %v1588 = vld [vmem:[%s4 + $0x3a0] sm:$0xff]
        %v1589 = vld [vmem:[%s4 + $0x3a8] sm:$0xff]
        %v1590 = vld [vmem:[%s4 + $0x3b0] sm:$0xff]
        %v1591 = vld [vmem:[%s4 + $0x3b8] sm:$0xff]
        %v1592 = vld [vmem:[%s4 + $0x3c0] sm:$0xff]
        %v1593 = vld [vmem:[%s4 + $0x3c8] sm:$0xff]
        %v1594 = vld [vmem:[%s4 + $0x3d0] sm:$0xff]
        %v1595 = vld [vmem:[%s4 + $0x3d8] sm:$0xff]
        %v1596 = vld [vmem:[%s4 + $0x3e0] sm:$0xff]
        %v1597 = vld [vmem:[%s4 + $0x3e8] sm:$0xff]
        %v1598 = vld [vmem:[%s4 + $0x3f0] sm:$0xff]
        %v1599 = vld [vmem:[%s4 + $0x3f8] sm:$0xff]
        %v1600 = vld [vmem:[%s5] sm:$0x1]
        %v1602 = vperm.slane %v1600, 0
        %1604 = vmatpush.msra.mxu0 %v1487
        %1605 = vmatpush.msra.mxu0 %v1486
        %1606 = vmatpush.msra.mxu0 %v1485
        %1607 = vmatpush.msra.mxu0 %v1484
        %1608 = vmatpush.msra.mxu0 %v1483
        %1609 = vmatpush.msra.mxu0 %v1482
        %1610 = vmatpush.msra.mxu0 %v1481
        %1611 = vmatpush.msra.mxu0 %v1480
        %1612 = vmatpush.msra.mxu0 %v1479
        %1613 = vmatpush.msra.mxu0 %v1478
        %1614 = vmatpush.msra.mxu0 %v1477
        %1615 = vmatpush.msra.mxu0 %v1476
        %1616 = vmatpush.msra.mxu0 %v1475
        %1617 = vmatpush.msra.mxu0 %v1474
        %1618 = vmatpush.msra.mxu0 %v1473
        %1619 = vmatpush.msra.mxu0 %v1472
        %1620 = vmatmul.f32.gmra.mxu0 %v1468
        %v1621 = vpop.f32.mrf.mxu0
        %v1622 = vadd.f32 %v1602, %v1621
        %1623 = vdwg.mxu0
        %1624 = vmatpush.msra.mxu0 %v1503
        %1625 = vmatpush.msra.mxu0 %v1502
        %1626 = vmatpush.msra.mxu0 %v1501
        %1627 = vmatpush.msra.mxu0 %v1500
        %1628 = vmatpush.msra.mxu0 %v1499
        %1629 = vmatpush.msra.mxu0 %v1498
        %1630 = vmatpush.msra.mxu0 %v1497
        %1631 = vmatpush.msra.mxu0 %v1496
        %1632 = vmatpush.msra.mxu0 %v1495
        %1633 = vmatpush.msra.mxu0 %v1494
        %1634 = vmatpush.msra.mxu0 %v1493
        %1635 = vmatpush.msra.mxu0 %v1492
        %1636 = vmatpush.msra.mxu0 %v1491
        %1637 = vmatpush.msra.mxu0 %v1490
        %1638 = vmatpush.msra.mxu0 %v1489
        %1639 = vmatpush.msra.mxu0 %v1488
        %1640 = vmatmul.f32.gmra.mxu0 %v1469
        %v1641 = vpop.f32.mrf.mxu0
        %v1642 = vadd.f32 %v1622, %v1641
        %1643 = vdwg.mxu0
        %1644 = vmatpush.msra.mxu0 %v1519
        %1645 = vmatpush.msra.mxu0 %v1518
        %1646 = vmatpush.msra.mxu0 %v1517
        %1647 = vmatpush.msra.mxu0 %v1516
        %1648 = vmatpush.msra.mxu0 %v1515
        %1649 = vmatpush.msra.mxu0 %v1514
        %1650 = vmatpush.msra.mxu0 %v1513
        %1651 = vmatpush.msra.mxu0 %v1512
        %1652 = vmatpush.msra.mxu0 %v1511
        %1653 = vmatpush.msra.mxu0 %v1510
        %1654 = vmatpush.msra.mxu0 %v1509
        %1655 = vmatpush.msra.mxu0 %v1508
        %1656 = vmatpush.msra.mxu0 %v1507
        %1657 = vmatpush.msra.mxu0 %v1506
        %1658 = vmatpush.msra.mxu0 %v1505
        %1659 = vmatpush.msra.mxu0 %v1504
        %1660 = vmatmul.f32.gmra.mxu0 %v1470
        %v1661 = vpop.f32.mrf.mxu0
        %v1662 = vadd.f32 %v1642, %v1661
        %1663 = vdwg.mxu0
        %1664 = vmatpush.msra.mxu0 %v1535
        %1665 = vmatpush.msra.mxu0 %v1534
        %1666 = vmatpush.msra.mxu0 %v1533
        %1667 = vmatpush.msra.mxu0 %v1532
        %1668 = vmatpush.msra.mxu0 %v1531
        %1669 = vmatpush.msra.mxu0 %v1530
        %1670 = vmatpush.msra.mxu0 %v1529
        %1671 = vmatpush.msra.mxu0 %v1528
        %1672 = vmatpush.msra.mxu0 %v1527
        %1673 = vmatpush.msra.mxu0 %v1526
        %1674 = vmatpush.msra.mxu0 %v1525
        %1675 = vmatpush.msra.mxu0 %v1524
        %1676 = vmatpush.msra.mxu0 %v1523
        %1677 = vmatpush.msra.mxu0 %v1522
        %1678 = vmatpush.msra.mxu0 %v1521
        %1679 = vmatpush.msra.mxu0 %v1520
        %1680 = vmatmul.f32.gmra.mxu0 %v1471
        %v1681 = vpop.f32.mrf.mxu0
        %v1682 = vadd.f32 %v1662, %v1681
        %1683 = vdwg.mxu0
        %1684 = vmatpush.msra.mxu0 %v1551
        %1685 = vmatpush.msra.mxu0 %v1550
        %1686 = vmatpush.msra.mxu0 %v1549
        %1687 = vmatpush.msra.mxu0 %v1548
        %1688 = vmatpush.msra.mxu0 %v1547
        %1689 = vmatpush.msra.mxu0 %v1546
        %1690 = vmatpush.msra.mxu0 %v1545
        %1691 = vmatpush.msra.mxu0 %v1544
        %1692 = vmatpush.msra.mxu0 %v1543
        %1693 = vmatpush.msra.mxu0 %v1542
        %1694 = vmatpush.msra.mxu0 %v1541
        %1695 = vmatpush.msra.mxu0 %v1540
        %1696 = vmatpush.msra.mxu0 %v1539
        %1697 = vmatpush.msra.mxu0 %v1538
        %1698 = vmatpush.msra.mxu0 %v1537
        %1699 = vmatpush.msra.mxu0 %v1536
        %1700 = vmatmul.f32.gmra.mxu0 %v580
        %v1701 = vpop.f32.mrf.mxu0
        %v1702 = vadd.f32 %v1682, %v1701
        %1703 = vdwg.mxu0
        %1704 = vmatpush.msra.mxu0 %v1567
        %1705 = vmatpush.msra.mxu0 %v1566
        %1706 = vmatpush.msra.mxu0 %v1565
        %1707 = vmatpush.msra.mxu0 %v1564
        %1708 = vmatpush.msra.mxu0 %v1563
        %1709 = vmatpush.msra.mxu0 %v1562
        %1710 = vmatpush.msra.mxu0 %v1561
        %1711 = vmatpush.msra.mxu0 %v1560
        %1712 = vmatpush.msra.mxu0 %v1559
        %1713 = vmatpush.msra.mxu0 %v1558
        %1714 = vmatpush.msra.mxu0 %v1557
        %1715 = vmatpush.msra.mxu0 %v1556
        %1716 = vmatpush.msra.mxu0 %v1555
        %1717 = vmatpush.msra.mxu0 %v1554
        %1718 = vmatpush.msra.mxu0 %v1553
        %1719 = vmatpush.msra.mxu0 %v1552
        %1720 = vmatmul.f32.gmra.mxu0 %v600
        %v1721 = vpop.f32.mrf.mxu0
        %v1722 = vadd.f32 %v1702, %v1721
        %1723 = vdwg.mxu0
        %1724 = vmatpush.msra.mxu0 %v1583
        %1725 = vmatpush.msra.mxu0 %v1582
        %1726 = vmatpush.msra.mxu0 %v1581
        %1727 = vmatpush.msra.mxu0 %v1580
        %1728 = vmatpush.msra.mxu0 %v1579
        %1729 = vmatpush.msra.mxu0 %v1578
        %1730 = vmatpush.msra.mxu0 %v1577
        %1731 = vmatpush.msra.mxu0 %v1576
        %1732 = vmatpush.msra.mxu0 %v1575
        %1733 = vmatpush.msra.mxu0 %v1574
        %1734 = vmatpush.msra.mxu0 %v1573
        %1735 = vmatpush.msra.mxu0 %v1572
        %1736 = vmatpush.msra.mxu0 %v1571
        %1737 = vmatpush.msra.mxu0 %v1570
        %1738 = vmatpush.msra.mxu0 %v1569
        %1739 = vmatpush.msra.mxu0 %v1568
        %1740 = vmatmul.f32.gmra.mxu0 %v620
        %v1741 = vpop.f32.mrf.mxu0
        %v1742 = vadd.f32 %v1722, %v1741
        %1743 = vdwg.mxu0
        %1744 = vmatpush.msra.mxu0 %v1599
        %1745 = vmatpush.msra.mxu0 %v1598
        %1746 = vmatpush.msra.mxu0 %v1597
        %1747 = vmatpush.msra.mxu0 %v1596
        %1748 = vmatpush.msra.mxu0 %v1595
        %1749 = vmatpush.msra.mxu0 %v1594
        %1750 = vmatpush.msra.mxu0 %v1593
        %1751 = vmatpush.msra.mxu0 %v1592
        %1752 = vmatpush.msra.mxu0 %v1591
        %1753 = vmatpush.msra.mxu0 %v1590
        %1754 = vmatpush.msra.mxu0 %v1589
        %1755 = vmatpush.msra.mxu0 %v1588
        %1756 = vmatpush.msra.mxu0 %v1587
        %1757 = vmatpush.msra.mxu0 %v1586
        %1758 = vmatpush.msra.mxu0 %v1585
        %1759 = vmatpush.msra.mxu0 %v1584
        %1760 = vmatmul.f32.gmra.mxu0 %v640
        %v1761 = vpop.f32.mrf.mxu0
        %v1762 = vadd.f32 %v1742, %v1761
        %1763 = vdwg.mxu0
        %v1764 = vxor.u32 %v1762, 2147483648
        %v1765 = vmul.f32 %v1764, 1.442695
        %v1766 = vpow.pop %v1765
        %v1767 = vadd.f32 %v1766, 1.0
        %v1768 = vrcp.pop %v1767
        %v1769 = vmul.f32 %v1767, %v1768
        %v1770 = vsub.f32 1.0, %v1769
        %v1771 = vmul.f32 %v1768, %v1770
        %v1772 = vadd.f32 %v1768, %v1771
        %vm1773 = vweird.f32 %v1767
        %vm1774 = vweird.f32 %v1768
        %vm1775 = vmor %vm1773, %vm1774
        %v1776 = vsel %vm1775, %v1768, %v1772
        %v1777 = vand.u32 2147483647, %v1767
        %vm1778 = vcmp.eq.f32.partialorder %v1777, 8.507059e+37
        %v1779 = vand.u32 %v1767, 2147483648
        %v1780 = vor.u32 1.1754944e-38, %v1779
        %v1781 = vsel %vm1778, %v1780, %v1776
        %v1782 = vmul.f32 1.0, %v1781
        %1784 = vrot.lane.b32.xlu0 %v1782, 96
        %v1785 = vpop.permute.xlu0 %1784
        %v1787 = vmul.f32 %v1762, %v1785
        %v1788 = vadd.f32 %v1787, %v539
        %v1789 = vsel %vm558, %v1788, 0.0
        %1790 = vadd.xlane.f32.xlu0 %v1789
        %v1791 = vpop.xlane.xlu0 %1790
        %v1792 = vrcp.pop 32.0
        %v1793 = vmul.f32 32.0, %v1792
        %v1794 = vsub.f32 1.0, %v1793
        %v1795 = vmul.f32 %v1792, %v1794
        %v1796 = vadd.f32 %v1792, %v1795
        %vm1797 = vweird.f32 %v1792
        %v1798 = vsel %vm1797, %v1792, %v1796
        %v1799 = vmul.f32 %v1791, %v1798
        %v1800 = vsub.f32 %v1788, %v1799
        %v1801 = vmul.f32 %v1800, %v1800
        %v1802 = vsel %vm558, %v1801, 0.0
        %1803 = vadd.xlane.f32.xlu0 %v1802
        %v1804 = vpop.xlane.xlu0 %1803
        %v1805 = vmul.f32 %v1804, 0.032258064
        %v1806 = vrsqrt.pop %v1805
        %v1807 = vmul.f32 %v1806, %v1805
        %v1808 = vmul.f32 %v1807, %v1806
        %v1809 = vmul.f32 0.5, %v1808
        %v1810 = vsub.f32 1.5, %v1809
        %v1811 = vmul.f32 %v1806, %v1810
        %v1812 = vmul.f32 %v1805, %v1811
        %vm1813 = vcmp.eq.f32.partialorder %v1805, inf
        %v1814 = vsel %vm1813, %v1805, %v1812
        %vm1815 = vcmp.eq.f32.partialorder %v1805, 0.0
        %v1816 = vand.u32 %v1805, 2147483648
        %v1817 = vsel %vm1815, %v1816, %v1814
        %v1818 = vld [vmem:[%s10] sm:$0x1]
        %v1820 = vperm.slane %v1818, 0
        %v1822 = vmul.f32 %v1820, %v1800
        %v1823 = vadd.f32 %v1817, 1e-06
        %v1824 = vrcp.pop %v1823
        %v1825 = vmul.f32 %v1823, %v1824
        %v1826 = vsub.f32 1.0, %v1825
        %v1827 = vmul.f32 %v1824, %v1826
        %v1828 = vadd.f32 %v1824, %v1827
        %vm1829 = vweird.f32 %v1823
        %vm1830 = vweird.f32 %v1824
        %vm1831 = vmor %vm1829, %vm1830
        %v1832 = vsel %vm1831, %v1824, %v1828
        %v1833 = vand.u32 2147483647, %v1823
        %vm1834 = vcmp.eq.f32.partialorder %v1833, 8.507059e+37
        %v1835 = vand.u32 %v1823, 2147483648
        %v1836 = vor.u32 1.1754944e-38, %v1835
        %v1837 = vsel %vm1834, %v1836, %v1832
        %v1838 = vmul.f32 %v1822, %v1837
        %v1839 = vld [vmem:[%s11] sm:$0x1]
        %v1841 = vperm.slane %v1839, 0
        %v1843 = vadd.f32 %v1838, %v1841
        %v1845 = vsel %vm558, %v1843, 0
        %1847 = vmatpush.msra.mxu0 0.0
        %1848 = vmatpush.msra.mxu0 0.0
        %1849 = vmatpush.msra.mxu0 0.0
        %1850 = vmatpush.msra.mxu0 0.0
        %1851 = vmatpush.msra.mxu0 0.0
        %1852 = vmatpush.msra.mxu0 0.0
        %1853 = vmatpush.msra.mxu0 0.0
        %1854 = vmatpush.msra.mxu0 0.0
        %1855 = vmatpush.msra.mxu0 0.0
        %1856 = vmatpush.msra.mxu0 0.0
        %1857 = vmatpush.msra.mxu0 0.0
        %1858 = vmatpush.msra.mxu0 0.0
        %1859 = vmatpush.msra.mxu0 %v554
        %1860 = vmatpush.msra.mxu0 %v550
        %1861 = vmatpush.msra.mxu0 %v546
        %1862 = vmatpush.msra.mxu0 %v542
        %1863 = vmatmul.f32.gmra.mxu0 %v1845
        %v1864 = vpop.f32.mrf.mxu0
        %v1865 = vadd.f32 0.0, %v1864
        %1866 = vdwg.mxu0
        %1867 = vmatpush.msra.mxu0 0.0
        %1868 = vmatpush.msra.mxu0 0.0
        %1869 = vmatpush.msra.mxu0 0.0
        %1870 = vmatpush.msra.mxu0 0.0
        %1871 = vmatpush.msra.mxu0 0.0
        %1872 = vmatpush.msra.mxu0 0.0
        %1873 = vmatpush.msra.mxu0 0.0
        %1874 = vmatpush.msra.mxu0 0.0
        %1875 = vmatpush.msra.mxu0 0.0
        %1876 = vmatpush.msra.mxu0 0.0
        %1877 = vmatpush.msra.mxu0 0.0
        %1878 = vmatpush.msra.mxu0 0.0
        %1879 = vmatpush.msra.mxu0 %v555
        %1880 = vmatpush.msra.mxu0 %v551
        %1881 = vmatpush.msra.mxu0 %v547
        %1882 = vmatpush.msra.mxu0 %v543
        %1883 = vmatmul.f32.gmra.mxu0 %v1845
        %v1884 = vpop.f32.mrf.mxu0
        %v1885 = vadd.f32 0.0, %v1884
        %1886 = vdwg.mxu0
        %1887 = vmatpush.msra.mxu0 0.0
        %1888 = vmatpush.msra.mxu0 0.0
        %1889 = vmatpush.msra.mxu0 0.0
        %1890 = vmatpush.msra.mxu0 0.0
        %1891 = vmatpush.msra.mxu0 0.0
        %1892 = vmatpush.msra.mxu0 0.0
        %1893 = vmatpush.msra.mxu0 0.0
        %1894 = vmatpush.msra.mxu0 0.0
        %1895 = vmatpush.msra.mxu0 0.0
        %1896 = vmatpush.msra.mxu0 0.0
        %1897 = vmatpush.msra.mxu0 0.0
        %1898 = vmatpush.msra.mxu0 0.0
        %1899 = vmatpush.msra.mxu0 %v556
        %1900 = vmatpush.msra.mxu0 %v552
        %1901 = vmatpush.msra.mxu0 %v548
        %1902 = vmatpush.msra.mxu0 %v544
        %1903 = vmatmul.f32.gmra.mxu0 %v1845
        %v1904 = vpop.f32.mrf.mxu0
        %v1905 = vadd.f32 0.0, %v1904
        %1906 = vdwg.mxu0
        %1907 = vmatpush.msra.mxu0 0.0
        %1908 = vmatpush.msra.mxu0 0.0
        %1909 = vmatpush.msra.mxu0 0.0
        %1910 = vmatpush.msra.mxu0 0.0
        %1911 = vmatpush.msra.mxu0 0.0
        %1912 = vmatpush.msra.mxu0 0.0
        %1913 = vmatpush.msra.mxu0 0.0
        %1914 = vmatpush.msra.mxu0 0.0
        %1915 = vmatpush.msra.mxu0 0.0
        %1916 = vmatpush.msra.mxu0 0.0
        %1917 = vmatpush.msra.mxu0 0.0
        %1918 = vmatpush.msra.mxu0 0.0
        %1919 = vmatpush.msra.mxu0 %v557
        %1920 = vmatpush.msra.mxu0 %v553
        %1921 = vmatpush.msra.mxu0 %v549
        %1922 = vmatpush.msra.mxu0 %v545
        %1923 = vmatmul.f32.gmra.mxu0 %v1845
        %v1924 = vpop.f32.mrf.mxu0
        %v1925 = vadd.f32 0.0, %v1924
        %1926 = vdwg.mxu0
        %v1928 = vsel %vm558, %v540, 0
        %v1931 = vsel %vm558, %v541, 0
        %1933 = vmatpush.msra.mxu0 0.0
        %1934 = vmatpush.msra.mxu0 0.0
        %1935 = vmatpush.msra.mxu0 0.0
        %1936 = vmatpush.msra.mxu0 0.0
        %1937 = vmatpush.msra.mxu0 0.0
        %1938 = vmatpush.msra.mxu0 0.0
        %1939 = vmatpush.msra.mxu0 0.0
        %1940 = vmatpush.msra.mxu0 0.0
        %1941 = vmatpush.msra.mxu0 0.0
        %1942 = vmatpush.msra.mxu0 0.0
        %1943 = vmatpush.msra.mxu0 0.0
        %1944 = vmatpush.msra.mxu0 0.0
        %1945 = vmatpush.msra.mxu0 %v666
        %1946 = vmatpush.msra.mxu0 %v658
        %1947 = vmatpush.msra.mxu0 %v650
        %1948 = vmatpush.msra.mxu0 %v642
        %1949 = vmatmul.f32.gmra.mxu0 %v1928
        %v1950 = vpop.f32.mrf.mxu0
        %v1951 = vadd.f32 0.0, %v1950
        %1952 = vmatmul.f32.gmra.mxu0 %v1931
        %v1953 = vpop.f32.mrf.mxu0
        %v1954 = vadd.f32 0.0, %v1953
        %1955 = vdwg.mxu0
        %1956 = vmatpush.msra.mxu0 0.0
        %1957 = vmatpush.msra.mxu0 0.0
        %1958 = vmatpush.msra.mxu0 0.0
        %1959 = vmatpush.msra.mxu0 0.0
        %1960 = vmatpush.msra.mxu0 0.0
        %1961 = vmatpush.msra.mxu0 0.0
        %1962 = vmatpush.msra.mxu0 0.0
        %1963 = vmatpush.msra.mxu0 0.0
        %1964 = vmatpush.msra.mxu0 0.0
        %1965 = vmatpush.msra.mxu0 0.0
        %1966 = vmatpush.msra.mxu0 0.0
        %1967 = vmatpush.msra.mxu0 0.0
        %1968 = vmatpush.msra.mxu0 %v667
        %1969 = vmatpush.msra.mxu0 %v659
        %1970 = vmatpush.msra.mxu0 %v651
        %1971 = vmatpush.msra.mxu0 %v643
        %1972 = vmatmul.f32.gmra.mxu0 %v1928
        %v1973 = vpop.f32.mrf.mxu0
        %v1974 = vadd.f32 0.0, %v1973
        %1975 = vmatmul.f32.gmra.mxu0 %v1931
        %v1976 = vpop.f32.mrf.mxu0
        %v1977 = vadd.f32 0.0, %v1976
        %1978 = vdwg.mxu0
        %1979 = vmatpush.msra.mxu0 0.0
        %1980 = vmatpush.msra.mxu0 0.0
        %1981 = vmatpush.msra.mxu0 0.0
        %1982 = vmatpush.msra.mxu0 0.0
        %1983 = vmatpush.msra.mxu0 0.0
        %1984 = vmatpush.msra.mxu0 0.0
        %1985 = vmatpush.msra.mxu0 0.0
        %1986 = vmatpush.msra.mxu0 0.0
        %1987 = vmatpush.msra.mxu0 0.0
        %1988 = vmatpush.msra.mxu0 0.0
        %1989 = vmatpush.msra.mxu0 0.0
        %1990 = vmatpush.msra.mxu0 0.0
        %1991 = vmatpush.msra.mxu0 %v668
        %1992 = vmatpush.msra.mxu0 %v660
        %1993 = vmatpush.msra.mxu0 %v652
        %1994 = vmatpush.msra.mxu0 %v644
        %1995 = vmatmul.f32.gmra.mxu0 %v1928
        %v1996 = vpop.f32.mrf.mxu0
        %v1997 = vadd.f32 0.0, %v1996
        %1998 = vmatmul.f32.gmra.mxu0 %v1931
        %v1999 = vpop.f32.mrf.mxu0
        %v2000 = vadd.f32 0.0, %v1999
        %2001 = vdwg.mxu0
        %2002 = vmatpush.msra.mxu0 0.0
        %2003 = vmatpush.msra.mxu0 0.0
        %2004 = vmatpush.msra.mxu0 0.0
        %2005 = vmatpush.msra.mxu0 0.0
        %2006 = vmatpush.msra.mxu0 0.0
        %2007 = vmatpush.msra.mxu0 0.0
        %2008 = vmatpush.msra.mxu0 0.0
        %2009 = vmatpush.msra.mxu0 0.0
        %2010 = vmatpush.msra.mxu0 0.0
        %2011 = vmatpush.msra.mxu0 0.0
        %2012 = vmatpush.msra.mxu0 0.0
        %2013 = vmatpush.msra.mxu0 0.0
        %2014 = vmatpush.msra.mxu0 %v669
        %2015 = vmatpush.msra.mxu0 %v661
        %2016 = vmatpush.msra.mxu0 %v653
        %2017 = vmatpush.msra.mxu0 %v645
        %2018 = vmatmul.f32.gmra.mxu0 %v1928
        %v2019 = vpop.f32.mrf.mxu0
        %v2020 = vadd.f32 0.0, %v2019
        %2021 = vmatmul.f32.gmra.mxu0 %v1931
        %v2022 = vpop.f32.mrf.mxu0
        %v2023 = vadd.f32 0.0, %v2022
        %2024 = vdwg.mxu0
        %2025 = vmatpush.msra.mxu0 0.0
        %2026 = vmatpush.msra.mxu0 0.0
        %2027 = vmatpush.msra.mxu0 0.0
        %2028 = vmatpush.msra.mxu0 0.0
        %2029 = vmatpush.msra.mxu0 0.0
        %2030 = vmatpush.msra.mxu0 0.0
        %2031 = vmatpush.msra.mxu0 0.0
        %2032 = vmatpush.msra.mxu0 0.0
        %2033 = vmatpush.msra.mxu0 0.0
        %2034 = vmatpush.msra.mxu0 0.0
        %2035 = vmatpush.msra.mxu0 0.0
        %2036 = vmatpush.msra.mxu0 0.0
        %2037 = vmatpush.msra.mxu0 %v670
        %2038 = vmatpush.msra.mxu0 %v662
        %2039 = vmatpush.msra.mxu0 %v654
        %2040 = vmatpush.msra.mxu0 %v646
        %2041 = vmatmul.f32.gmra.mxu0 %v1928
        %v2042 = vpop.f32.mrf.mxu0
        %v2043 = vadd.f32 0.0, %v2042
        %2044 = vmatmul.f32.gmra.mxu0 %v1931
        %v2045 = vpop.f32.mrf.mxu0
        %v2046 = vadd.f32 0.0, %v2045
        %2047 = vdwg.mxu0
        %2048 = vmatpush.msra.mxu0 0.0
        %2049 = vmatpush.msra.mxu0 0.0
        %2050 = vmatpush.msra.mxu0 0.0
        %2051 = vmatpush.msra.mxu0 0.0
        %2052 = vmatpush.msra.mxu0 0.0
        %2053 = vmatpush.msra.mxu0 0.0
        %2054 = vmatpush.msra.mxu0 0.0
        %2055 = vmatpush.msra.mxu0 0.0
        %2056 = vmatpush.msra.mxu0 0.0
        %2057 = vmatpush.msra.mxu0 0.0
        %2058 = vmatpush.msra.mxu0 0.0
        %2059 = vmatpush.msra.mxu0 0.0
        %2060 = vmatpush.msra.mxu0 %v671
        %2061 = vmatpush.msra.mxu0 %v663
        %2062 = vmatpush.msra.mxu0 %v655
        %2063 = vmatpush.msra.mxu0 %v647
        %2064 = vmatmul.f32.gmra.mxu0 %v1928
        %v2065 = vpop.f32.mrf.mxu0
        %v2066 = vadd.f32 0.0, %v2065
        %2067 = vmatmul.f32.gmra.mxu0 %v1931
        %v2068 = vpop.f32.mrf.mxu0
        %v2069 = vadd.f32 0.0, %v2068
        %2070 = vdwg.mxu0
        %2071 = vmatpush.msra.mxu0 0.0
        %2072 = vmatpush.msra.mxu0 0.0
        %2073 = vmatpush.msra.mxu0 0.0
        %2074 = vmatpush.msra.mxu0 0.0
        %2075 = vmatpush.msra.mxu0 0.0
        %2076 = vmatpush.msra.mxu0 0.0
        %2077 = vmatpush.msra.mxu0 0.0
        %2078 = vmatpush.msra.mxu0 0.0
        %2079 = vmatpush.msra.mxu0 0.0
        %2080 = vmatpush.msra.mxu0 0.0
        %2081 = vmatpush.msra.mxu0 0.0
        %2082 = vmatpush.msra.mxu0 0.0
        %2083 = vmatpush.msra.mxu0 %v672
        %2084 = vmatpush.msra.mxu0 %v664
        %2085 = vmatpush.msra.mxu0 %v656
        %2086 = vmatpush.msra.mxu0 %v648
        %2087 = vmatmul.f32.gmra.mxu0 %v1928
        %v2088 = vpop.f32.mrf.mxu0
        %v2089 = vadd.f32 0.0, %v2088
        %2090 = vmatmul.f32.gmra.mxu0 %v1931
        %v2091 = vpop.f32.mrf.mxu0
        %v2092 = vadd.f32 0.0, %v2091
        %2093 = vdwg.mxu0
        %2094 = vmatpush.msra.mxu0 0.0
        %2095 = vmatpush.msra.mxu0 0.0
        %2096 = vmatpush.msra.mxu0 0.0
        %2097 = vmatpush.msra.mxu0 0.0
        %2098 = vmatpush.msra.mxu0 0.0
        %2099 = vmatpush.msra.mxu0 0.0
        %2100 = vmatpush.msra.mxu0 0.0
        %2101 = vmatpush.msra.mxu0 0.0
        %2102 = vmatpush.msra.mxu0 0.0
        %2103 = vmatpush.msra.mxu0 0.0
        %2104 = vmatpush.msra.mxu0 0.0
        %2105 = vmatpush.msra.mxu0 0.0
        %2106 = vmatpush.msra.mxu0 %v673
        %2107 = vmatpush.msra.mxu0 %v665
        %2108 = vmatpush.msra.mxu0 %v657
        %2109 = vmatpush.msra.mxu0 %v649
        %2110 = vmatmul.f32.gmra.mxu0 %v1928
        %v2111 = vpop.f32.mrf.mxu0
        %v2112 = vadd.f32 0.0, %v2111
        %2113 = vmatmul.f32.gmra.mxu0 %v1931
        %v2114 = vpop.f32.mrf.mxu0
        %v2115 = vadd.f32 0.0, %v2114
        %2116 = vdwg.mxu0
        %v2118 = vsel %vm834, %v1865, 0
        %v2121 = vsel %vm834, %v1951, 0
        %v2124 = vsel %vm834, %v1954, 0
        %2126 = vmatpush.xpose.msra.mxu0 0.0
        %2127 = vmatpush.xpose.msra.mxu0 0.0
        %2128 = vmatpush.xpose.msra.mxu0 0.0
        %2129 = vmatpush.xpose.msra.mxu0 0.0
        %2130 = vmatpush.xpose.msra.mxu0 0.0
        %2131 = vmatpush.xpose.msra.mxu0 0.0
        %2132 = vmatpush.xpose.msra.mxu0 0.0
        %2133 = vmatpush.xpose.msra.mxu0 0.0
        %2134 = vmatpush.xpose.msra.mxu0 0.0
        %2135 = vmatpush.xpose.msra.mxu0 0.0
        %2136 = vmatpush.xpose.msra.mxu0 0.0
        %2137 = vmatpush.xpose.msra.mxu0 0.0
        %2138 = vmatpush.xpose.msra.mxu0 0.0
        %2139 = vmatpush.xpose.msra.mxu0 0.0
        %2140 = vmatpush.xpose.msra.mxu0 %v2124
        %2141 = vmatpush.xpose.msra.mxu0 %v2121
        %2142 = vmatmul.f32.gmra.mxu0 %v2118
        %v2143 = vpop.f32.mrf.mxu0
        %v2144 = vadd.f32 0.0, %v2143
        %2145 = vdwg.mxu0
        %v2146 = vmul.f32 %v2144, 0.125
        %vm2147 = vcmask 130048
        %v2148 = vsel %vm2147, %v2146, -inf
        %2149 = vmax.xlane.f32.xlu0 %v2148
        %v2150 = vpop.xlane.xlu0 %2149
        %v2151 = vsub.f32 %v2146, %v2150
        %v2152 = vmul.f32 %v2151, 1.442695
        %v2153 = vpow.pop %v2152
        %v2154 = vsel %vm2147, %v2153, 0.0
        %2155 = vadd.xlane.f32.xlu0 %v2154
        %v2156 = vpop.xlane.xlu0 %2155
        %v2157 = vrcp.pop %v2156
        %v2158 = vmul.f32 %v2156, %v2157
        %v2159 = vsub.f32 1.0, %v2158
        %v2160 = vmul.f32 %v2157, %v2159
        %v2161 = vadd.f32 %v2157, %v2160
        %vm2162 = vweird.f32 %v2156
        %vm2163 = vweird.f32 %v2157
        %vm2164 = vmor %vm2162, %vm2163
        %v2165 = vsel %vm2164, %v2157, %v2161
        %v2166 = vand.u32 2147483647, %v2156
        %vm2167 = vcmp.eq.f32.partialorder %v2166, 8.507059e+37
        %v2168 = vand.u32 %v2156, 2147483648
        %v2169 = vor.u32 1.1754944e-38, %v2168
        %v2170 = vsel %vm2167, %v2169, %v2165
        %v2171 = vmul.f32 %v2153, %v2170
        %v2173 = vsel %vm2147, %v2171, 0
        %2175 = vmatpush.msra.mxu0 0.0
        %2176 = vmatpush.msra.mxu0 0.0
        %2177 = vmatpush.msra.mxu0 0.0
        %2178 = vmatpush.msra.mxu0 0.0
        %2179 = vmatpush.msra.mxu0 0.0
        %2180 = vmatpush.msra.mxu0 0.0
        %2181 = vmatpush.msra.mxu0 0.0
        %2182 = vmatpush.msra.mxu0 0.0
        %2183 = vmatpush.msra.mxu0 0.0
        %2184 = vmatpush.msra.mxu0 0.0
        %2185 = vmatpush.msra.mxu0 0.0
        %2186 = vmatpush.msra.mxu0 0.0
        %2187 = vmatpush.msra.mxu0 0.0
        %2188 = vmatpush.msra.mxu0 0.0
        %2189 = vmatpush.msra.mxu0 %v2046
        %2190 = vmatpush.msra.mxu0 %v2043
        %2191 = vmatmul.f32.gmra.mxu0 %v2173
        %v2192 = vpop.f32.mrf.mxu0
        %v2193 = vadd.f32 0.0, %v2192
        %2194 = vdwg.mxu0
        %2195 = vrot.lane.b32.xlu0 %v1865, 64
        %v2196 = vpop.permute.xlu0 %2195
        %2197 = vrot.lane.b32.xlu0 %v1951, 64
        %v2198 = vpop.permute.xlu0 %2197
        %2199 = vrot.lane.b32.xlu0 %v1954, 64
        %v2200 = vpop.permute.xlu0 %2199
        %v2201 = vsel %vm834, %v2196, 0
        %v2203 = vsel %vm834, %v2198, 0
        %v2205 = vsel %vm834, %v2200, 0
        %2207 = vmatpush.xpose.msra.mxu0 0.0
        %2208 = vmatpush.xpose.msra.mxu0 0.0
        %2209 = vmatpush.xpose.msra.mxu0 0.0
        %2210 = vmatpush.xpose.msra.mxu0 0.0
        %2211 = vmatpush.xpose.msra.mxu0 0.0
        %2212 = vmatpush.xpose.msra.mxu0 0.0
        %2213 = vmatpush.xpose.msra.mxu0 0.0
        %2214 = vmatpush.xpose.msra.mxu0 0.0
        %2215 = vmatpush.xpose.msra.mxu0 0.0
        %2216 = vmatpush.xpose.msra.mxu0 0.0
        %2217 = vmatpush.xpose.msra.mxu0 0.0
        %2218 = vmatpush.xpose.msra.mxu0 0.0
        %2219 = vmatpush.xpose.msra.mxu0 0.0
        %2220 = vmatpush.xpose.msra.mxu0 0.0
        %2221 = vmatpush.xpose.msra.mxu0 %v2205
        %2222 = vmatpush.xpose.msra.mxu0 %v2203
        %2223 = vmatmul.f32.gmra.mxu0 %v2201
        %v2224 = vpop.f32.mrf.mxu0
        %v2225 = vadd.f32 0.0, %v2224
        %2226 = vdwg.mxu0
        %v2227 = vmul.f32 %v2225, 0.125
        %v2228 = vsel %vm2147, %v2227, -inf
        %2229 = vmax.xlane.f32.xlu0 %v2228
        %v2230 = vpop.xlane.xlu0 %2229
        %v2231 = vsub.f32 %v2227, %v2230
        %v2232 = vmul.f32 %v2231, 1.442695
        %v2233 = vpow.pop %v2232
        %v2234 = vsel %vm2147, %v2233, 0.0
        %2235 = vadd.xlane.f32.xlu0 %v2234
        %v2236 = vpop.xlane.xlu0 %2235
        %v2237 = vrcp.pop %v2236
        %v2238 = vmul.f32 %v2236, %v2237
        %v2239 = vsub.f32 1.0, %v2238
        %v2240 = vmul.f32 %v2237, %v2239
        %v2241 = vadd.f32 %v2237, %v2240
        %vm2242 = vweird.f32 %v2236
        %vm2243 = vweird.f32 %v2237
        %vm2244 = vmor %vm2242, %vm2243
        %v2245 = vsel %vm2244, %v2237, %v2241
        %v2246 = vand.u32 2147483647, %v2236
        %vm2247 = vcmp.eq.f32.partialorder %v2246, 8.507059e+37
        %v2248 = vand.u32 %v2236, 2147483648
        %v2249 = vor.u32 1.1754944e-38, %v2248
        %v2250 = vsel %vm2247, %v2249, %v2245
        %v2251 = vmul.f32 %v2233, %v2250
        %2254 = vrot.lane.b32.xlu0 %v2043, 64
        %v2255 = vpop.permute.xlu0 %2254
        %2256 = vrot.lane.b32.xlu0 %v2046, 64
        %v2257 = vpop.permute.xlu0 %2256
        %v2261 = vsel %vm2147, %v2251, 0
        %2263 = vmatpush.msra.mxu0 0.0
        %2264 = vmatpush.msra.mxu0 0.0
        %2265 = vmatpush.msra.mxu0 0.0
        %2266 = vmatpush.msra.mxu0 0.0
        %2267 = vmatpush.msra.mxu0 0.0
        %2268 = vmatpush.msra.mxu0 0.0
        %2269 = vmatpush.msra.mxu0 0.0
        %2270 = vmatpush.msra.mxu0 0.0
        %2271 = vmatpush.msra.mxu0 0.0
        %2272 = vmatpush.msra.mxu0 0.0
        %2273 = vmatpush.msra.mxu0 0.0
        %2274 = vmatpush.msra.mxu0 0.0
        %2275 = vmatpush.msra.mxu0 0.0
        %2276 = vmatpush.msra.mxu0 0.0
        %2277 = vmatpush.msra.mxu0 %v2257
        %2278 = vmatpush.msra.mxu0 %v2255
        %2279 = vmatmul.f32.gmra.mxu0 %v2261
        %v2280 = vpop.f32.mrf.mxu0
        %v2281 = vadd.f32 0.0, %v2280
        %2282 = vdwg.mxu0
        %v2284 = vsel %vm834, %v1885, 0
        %v2287 = vsel %vm834, %v1974, 0
        %v2290 = vsel %vm834, %v1977, 0
        %2292 = vmatpush.xpose.msra.mxu0 0.0
        %2293 = vmatpush.xpose.msra.mxu0 0.0
        %2294 = vmatpush.xpose.msra.mxu0 0.0
        %2295 = vmatpush.xpose.msra.mxu0 0.0
        %2296 = vmatpush.xpose.msra.mxu0 0.0
        %2297 = vmatpush.xpose.msra.mxu0 0.0
        %2298 = vmatpush.xpose.msra.mxu0 0.0
        %2299 = vmatpush.xpose.msra.mxu0 0.0
        %2300 = vmatpush.xpose.msra.mxu0 0.0
        %2301 = vmatpush.xpose.msra.mxu0 0.0
        %2302 = vmatpush.xpose.msra.mxu0 0.0
        %2303 = vmatpush.xpose.msra.mxu0 0.0
        %2304 = vmatpush.xpose.msra.mxu0 0.0
        %2305 = vmatpush.xpose.msra.mxu0 0.0
        %2306 = vmatpush.xpose.msra.mxu0 %v2290
        %2307 = vmatpush.xpose.msra.mxu0 %v2287
        %2308 = vmatmul.f32.gmra.mxu0 %v2284
        %v2309 = vpop.f32.mrf.mxu0
        %v2310 = vadd.f32 0.0, %v2309
        %2311 = vdwg.mxu0
        %v2312 = vmul.f32 %v2310, 0.125
        %v2313 = vsel %vm2147, %v2312, -inf
        %2314 = vmax.xlane.f32.xlu0 %v2313
        %v2315 = vpop.xlane.xlu0 %2314
        %v2316 = vsub.f32 %v2312, %v2315
        %v2317 = vmul.f32 %v2316, 1.442695
        %v2318 = vpow.pop %v2317
        %v2319 = vsel %vm2147, %v2318, 0.0
        %2320 = vadd.xlane.f32.xlu0 %v2319
        %v2321 = vpop.xlane.xlu0 %2320
        %v2322 = vrcp.pop %v2321
        %v2323 = vmul.f32 %v2321, %v2322
        %v2324 = vsub.f32 1.0, %v2323
        %v2325 = vmul.f32 %v2322, %v2324
        %v2326 = vadd.f32 %v2322, %v2325
        %vm2327 = vweird.f32 %v2321
        %vm2328 = vweird.f32 %v2322
        %vm2329 = vmor %vm2327, %vm2328
        %v2330 = vsel %vm2329, %v2322, %v2326
        %v2331 = vand.u32 2147483647, %v2321
        %vm2332 = vcmp.eq.f32.partialorder %v2331, 8.507059e+37
        %v2333 = vand.u32 %v2321, 2147483648
        %v2334 = vor.u32 1.1754944e-38, %v2333
        %v2335 = vsel %vm2332, %v2334, %v2330
        %v2336 = vmul.f32 %v2318, %v2335
        %v2338 = vsel %vm2147, %v2336, 0
        %2340 = vmatpush.msra.mxu0 0.0
        %2341 = vmatpush.msra.mxu0 0.0
        %2342 = vmatpush.msra.mxu0 0.0
        %2343 = vmatpush.msra.mxu0 0.0
        %2344 = vmatpush.msra.mxu0 0.0
        %2345 = vmatpush.msra.mxu0 0.0
        %2346 = vmatpush.msra.mxu0 0.0
        %2347 = vmatpush.msra.mxu0 0.0
        %2348 = vmatpush.msra.mxu0 0.0
        %2349 = vmatpush.msra.mxu0 0.0
        %2350 = vmatpush.msra.mxu0 0.0
        %2351 = vmatpush.msra.mxu0 0.0
        %2352 = vmatpush.msra.mxu0 0.0
        %2353 = vmatpush.msra.mxu0 0.0
        %2354 = vmatpush.msra.mxu0 %v2069
        %2355 = vmatpush.msra.mxu0 %v2066
        %2356 = vmatmul.f32.gmra.mxu0 %v2338
        %v2357 = vpop.f32.mrf.mxu0
        %v2358 = vadd.f32 0.0, %v2357
        %2359 = vdwg.mxu0
        %2360 = vrot.lane.b32.xlu0 %v1885, 64
        %v2361 = vpop.permute.xlu0 %2360
        %2362 = vrot.lane.b32.xlu0 %v1974, 64
        %v2363 = vpop.permute.xlu0 %2362
        %2364 = vrot.lane.b32.xlu0 %v1977, 64
        %v2365 = vpop.permute.xlu0 %2364
        %v2366 = vsel %vm834, %v2361, 0
        %v2368 = vsel %vm834, %v2363, 0
        %v2370 = vsel %vm834, %v2365, 0
        %2372 = vmatpush.xpose.msra.mxu0 0.0
        %2373 = vmatpush.xpose.msra.mxu0 0.0
        %2374 = vmatpush.xpose.msra.mxu0 0.0
        %2375 = vmatpush.xpose.msra.mxu0 0.0
        %2376 = vmatpush.xpose.msra.mxu0 0.0
        %2377 = vmatpush.xpose.msra.mxu0 0.0
        %2378 = vmatpush.xpose.msra.mxu0 0.0
        %2379 = vmatpush.xpose.msra.mxu0 0.0
        %2380 = vmatpush.xpose.msra.mxu0 0.0
        %2381 = vmatpush.xpose.msra.mxu0 0.0
        %2382 = vmatpush.xpose.msra.mxu0 0.0
        %2383 = vmatpush.xpose.msra.mxu0 0.0
        %2384 = vmatpush.xpose.msra.mxu0 0.0
        %2385 = vmatpush.xpose.msra.mxu0 0.0
        %2386 = vmatpush.xpose.msra.mxu0 %v2370
        %2387 = vmatpush.xpose.msra.mxu0 %v2368
        %2388 = vmatmul.f32.gmra.mxu0 %v2366
        %v2389 = vpop.f32.mrf.mxu0
        %v2390 = vadd.f32 0.0, %v2389
        %2391 = vdwg.mxu0
        %v2392 = vmul.f32 %v2390, 0.125
        %v2393 = vsel %vm2147, %v2392, -inf
        %2394 = vmax.xlane.f32.xlu0 %v2393
        %v2395 = vpop.xlane.xlu0 %2394
        %v2396 = vsub.f32 %v2392, %v2395
        %v2397 = vmul.f32 %v2396, 1.442695
        %v2398 = vpow.pop %v2397
        %v2399 = vsel %vm2147, %v2398, 0.0
        %2400 = vadd.xlane.f32.xlu0 %v2399
        %v2401 = vpop.xlane.xlu0 %2400
        %v2402 = vrcp.pop %v2401
        %v2403 = vmul.f32 %v2401, %v2402
        %v2404 = vsub.f32 1.0, %v2403
        %v2405 = vmul.f32 %v2402, %v2404
        %v2406 = vadd.f32 %v2402, %v2405
        %vm2407 = vweird.f32 %v2401
        %vm2408 = vweird.f32 %v2402
        %vm2409 = vmor %vm2407, %vm2408
        %v2410 = vsel %vm2409, %v2402, %v2406
        %v2411 = vand.u32 2147483647, %v2401
        %vm2412 = vcmp.eq.f32.partialorder %v2411, 8.507059e+37
        %v2413 = vand.u32 %v2401, 2147483648
        %v2414 = vor.u32 1.1754944e-38, %v2413
        %v2415 = vsel %vm2412, %v2414, %v2410
        %v2416 = vmul.f32 %v2398, %v2415
        %2419 = vrot.lane.b32.xlu0 %v2066, 64
        %v2420 = vpop.permute.xlu0 %2419
        %2421 = vrot.lane.b32.xlu0 %v2069, 64
        %v2422 = vpop.permute.xlu0 %2421
        %v2426 = vsel %vm2147, %v2416, 0
        %2428 = vmatpush.msra.mxu0 0.0
        %2429 = vmatpush.msra.mxu0 0.0
        %2430 = vmatpush.msra.mxu0 0.0
        %2431 = vmatpush.msra.mxu0 0.0
        %2432 = vmatpush.msra.mxu0 0.0
        %2433 = vmatpush.msra.mxu0 0.0
        %2434 = vmatpush.msra.mxu0 0.0
        %2435 = vmatpush.msra.mxu0 0.0
        %2436 = vmatpush.msra.mxu0 0.0
        %2437 = vmatpush.msra.mxu0 0.0
        %2438 = vmatpush.msra.mxu0 0.0
        %2439 = vmatpush.msra.mxu0 0.0
        %2440 = vmatpush.msra.mxu0 0.0
        %2441 = vmatpush.msra.mxu0 0.0
        %2442 = vmatpush.msra.mxu0 %v2422
        %2443 = vmatpush.msra.mxu0 %v2420
        %2444 = vmatmul.f32.gmra.mxu0 %v2426
        %v2445 = vpop.f32.mrf.mxu0
        %v2446 = vadd.f32 0.0, %v2445
        %2447 = vdwg.mxu0
        %v2449 = vsel %vm834, %v1905, 0
        %v2452 = vsel %vm834, %v1997, 0
        %v2455 = vsel %vm834, %v2000, 0
        %2457 = vmatpush.xpose.msra.mxu0 0.0
        %2458 = vmatpush.xpose.msra.mxu0 0.0
        %2459 = vmatpush.xpose.msra.mxu0 0.0
        %2460 = vmatpush.xpose.msra.mxu0 0.0
        %2461 = vmatpush.xpose.msra.mxu0 0.0
        %2462 = vmatpush.xpose.msra.mxu0 0.0
        %2463 = vmatpush.xpose.msra.mxu0 0.0
        %2464 = vmatpush.xpose.msra.mxu0 0.0
        %2465 = vmatpush.xpose.msra.mxu0 0.0
        %2466 = vmatpush.xpose.msra.mxu0 0.0
        %2467 = vmatpush.xpose.msra.mxu0 0.0
        %2468 = vmatpush.xpose.msra.mxu0 0.0
        %2469 = vmatpush.xpose.msra.mxu0 0.0
        %2470 = vmatpush.xpose.msra.mxu0 0.0
        %2471 = vmatpush.xpose.msra.mxu0 %v2455
        %2472 = vmatpush.xpose.msra.mxu0 %v2452
        %2473 = vmatmul.f32.gmra.mxu0 %v2449
        %v2474 = vpop.f32.mrf.mxu0
        %v2475 = vadd.f32 0.0, %v2474
        %2476 = vdwg.mxu0
        %v2477 = vmul.f32 %v2475, 0.125
        %v2478 = vsel %vm2147, %v2477, -inf
        %2479 = vmax.xlane.f32.xlu0 %v2478
        %v2480 = vpop.xlane.xlu0 %2479
        %v2481 = vsub.f32 %v2477, %v2480
        %v2482 = vmul.f32 %v2481, 1.442695
        %v2483 = vpow.pop %v2482
        %v2484 = vsel %vm2147, %v2483, 0.0
        %2485 = vadd.xlane.f32.xlu0 %v2484
        %v2486 = vpop.xlane.xlu0 %2485
        %v2487 = vrcp.pop %v2486
        %v2488 = vmul.f32 %v2486, %v2487
        %v2489 = vsub.f32 1.0, %v2488
        %v2490 = vmul.f32 %v2487, %v2489
        %v2491 = vadd.f32 %v2487, %v2490
        %vm2492 = vweird.f32 %v2486
        %vm2493 = vweird.f32 %v2487
        %vm2494 = vmor %vm2492, %vm2493
        %v2495 = vsel %vm2494, %v2487, %v2491
        %v2496 = vand.u32 2147483647, %v2486
        %vm2497 = vcmp.eq.f32.partialorder %v2496, 8.507059e+37
        %v2498 = vand.u32 %v2486, 2147483648
        %v2499 = vor.u32 1.1754944e-38, %v2498
        %v2500 = vsel %vm2497, %v2499, %v2495
        %v2501 = vmul.f32 %v2483, %v2500
        %v2503 = vsel %vm2147, %v2501, 0
        %2505 = vmatpush.msra.mxu0 0.0
        %2506 = vmatpush.msra.mxu0 0.0
        %2507 = vmatpush.msra.mxu0 0.0
        %2508 = vmatpush.msra.mxu0 0.0
        %2509 = vmatpush.msra.mxu0 0.0
        %2510 = vmatpush.msra.mxu0 0.0
        %2511 = vmatpush.msra.mxu0 0.0
        %2512 = vmatpush.msra.mxu0 0.0
        %2513 = vmatpush.msra.mxu0 0.0
        %2514 = vmatpush.msra.mxu0 0.0
        %2515 = vmatpush.msra.mxu0 0.0
        %2516 = vmatpush.msra.mxu0 0.0
        %2517 = vmatpush.msra.mxu0 0.0
        %2518 = vmatpush.msra.mxu0 0.0
        %2519 = vmatpush.msra.mxu0 %v2092
        %2520 = vmatpush.msra.mxu0 %v2089
        %2521 = vmatmul.f32.gmra.mxu0 %v2503
        %v2522 = vpop.f32.mrf.mxu0
        %v2523 = vadd.f32 0.0, %v2522
        %2524 = vdwg.mxu0
        %2525 = vrot.lane.b32.xlu0 %v1905, 64
        %v2526 = vpop.permute.xlu0 %2525
        %2527 = vrot.lane.b32.xlu0 %v1997, 64
        %v2528 = vpop.permute.xlu0 %2527
        %2529 = vrot.lane.b32.xlu0 %v2000, 64
        %v2530 = vpop.permute.xlu0 %2529
        %v2531 = vsel %vm834, %v2526, 0
        %v2533 = vsel %vm834, %v2528, 0
        %v2535 = vsel %vm834, %v2530, 0
        %2537 = vmatpush.xpose.msra.mxu0 0.0
        %2538 = vmatpush.xpose.msra.mxu0 0.0
        %2539 = vmatpush.xpose.msra.mxu0 0.0
        %2540 = vmatpush.xpose.msra.mxu0 0.0
        %2541 = vmatpush.xpose.msra.mxu0 0.0
        %2542 = vmatpush.xpose.msra.mxu0 0.0
        %2543 = vmatpush.xpose.msra.mxu0 0.0
        %2544 = vmatpush.xpose.msra.mxu0 0.0
        %2545 = vmatpush.xpose.msra.mxu0 0.0
        %2546 = vmatpush.xpose.msra.mxu0 0.0
        %2547 = vmatpush.xpose.msra.mxu0 0.0
        %2548 = vmatpush.xpose.msra.mxu0 0.0
        %2549 = vmatpush.xpose.msra.mxu0 0.0
        %2550 = vmatpush.xpose.msra.mxu0 0.0
        %2551 = vmatpush.xpose.msra.mxu0 %v2535
        %2552 = vmatpush.xpose.msra.mxu0 %v2533
        %2553 = vmatmul.f32.gmra.mxu0 %v2531
        %v2554 = vpop.f32.mrf.mxu0
        %v2555 = vadd.f32 0.0, %v2554
        %2556 = vdwg.mxu0
        %v2557 = vmul.f32 %v2555, 0.125
        %v2558 = vsel %vm2147, %v2557, -inf
        %2559 = vmax.xlane.f32.xlu0 %v2558
        %v2560 = vpop.xlane.xlu0 %2559
        %v2561 = vsub.f32 %v2557, %v2560
        %v2562 = vmul.f32 %v2561, 1.442695
        %v2563 = vpow.pop %v2562
        %v2564 = vsel %vm2147, %v2563, 0.0
        %2565 = vadd.xlane.f32.xlu0 %v2564
        %v2566 = vpop.xlane.xlu0 %2565
        %v2567 = vrcp.pop %v2566
        %v2568 = vmul.f32 %v2566, %v2567
        %v2569 = vsub.f32 1.0, %v2568
        %v2570 = vmul.f32 %v2567, %v2569
        %v2571 = vadd.f32 %v2567, %v2570
        %vm2572 = vweird.f32 %v2566
        %vm2573 = vweird.f32 %v2567
        %vm2574 = vmor %vm2572, %vm2573
        %v2575 = vsel %vm2574, %v2567, %v2571
        %v2576 = vand.u32 2147483647, %v2566
        %vm2577 = vcmp.eq.f32.partialorder %v2576, 8.507059e+37
        %v2578 = vand.u32 %v2566, 2147483648
        %v2579 = vor.u32 1.1754944e-38, %v2578
        %v2580 = vsel %vm2577, %v2579, %v2575
        %v2581 = vmul.f32 %v2563, %v2580
        %2584 = vrot.lane.b32.xlu0 %v2089, 64
        %v2585 = vpop.permute.xlu0 %2584
        %2586 = vrot.lane.b32.xlu0 %v2092, 64
        %v2587 = vpop.permute.xlu0 %2586
        %v2591 = vsel %vm2147, %v2581, 0
        %2593 = vmatpush.msra.mxu0 0.0
        %2594 = vmatpush.msra.mxu0 0.0
        %2595 = vmatpush.msra.mxu0 0.0
        %2596 = vmatpush.msra.mxu0 0.0
        %2597 = vmatpush.msra.mxu0 0.0
        %2598 = vmatpush.msra.mxu0 0.0
        %2599 = vmatpush.msra.mxu0 0.0
        %2600 = vmatpush.msra.mxu0 0.0
        %2601 = vmatpush.msra.mxu0 0.0
        %2602 = vmatpush.msra.mxu0 0.0
        %2603 = vmatpush.msra.mxu0 0.0
        %2604 = vmatpush.msra.mxu0 0.0
        %2605 = vmatpush.msra.mxu0 0.0
        %2606 = vmatpush.msra.mxu0 0.0
        %2607 = vmatpush.msra.mxu0 %v2587
        %2608 = vmatpush.msra.mxu0 %v2585
        %2609 = vmatmul.f32.gmra.mxu0 %v2591
        %v2610 = vpop.f32.mrf.mxu0
        %v2611 = vadd.f32 0.0, %v2610
        %2612 = vdwg.mxu0
        %v2614 = vsel %vm834, %v1925, 0
        %v2617 = vsel %vm834, %v2020, 0
        %v2620 = vsel %vm834, %v2023, 0
        %2622 = vmatpush.xpose.msra.mxu0 0.0
        %2623 = vmatpush.xpose.msra.mxu0 0.0
        %2624 = vmatpush.xpose.msra.mxu0 0.0
        %2625 = vmatpush.xpose.msra.mxu0 0.0
        %2626 = vmatpush.xpose.msra.mxu0 0.0
        %2627 = vmatpush.xpose.msra.mxu0 0.0
        %2628 = vmatpush.xpose.msra.mxu0 0.0
        %2629 = vmatpush.xpose.msra.mxu0 0.0
        %2630 = vmatpush.xpose.msra.mxu0 0.0
        %2631 = vmatpush.xpose.msra.mxu0 0.0
        %2632 = vmatpush.xpose.msra.mxu0 0.0
        %2633 = vmatpush.xpose.msra.mxu0 0.0
        %2634 = vmatpush.xpose.msra.mxu0 0.0
        %2635 = vmatpush.xpose.msra.mxu0 0.0
        %2636 = vmatpush.xpose.msra.mxu0 %v2620
        %2637 = vmatpush.xpose.msra.mxu0 %v2617
        %2638 = vmatmul.f32.gmra.mxu0 %v2614
        %v2639 = vpop.f32.mrf.mxu0
        %v2640 = vadd.f32 0.0, %v2639
        %2641 = vdwg.mxu0
        %v2642 = vmul.f32 %v2640, 0.125
        %v2643 = vsel %vm2147, %v2642, -inf
        %2644 = vmax.xlane.f32.xlu0 %v2643
        %v2645 = vpop.xlane.xlu0 %2644
        %v2646 = vsub.f32 %v2642, %v2645
        %v2647 = vmul.f32 %v2646, 1.442695
        %v2648 = vpow.pop %v2647
        %v2649 = vsel %vm2147, %v2648, 0.0
        %2650 = vadd.xlane.f32.xlu0 %v2649
        %v2651 = vpop.xlane.xlu0 %2650
        %v2652 = vrcp.pop %v2651
        %v2653 = vmul.f32 %v2651, %v2652
        %v2654 = vsub.f32 1.0, %v2653
        %v2655 = vmul.f32 %v2652, %v2654
        %v2656 = vadd.f32 %v2652, %v2655
        %vm2657 = vweird.f32 %v2651
        %vm2658 = vweird.f32 %v2652
        %vm2659 = vmor %vm2657, %vm2658
        %v2660 = vsel %vm2659, %v2652, %v2656
        %v2661 = vand.u32 2147483647, %v2651
        %vm2662 = vcmp.eq.f32.partialorder %v2661, 8.507059e+37
        %v2663 = vand.u32 %v2651, 2147483648
        %v2664 = vor.u32 1.1754944e-38, %v2663
        %v2665 = vsel %vm2662, %v2664, %v2660
        %v2666 = vmul.f32 %v2648, %v2665
        %v2668 = vsel %vm2147, %v2666, 0
        %2670 = vmatpush.msra.mxu0 0.0
        %2671 = vmatpush.msra.mxu0 0.0
        %2672 = vmatpush.msra.mxu0 0.0
        %2673 = vmatpush.msra.mxu0 0.0
        %2674 = vmatpush.msra.mxu0 0.0
        %2675 = vmatpush.msra.mxu0 0.0
        %2676 = vmatpush.msra.mxu0 0.0
        %2677 = vmatpush.msra.mxu0 0.0
        %2678 = vmatpush.msra.mxu0 0.0
        %2679 = vmatpush.msra.mxu0 0.0
        %2680 = vmatpush.msra.mxu0 0.0
        %2681 = vmatpush.msra.mxu0 0.0
        %2682 = vmatpush.msra.mxu0 0.0
        %2683 = vmatpush.msra.mxu0 0.0
        %2684 = vmatpush.msra.mxu0 %v2115
        %2685 = vmatpush.msra.mxu0 %v2112
        %2686 = vmatmul.f32.gmra.mxu0 %v2668
        %v2687 = vpop.f32.mrf.mxu0
        %v2688 = vadd.f32 0.0, %v2687
        %2689 = vdwg.mxu0
        %2690 = vrot.lane.b32.xlu0 %v1925, 64
        %v2691 = vpop.permute.xlu0 %2690
        %2692 = vrot.lane.b32.xlu0 %v2020, 64
        %v2693 = vpop.permute.xlu0 %2692
        %2694 = vrot.lane.b32.xlu0 %v2023, 64
        %v2695 = vpop.permute.xlu0 %2694
        %v2696 = vsel %vm834, %v2691, 0
        %v2698 = vsel %vm834, %v2693, 0
        %v2700 = vsel %vm834, %v2695, 0
        %2702 = vmatpush.xpose.msra.mxu0 0.0
        %2703 = vmatpush.xpose.msra.mxu0 0.0
        %2704 = vmatpush.xpose.msra.mxu0 0.0
        %2705 = vmatpush.xpose.msra.mxu0 0.0
        %2706 = vmatpush.xpose.msra.mxu0 0.0
        %2707 = vmatpush.xpose.msra.mxu0 0.0
        %2708 = vmatpush.xpose.msra.mxu0 0.0
        %2709 = vmatpush.xpose.msra.mxu0 0.0
        %2710 = vmatpush.xpose.msra.mxu0 0.0
        %2711 = vmatpush.xpose.msra.mxu0 0.0
        %2712 = vmatpush.xpose.msra.mxu0 0.0
        %2713 = vmatpush.xpose.msra.mxu0 0.0
        %2714 = vmatpush.xpose.msra.mxu0 0.0
        %2715 = vmatpush.xpose.msra.mxu0 0.0
        %2716 = vmatpush.xpose.msra.mxu0 %v2700
        %2717 = vmatpush.xpose.msra.mxu0 %v2698
        %2718 = vmatmul.f32.gmra.mxu0 %v2696
        %v2719 = vpop.f32.mrf.mxu0
        %v2720 = vadd.f32 0.0, %v2719
        %2721 = vdwg.mxu0
        %v2722 = vmul.f32 %v2720, 0.125
        %v2723 = vsel %vm2147, %v2722, -inf
        %2724 = vmax.xlane.f32.xlu0 %v2723
        %v2725 = vpop.xlane.xlu0 %2724
        %v2726 = vsub.f32 %v2722, %v2725
        %v2727 = vmul.f32 %v2726, 1.442695
        %v2728 = vpow.pop %v2727
        %v2729 = vsel %vm2147, %v2728, 0.0
        %2730 = vadd.xlane.f32.xlu0 %v2729
        %v2731 = vpop.xlane.xlu0 %2730
        %v2732 = vrcp.pop %v2731
        %v2733 = vmul.f32 %v2731, %v2732
        %v2734 = vsub.f32 1.0, %v2733
        %v2735 = vmul.f32 %v2732, %v2734
        %v2736 = vadd.f32 %v2732, %v2735
        %vm2737 = vweird.f32 %v2731
        %vm2738 = vweird.f32 %v2732
        %vm2739 = vmor %vm2737, %vm2738
        %v2740 = vsel %vm2739, %v2732, %v2736
        %v2741 = vand.u32 2147483647, %v2731
        %vm2742 = vcmp.eq.f32.partialorder %v2741, 8.507059e+37
        %v2743 = vand.u32 %v2731, 2147483648
        %v2744 = vor.u32 1.1754944e-38, %v2743
        %v2745 = vsel %vm2742, %v2744, %v2740
        %v2746 = vmul.f32 %v2728, %v2745
        %2749 = vrot.lane.b32.xlu0 %v2112, 64
        %v2750 = vpop.permute.xlu0 %2749
        %2751 = vrot.lane.b32.xlu0 %v2115, 64
        %v2752 = vpop.permute.xlu0 %2751
        %v2756 = vsel %vm2147, %v2746, 0
        %2758 = vmatpush.msra.mxu0 0.0
        %2759 = vmatpush.msra.mxu0 0.0
        %2760 = vmatpush.msra.mxu0 0.0
        %2761 = vmatpush.msra.mxu0 0.0
        %2762 = vmatpush.msra.mxu0 0.0
        %2763 = vmatpush.msra.mxu0 0.0
        %2764 = vmatpush.msra.mxu0 0.0
        %2765 = vmatpush.msra.mxu0 0.0
        %2766 = vmatpush.msra.mxu0 0.0
        %2767 = vmatpush.msra.mxu0 0.0
        %2768 = vmatpush.msra.mxu0 0.0
        %2769 = vmatpush.msra.mxu0 0.0
        %2770 = vmatpush.msra.mxu0 0.0
        %2771 = vmatpush.msra.mxu0 0.0
        %2772 = vmatpush.msra.mxu0 %v2752
        %2773 = vmatpush.msra.mxu0 %v2750
        %2774 = vmatmul.f32.gmra.mxu0 %v2756
        %v2775 = vpop.f32.mrf.mxu0
        %v2776 = vadd.f32 0.0, %v2775
        %2777 = vdwg.mxu0
        %2779 = vrot.lane.b32.xlu0 %v2281, 64
        %v2780 = vpop.permute.xlu0 %2779
        %2783 = vrot.lane.b32.xlu0 %v2446, 64
        %v2784 = vpop.permute.xlu0 %2783
        %2787 = vrot.lane.b32.xlu0 %v2611, 64
        %v2788 = vpop.permute.xlu0 %2787
        %2791 = vrot.lane.b32.xlu0 %v2776, 64
        %v2792 = vpop.permute.xlu0 %2791
        %v2794 = vsel %vm834, %v2193, %v2780
        %v2795 = vsel %vm834, %v2358, %v2784
        %v2796 = vsel %vm834, %v2523, %v2788
        %v2797 = vsel %vm834, %v2688, %v2792
        %2798 = vmatpush.msra.mxu0 %v1487
        %2799 = vmatpush.msra.mxu0 %v1486
        %2800 = vmatpush.msra.mxu0 %v1485
        %2801 = vmatpush.msra.mxu0 %v1484
        %2802 = vmatpush.msra.mxu0 %v1483
        %2803 = vmatpush.msra.mxu0 %v1482
        %2804 = vmatpush.msra.mxu0 %v1481
        %2805 = vmatpush.msra.mxu0 %v1480
        %2806 = vmatpush.msra.mxu0 %v1479
        %2807 = vmatpush.msra.mxu0 %v1478
        %2808 = vmatpush.msra.mxu0 %v1477
        %2809 = vmatpush.msra.mxu0 %v1476
        %2810 = vmatpush.msra.mxu0 %v1475
        %2811 = vmatpush.msra.mxu0 %v1474
        %2812 = vmatpush.msra.mxu0 %v1473
        %2813 = vmatpush.msra.mxu0 %v1472
        %2814 = vmatmul.f32.gmra.mxu0 %v2794
        %v2815 = vpop.f32.mrf.mxu0
        %v2816 = vadd.f32 %v1602, %v2815
        %2817 = vdwg.mxu0
        %2818 = vmatpush.msra.mxu0 %v1503
        %2819 = vmatpush.msra.mxu0 %v1502
        %2820 = vmatpush.msra.mxu0 %v1501
        %2821 = vmatpush.msra.mxu0 %v1500
        %2822 = vmatpush.msra.mxu0 %v1499
        %2823 = vmatpush.msra.mxu0 %v1498
        %2824 = vmatpush.msra.mxu0 %v1497
        %2825 = vmatpush.msra.mxu0 %v1496
        %2826 = vmatpush.msra.mxu0 %v1495
        %2827 = vmatpush.msra.mxu0 %v1494
        %2828 = vmatpush.msra.mxu0 %v1493
        %2829 = vmatpush.msra.mxu0 %v1492
        %2830 = vmatpush.msra.mxu0 %v1491
        %2831 = vmatpush.msra.mxu0 %v1490
        %2832 = vmatpush.msra.mxu0 %v1489
        %2833 = vmatpush.msra.mxu0 %v1488
        %2834 = vmatmul.f32.gmra.mxu0 %v2795
        %v2835 = vpop.f32.mrf.mxu0
        %v2836 = vadd.f32 %v2816, %v2835
        %2837 = vdwg.mxu0
        %2838 = vmatpush.msra.mxu0 %v1519
        %2839 = vmatpush.msra.mxu0 %v1518
        %2840 = vmatpush.msra.mxu0 %v1517
        %2841 = vmatpush.msra.mxu0 %v1516
        %2842 = vmatpush.msra.mxu0 %v1515
        %2843 = vmatpush.msra.mxu0 %v1514
        %2844 = vmatpush.msra.mxu0 %v1513
        %2845 = vmatpush.msra.mxu0 %v1512
        %2846 = vmatpush.msra.mxu0 %v1511
        %2847 = vmatpush.msra.mxu0 %v1510
        %2848 = vmatpush.msra.mxu0 %v1509
        %2849 = vmatpush.msra.mxu0 %v1508
        %2850 = vmatpush.msra.mxu0 %v1507
        %2851 = vmatpush.msra.mxu0 %v1506
        %2852 = vmatpush.msra.mxu0 %v1505
        %2853 = vmatpush.msra.mxu0 %v1504
        %2854 = vmatmul.f32.gmra.mxu0 %v2796
        %v2855 = vpop.f32.mrf.mxu0
        %v2856 = vadd.f32 %v2836, %v2855
        %2857 = vdwg.mxu0
        %2858 = vmatpush.msra.mxu0 %v1535
        %2859 = vmatpush.msra.mxu0 %v1534
        %2860 = vmatpush.msra.mxu0 %v1533
        %2861 = vmatpush.msra.mxu0 %v1532
        %2862 = vmatpush.msra.mxu0 %v1531
        %2863 = vmatpush.msra.mxu0 %v1530
        %2864 = vmatpush.msra.mxu0 %v1529
        %2865 = vmatpush.msra.mxu0 %v1528
        %2866 = vmatpush.msra.mxu0 %v1527
        %2867 = vmatpush.msra.mxu0 %v1526
        %2868 = vmatpush.msra.mxu0 %v1525
        %2869 = vmatpush.msra.mxu0 %v1524
        %2870 = vmatpush.msra.mxu0 %v1523
        %2871 = vmatpush.msra.mxu0 %v1522
        %2872 = vmatpush.msra.mxu0 %v1521
        %2873 = vmatpush.msra.mxu0 %v1520
        %2874 = vmatmul.f32.gmra.mxu0 %v2797
        %v2875 = vpop.f32.mrf.mxu0
        %v2876 = vadd.f32 %v2856, %v2875
        %2877 = vdwg.mxu0
        %2878 = vmatpush.msra.mxu0 %v1551
        %2879 = vmatpush.msra.mxu0 %v1550
        %2880 = vmatpush.msra.mxu0 %v1549
        %2881 = vmatpush.msra.mxu0 %v1548
        %2882 = vmatpush.msra.mxu0 %v1547
        %2883 = vmatpush.msra.mxu0 %v1546
        %2884 = vmatpush.msra.mxu0 %v1545
        %2885 = vmatpush.msra.mxu0 %v1544
        %2886 = vmatpush.msra.mxu0 %v1543
        %2887 = vmatpush.msra.mxu0 %v1542
        %2888 = vmatpush.msra.mxu0 %v1541
        %2889 = vmatpush.msra.mxu0 %v1540
        %2890 = vmatpush.msra.mxu0 %v1539
        %2891 = vmatpush.msra.mxu0 %v1538
        %2892 = vmatpush.msra.mxu0 %v1537
        %2893 = vmatpush.msra.mxu0 %v1536
        %2894 = vmatmul.f32.gmra.mxu0 %v1865
        %v2895 = vpop.f32.mrf.mxu0
        %v2896 = vadd.f32 %v2876, %v2895
        %2897 = vdwg.mxu0
        %2898 = vmatpush.msra.mxu0 %v1567
        %2899 = vmatpush.msra.mxu0 %v1566
        %2900 = vmatpush.msra.mxu0 %v1565
        %2901 = vmatpush.msra.mxu0 %v1564
        %2902 = vmatpush.msra.mxu0 %v1563
        %2903 = vmatpush.msra.mxu0 %v1562
        %2904 = vmatpush.msra.mxu0 %v1561
        %2905 = vmatpush.msra.mxu0 %v1560
        %2906 = vmatpush.msra.mxu0 %v1559
        %2907 = vmatpush.msra.mxu0 %v1558
        %2908 = vmatpush.msra.mxu0 %v1557
        %2909 = vmatpush.msra.mxu0 %v1556
        %2910 = vmatpush.msra.mxu0 %v1555
        %2911 = vmatpush.msra.mxu0 %v1554
        %2912 = vmatpush.msra.mxu0 %v1553
        %2913 = vmatpush.msra.mxu0 %v1552
        %2914 = vmatmul.f32.gmra.mxu0 %v1885
        %v2915 = vpop.f32.mrf.mxu0
        %v2916 = vadd.f32 %v2896, %v2915
        %2917 = vdwg.mxu0
        %2918 = vmatpush.msra.mxu0 %v1583
        %2919 = vmatpush.msra.mxu0 %v1582
        %2920 = vmatpush.msra.mxu0 %v1581
        %2921 = vmatpush.msra.mxu0 %v1580
        %2922 = vmatpush.msra.mxu0 %v1579
        %2923 = vmatpush.msra.mxu0 %v1578
        %2924 = vmatpush.msra.mxu0 %v1577
        %2925 = vmatpush.msra.mxu0 %v1576
        %2926 = vmatpush.msra.mxu0 %v1575
        %2927 = vmatpush.msra.mxu0 %v1574
        %2928 = vmatpush.msra.mxu0 %v1573
        %2929 = vmatpush.msra.mxu0 %v1572
        %2930 = vmatpush.msra.mxu0 %v1571
        %2931 = vmatpush.msra.mxu0 %v1570
        %2932 = vmatpush.msra.mxu0 %v1569
        %2933 = vmatpush.msra.mxu0 %v1568
        %2934 = vmatmul.f32.gmra.mxu0 %v1905
        %v2935 = vpop.f32.mrf.mxu0
        %v2936 = vadd.f32 %v2916, %v2935
        %2937 = vdwg.mxu0
        %2938 = vmatpush.msra.mxu0 %v1599
        %2939 = vmatpush.msra.mxu0 %v1598
        %2940 = vmatpush.msra.mxu0 %v1597
        %2941 = vmatpush.msra.mxu0 %v1596
        %2942 = vmatpush.msra.mxu0 %v1595
        %2943 = vmatpush.msra.mxu0 %v1594
        %2944 = vmatpush.msra.mxu0 %v1593
        %2945 = vmatpush.msra.mxu0 %v1592
        %2946 = vmatpush.msra.mxu0 %v1591
        %2947 = vmatpush.msra.mxu0 %v1590
        %2948 = vmatpush.msra.mxu0 %v1589
        %2949 = vmatpush.msra.mxu0 %v1588
        %2950 = vmatpush.msra.mxu0 %v1587
        %2951 = vmatpush.msra.mxu0 %v1586
        %2952 = vmatpush.msra.mxu0 %v1585
        %2953 = vmatpush.msra.mxu0 %v1584
        %2954 = vmatmul.f32.gmra.mxu0 %v1925
        %v2955 = vpop.f32.mrf.mxu0
        %v2956 = vadd.f32 %v2936, %v2955
        %2957 = vdwg.mxu0
        %v2958 = vxor.u32 %v2956, 2147483648
        %v2959 = vmul.f32 %v2958, 1.442695
        %v2960 = vpow.pop %v2959
        %v2961 = vadd.f32 %v2960, 1.0
        %v2962 = vrcp.pop %v2961
        %v2963 = vmul.f32 %v2961, %v2962
        %v2964 = vsub.f32 1.0, %v2963
        %v2965 = vmul.f32 %v2962, %v2964
        %v2966 = vadd.f32 %v2962, %v2965
        %vm2967 = vweird.f32 %v2961
        %vm2968 = vweird.f32 %v2962
        %vm2969 = vmor %vm2967, %vm2968
        %v2970 = vsel %vm2969, %v2962, %v2966
        %v2971 = vand.u32 2147483647, %v2961
        %vm2972 = vcmp.eq.f32.partialorder %v2971, 8.507059e+37
        %v2973 = vand.u32 %v2961, 2147483648
        %v2974 = vor.u32 1.1754944e-38, %v2973
        %v2975 = vsel %vm2972, %v2974, %v2970
        %v2976 = vmul.f32 1.0, %v2975
        %2978 = vrot.lane.b32.xlu0 %v2976, 96
        %v2979 = vpop.permute.xlu0 %2978
        %v2981 = vmul.f32 %v2956, %v2979
        %v2982 = vadd.f32 %v2981, %v1843
        %v2983 = vsel %vm558, %v2982, 0.0
        %2984 = vadd.xlane.f32.xlu0 %v2983
        %v2985 = vpop.xlane.xlu0 %2984
        %v2986 = vmul.f32 %v2985, %v1798
        %v2987 = vsub.f32 %v2982, %v2986
        %v2988 = vmul.f32 %v2987, %v2987
        %v2989 = vsel %vm558, %v2988, 0.0
        %2990 = vadd.xlane.f32.xlu0 %v2989
        %v2991 = vpop.xlane.xlu0 %2990
        %v2992 = vmul.f32 %v2991, 0.032258064
        %v2993 = vrsqrt.pop %v2992
        %v2994 = vmul.f32 %v2993, %v2992
        %v2995 = vmul.f32 %v2994, %v2993
        %v2996 = vmul.f32 0.5, %v2995
        %v2997 = vsub.f32 1.5, %v2996
        %v2998 = vmul.f32 %v2993, %v2997
        %v2999 = vmul.f32 %v2992, %v2998
        %vm3000 = vcmp.eq.f32.partialorder %v2992, inf
        %v3001 = vsel %vm3000, %v2992, %v2999
        %vm3002 = vcmp.eq.f32.partialorder %v2992, 0.0
        %v3003 = vand.u32 %v2992, 2147483648
        %v3004 = vsel %vm3002, %v3003, %v3001
        %v3005 = vld [vmem:[%s12] sm:$0x1]
        %v3007 = vperm.slane %v3005, 0
        %v3009 = vmul.f32 %v3007, %v2987
        %v3010 = vadd.f32 %v3004, 1e-06
        %v3011 = vrcp.pop %v3010
        %v3012 = vmul.f32 %v3010, %v3011
        %v3013 = vsub.f32 1.0, %v3012
        %v3014 = vmul.f32 %v3011, %v3013
        %v3015 = vadd.f32 %v3011, %v3014
        %vm3016 = vweird.f32 %v3010
        %vm3017 = vweird.f32 %v3011
        %vm3018 = vmor %vm3016, %vm3017
        %v3019 = vsel %vm3018, %v3011, %v3015
        %v3020 = vand.u32 2147483647, %v3010
        %vm3021 = vcmp.eq.f32.partialorder %v3020, 8.507059e+37
        %v3022 = vand.u32 %v3010, 2147483648
        %v3023 = vor.u32 1.1754944e-38, %v3022
        %v3024 = vsel %vm3021, %v3023, %v3019
        %v3025 = vmul.f32 %v3009, %v3024
        %v3026 = vld [vmem:[%s13] sm:$0x1]
        %v3028 = vperm.slane %v3026, 0
        %v3030 = vadd.f32 %v3025, %v3028
        %v3031 = vld [vmem:[%s6] sm:$0xff]
        %v3032 = vld [vmem:[%s6 + $0x8] sm:$0xff]
        %v3033 = vld [vmem:[%s6 + $0x10] sm:$0xff]
        %v3034 = vld [vmem:[%s6 + $0x18] sm:$0xff]
        %v3035 = vld [vmem:[%s7] sm:$0x1]
        %v3037 = vperm.slane %v3035, 0
        %v3040 = vsel %vm558, %v3030, 0
        %3042 = vmatpush.msra.mxu0 0.0
        %3043 = vmatpush.msra.mxu0 0.0
        %3044 = vmatpush.msra.mxu0 0.0
        %3045 = vmatpush.msra.mxu0 0.0
        %3046 = vmatpush.msra.mxu0 0.0
        %3047 = vmatpush.msra.mxu0 0.0
        %3048 = vmatpush.msra.mxu0 0.0
        %3049 = vmatpush.msra.mxu0 0.0
        %3050 = vmatpush.msra.mxu0 0.0
        %3051 = vmatpush.msra.mxu0 0.0
        %3052 = vmatpush.msra.mxu0 0.0
        %3053 = vmatpush.msra.mxu0 0.0
        %3054 = vmatpush.msra.mxu0 %v3034
        %3055 = vmatpush.msra.mxu0 %v3033
        %3056 = vmatpush.msra.mxu0 %v3032
        %3057 = vmatpush.msra.mxu0 %v3031
        %3058 = vmatmul.f32.gmra.mxu0 %v3040
        %v3059 = vpop.f32.mrf.mxu0
        %v3060 = vadd.f32 %v3037, %v3059
        %3061 = vdwg.mxu0
        %v3062 = vmax.f32 %v3060, 0.0
        %v3063 = vld [vmem:[%s8] sm:$0xff]
        %v3064 = vld [vmem:[%s8 + $0x8] sm:$0xff]
        %v3065 = vld [vmem:[%s8 + $0x10] sm:$0xff]
        %v3066 = vld [vmem:[%s8 + $0x18] sm:$0xff]
        %v3067 = vld [vmem:[%s8 + $0x20] sm:$0xff]
        %v3068 = vld [vmem:[%s8 + $0x28] sm:$0xff]
        %v3069 = vld [vmem:[%s8 + $0x30] sm:$0xff]
        %v3070 = vld [vmem:[%s8 + $0x38] sm:$0xff]
        %v3071 = vld [vmem:[%s8 + $0x40] sm:$0xff]
        %v3072 = vld [vmem:[%s8 + $0x48] sm:$0xff]
        %v3073 = vld [vmem:[%s8 + $0x50] sm:$0xff]
        %v3074 = vld [vmem:[%s8 + $0x58] sm:$0xff]
        %v3075 = vld [vmem:[%s8 + $0x60] sm:$0xff]
        %v3076 = vld [vmem:[%s8 + $0x68] sm:$0xff]
        %v3077 = vld [vmem:[%s8 + $0x70] sm:$0xff]
        %v3078 = vld [vmem:[%s8 + $0x78] sm:$0xff]
        %v3079 = vld [vmem:[%s9] sm:$0x1]
        %v3081 = vperm.slane %v3079, 0
        %3083 = vmatpush.msra.mxu0 %v3078
        %3084 = vmatpush.msra.mxu0 %v3077
        %3085 = vmatpush.msra.mxu0 %v3076
        %3086 = vmatpush.msra.mxu0 %v3075
        %3087 = vmatpush.msra.mxu0 %v3074
        %3088 = vmatpush.msra.mxu0 %v3073
        %3089 = vmatpush.msra.mxu0 %v3072
        %3090 = vmatpush.msra.mxu0 %v3071
        %3091 = vmatpush.msra.mxu0 %v3070
        %3092 = vmatpush.msra.mxu0 %v3069
        %3093 = vmatpush.msra.mxu0 %v3068
        %3094 = vmatpush.msra.mxu0 %v3067
        %3095 = vmatpush.msra.mxu0 %v3066
        %3096 = vmatpush.msra.mxu0 %v3065
        %3097 = vmatpush.msra.mxu0 %v3064
        %3098 = vmatpush.msra.mxu0 %v3063
        %3099 = vmatmul.f32.gmra.mxu0 %v3062
        %v3100 = vpop.f32.mrf.mxu0
        %v3101 = vadd.f32 %v3081, %v3100
        %3102 = vdwg.mxu0
        %v3103 = vadd.f32 %v3030, %v3101
        %v3104 = vsel %vm558, %v3103, 0.0
        %3105 = vadd.xlane.f32.xlu0 %v3104
        %v3106 = vpop.xlane.xlu0 %3105
        %v3107 = vmul.f32 %v3106, %v1798
        %v3108 = vsub.f32 %v3103, %v3107
        %v3109 = vmul.f32 %v3108, %v3108
        %v3110 = vsel %vm558, %v3109, 0.0
        %3111 = vadd.xlane.f32.xlu0 %v3110
        %v3112 = vpop.xlane.xlu0 %3111
        %v3113 = vmul.f32 %v3112, 0.032258064
        %v3114 = vrsqrt.pop %v3113
        %v3115 = vmul.f32 %v3114, %v3113
        %v3116 = vmul.f32 %v3115, %v3114
        %v3117 = vmul.f32 0.5, %v3116
        %v3118 = vsub.f32 1.5, %v3117
        %v3119 = vmul.f32 %v3114, %v3118
        %v3120 = vmul.f32 %v3113, %v3119
        %vm3121 = vcmp.eq.f32.partialorder %v3113, inf
        %v3122 = vsel %vm3121, %v3113, %v3120
        %vm3123 = vcmp.eq.f32.partialorder %v3113, 0.0
        %v3124 = vand.u32 %v3113, 2147483648
        %v3125 = vsel %vm3123, %v3124, %v3122
        %v3126 = vld [vmem:[%s14] sm:$0x1]
        %v3128 = vperm.slane %v3126, 0
        %v3130 = vmul.f32 %v3128, %v3108
        %v3131 = vadd.f32 %v3125, 1e-06
        %v3132 = vrcp.pop %v3131
        %v3133 = vmul.f32 %v3131, %v3132
        %v3134 = vsub.f32 1.0, %v3133
        %v3135 = vmul.f32 %v3132, %v3134
        %v3136 = vadd.f32 %v3132, %v3135
        %vm3137 = vweird.f32 %v3131
        %vm3138 = vweird.f32 %v3132
        %vm3139 = vmor %vm3137, %vm3138
        %v3140 = vsel %vm3139, %v3132, %v3136
        %v3141 = vand.u32 2147483647, %v3131
        %vm3142 = vcmp.eq.f32.partialorder %v3141, 8.507059e+37
        %v3143 = vand.u32 %v3131, 2147483648
        %v3144 = vor.u32 1.1754944e-38, %v3143
        %v3145 = vsel %vm3142, %v3144, %v3140
        %v3146 = vmul.f32 %v3130, %v3145
        %v3147 = vld [vmem:[%s15] sm:$0x1]
        %v3149 = vperm.slane %v3147, 0
        %v3151 = vadd.f32 %v3146, %v3149
        %3152 = vst.msk [vmem:[%s528] sm:$0xff] %vm558, %v3151
        %s3153 = sand.u32 %s384, 1
        %s3154 = scalar_lea.sflag [#allocation3], %s3153
        %s3155 = sand.u32 %s384, 1
        %s3156 = smul.addr %s3155, 8
        %s3157 = scalar_lea.vmem [#allocation2], %s3156
        // Predicated region
        $region85: #{sga_forward.1} parent=83 // pred_check
          %p3158 = pneg %p394
        $region86: #{sga_forward.1} parent=83 // pred_check_branch
          %3160 = sbr.rel (%p3158) target = $region88
        $region87: #{sga_forward.1} parent=83 // pred_region
          %3162 = vsyncadd %s3154, 0
          %s3163 = smul.addr %s30, 8
          %s3164 = scalar_lea.hbm %s16, %s3163
          %s3166 = sshll.u32 %s3157, 4
          %s3167 = int_to_ptr.vmem [resolvable:$true] %s3166
          %s3168 = sshll.u32 %s3164, 4
          %s3169 = int_to_ptr.hbm [resolvable:$true] %s3168
          %3171 = dma.vmem_to_hbm [thread:$0]  %s3167, 128, %s3169, %s3154
        $region88: #{sga_forward.1} parent=83 // pred_fallthru
          _
      $region84: #{sga_forward.1} parent=5 // pred_fallthru
        _
      %p3172 = scmp.le.s32.totalorder 2, %s25
      // Predicated region
      $region89: #{sga_forward.1} parent=5 // pred_check
        %p3173 = pneg %p3172
      $region90: #{sga_forward.1} parent=5 // pred_check_branch
        %3175 = sbr.rel (%p3173) target = $region92
      $region91: #{sga_forward.1} parent=5 // pred_region
        %s3176 = ssub.s32 %s25, 2
        // Predicated region
        $region93: #{sga_forward.1} parent=91 // pred_check
          %p3177 = pneg %p400
        $region94: #{sga_forward.1} parent=91 // pred_check_branch
          %3179 = sbr.rel (%p3177) target = $region96
        $region95: #{sga_forward.1} parent=91 // pred_region
          %s3180 = sand.u32 %s385, 1
          %s3181 = scalar_lea.sflag [#allocation3], %s3180
          %s3182 = sand.u32 %s385, 1
          %s3183 = smul.addr %s3182, 8
          %s3184 = scalar_lea.vmem [#allocation2], %s3183
          %3186 = dma.done %s3181, 128
        $region96: #{sga_forward.1} parent=91 // pred_fallthru
          _
      $region92: #{sga_forward.1} parent=5 // pred_fallthru
        _
    $region6: #{sga_forward.1} parent=1 // loop_footer
      %s29 = sadd.s32 1, %s25
    $region7: #{sga_forward.1} parent=1 // loop_footer_branch
      %24 = sbr.rel target = $region3
    $region8: #{sga_forward.1} parent=1 // loop_exit
      _
    %3187 = vsyncpa [#allocation3], 1
    %s3188 = scalar_lea.sflag [#allocation3], 1
    %3189 = vsyncpa %s3188, 1

</llo_original>
